<compile_context>
chip_gen: v7x
topology: tpu7x:2x2x1
jax: 0.10.0
libtpu: 0.0.40
codegen_flags: <defaults>
</compile_context>

<pallas_src>
import math
from functools import partial

import jax
import jax.numpy as jnp
from jax.experimental import pallas as pl
from jax.experimental.pallas import tpu as pltpu


LN_EPS = 1e-6                 # annotated-transformer LayerNorm epsilon
NEG_INF = -1e30               # finite "minus infinity" for the running max
MASK_NEG = -1e9               # additive mask value (matches reference impl)
VMEM_LIMIT = 64 * 1024 * 1024


def _tile(dim, target, align):
    """Largest tile <= target that divides `dim` and is a multiple of `align`.

    Falls back to the full dimension only when no aligned divisor exists
    (small dims, or dims not divisible by the alignment) -- never silently
    produces an unfittable full-width block for big, divisible dims.
    """
    if dim <= target:
        return dim
    t = (target // align) * align
    while t >= align:
        if dim % t == 0:
            return t
        t -= align
    return dim


# ------------------------ fused LayerNorm + Linear kernel -------------------

def _ln_linear_kernel(x_ref, g_ref, bln_ref, w_ref, b_ref, o_ref, h_scr,
                      *, eps, relu):
    # LayerNorm (and the f32->bf16 cast) is computed once per row block at the
    # first N tile and cached in VMEM; j is the inner "arbitrary" grid axis so
    # the x block and h_scr stay resident while the weight tiles stream by.
    @pl.when(pl.program_id(1) == 0)
    def _():
        x = x_ref[...].astype(jnp.float32)
        mean = jnp.mean(x, axis=-1, keepdims=True)
        var = jnp.mean(jnp.square(x - mean), axis=-1, keepdims=True)
        h = (x - mean) * jax.lax.rsqrt(var + eps)
        h = h * g_ref[...] + bln_ref[...]
        h_scr[...] = h.astype(h_scr.dtype)

    y = jnp.dot(h_scr[...], w_ref[...], preferred_element_type=jnp.float32)
    y = y + b_ref[...].astype(jnp.float32)
    if relu:
        y = jnp.maximum(y, 0.0)
    o_ref[...] = y.astype(o_ref.dtype)


def ln_linear(x2d, gamma, beta, w, b, *, relu=False, out_dtype=None, eps=LN_EPS):
    """out = [relu](LayerNorm(x) @ w + b), LN fused into the matmul kernel."""
    M, K = x2d.shape
    N = w.shape[1]
    out_dtype = out_dtype or x2d.dtype
    tm = _tile(M, 256, 8)
    tn = _tile(N, 512, 128)
    # TODO(synk): for d_model >= 8192 on v7x, K-tile this matmul with
    # precomputed LN stats instead of a full-K x block.
    return pl.pallas_call(
        partial(_ln_linear_kernel, eps=eps, relu=relu),
        grid=(M // tm, N // tn),
        out_shape=jax.ShapeDtypeStruct((M, N), out_dtype),
        in_specs=[
            pl.BlockSpec((tm, K), lambda i, j: (i, 0)),
            pl.BlockSpec((1, K), lambda i, j: (0, 0)),
            pl.BlockSpec((1, K), lambda i, j: (0, 0)),
            pl.BlockSpec((K, tn), lambda i, j: (0, j)),
            pl.BlockSpec((1, tn), lambda i, j: (0, j)),
        ],
        out_specs=pl.BlockSpec((tm, tn), lambda i, j: (i, j)),
        scratch_shapes=[pltpu.VMEM((tm, K), w.dtype)],
        compiler_params=pltpu.CompilerParams(
            dimension_semantics=("parallel", "arbitrary"),
            vmem_limit_bytes=VMEM_LIMIT),
    )(x2d, gamma.reshape(1, K), beta.reshape(1, K), w, b.reshape(1, N))


# --------------------- tiled Linear (+ fused residual) kernel ---------------

def _linear_kernel(x_ref, w_ref, b_ref, *rest, residual):
    if residual:
        res_ref, o_ref, acc_ref = rest
    else:
        (o_ref, acc_ref) = rest
        res_ref = None

    @pl.when(pl.program_id(2) == 0)
    def _():
        acc_ref[...] = jnp.zeros_like(acc_ref)

    acc_ref[...] += jnp.dot(x_ref[...].astype(w_ref.dtype), w_ref[...],
                            preferred_element_type=jnp.float32)

    @pl.when(pl.program_id(2) == pl.num_programs(2) - 1)
    def _():
        y = acc_ref[...] + b_ref[...].astype(jnp.float32)
        if residual:
            y = y + res_ref[...].astype(jnp.float32)
        o_ref[...] = y.astype(o_ref.dtype)


def linear(x2d, w, b, *, residual=None, out_dtype=None):
    """out = x @ w + b [+ residual]; bf16 MXU matmul, f32 VMEM accumulator."""
    M, K = x2d.shape
    N = w.shape[1]
    out_dtype = out_dtype or x2d.dtype
    tm = _tile(M, 256, 8)
    tn = _tile(N, 512, 128)
    tk = _tile(K, 512, 128)
    in_specs = [
        pl.BlockSpec((tm, tk), lambda i, j, k: (i, k)),
        pl.BlockSpec((tk, tn), lambda i, j, k: (k, j)),
        pl.BlockSpec((1, tn), lambda i, j, k: (0, j)),
    ]
    args = [x2d, w, b.reshape(1, N)]
    if residual is not None:
        in_specs.append(pl.BlockSpec((tm, tn), lambda i, j, k: (i, j)))
        args.append(residual)
    return pl.pallas_call(
        partial(_linear_kernel, residual=residual is not None),
        grid=(M // tm, N // tn, K // tk),
        out_shape=jax.ShapeDtypeStruct((M, N), out_dtype),
        in_specs=in_specs,
        out_specs=pl.BlockSpec((tm, tn), lambda i, j, k: (i, j)),
        scratch_shapes=[pltpu.VMEM((tm, tn), jnp.float32)],
        compiler_params=pltpu.CompilerParams(
            dimension_semantics=("parallel", "parallel", "arbitrary"),
            vmem_limit_bytes=VMEM_LIMIT),
    )(*args)


# ---------------------- flash-style multi-head attention --------------------

def _flash_mha_kernel(q_ref, k_ref, v_ref, m_ref, o_ref,
                      m_scr, l_scr, acc_scr, *, heads, scale):
    # q: (tq, D) bf16, k/v: (tk, D) bf16, mask: (1 | tq, tk) f32.
    # Heads live on lane slices of width Dh; per-head online softmax with
    # running max / sum in VMEM scratch; lane-dense (tq, D) output store.
    kv_step = pl.program_id(2)

    @pl.when(kv_step == 0)
    def _():
        m_scr[...] = jnp.full(m_scr.shape, NEG_INF, dtype=m_scr.dtype)
        l_scr[...] = jnp.zeros(l_scr.shape, dtype=l_scr.dtype)
        acc_scr[...] = jnp.zeros(acc_scr.shape, dtype=acc_scr.dtype)

    q = q_ref[...]
    k = k_ref[...]
    v = v_ref[...]
    msk = m_ref[...]                                  # (1 or tq, tk) f32
    D = q.shape[-1]
    Dh = D // heads

    for h in range(heads):
        sl = slice(h * Dh, (h + 1) * Dh)
        s = jax.lax.dot_general(
            q[:, sl], k[:, sl], (((1,), (1,)), ((), ())),
            preferred_element_type=jnp.float32) * scale        # (tq, tk)
        s = jnp.where(msk > 0, s, jnp.float32(MASK_NEG))
        m_prev = m_scr[h]                                       # (tq, 1)
        m_new = jnp.maximum(m_prev, jnp.max(s, axis=-1, keepdims=True))
        alpha = jnp.exp(m_prev - m_new)                         # (tq, 1)
        p = jnp.exp(s - m_new)                                  # (tq, tk)
        l_scr[h] = alpha * l_scr[h] + jnp.sum(p, axis=-1, keepdims=True)
        pv = jnp.dot(p.astype(v.dtype), v[:, sl],
                     preferred_element_type=jnp.float32)        # (tq, Dh)
        acc_scr[:, sl] = alpha * acc_scr[:, sl] + pv
        m_scr[h] = m_new

    @pl.when(kv_step == pl.num_programs(2) - 1)
    def _():
        for h in range(heads):
            sl = slice(h * Dh, (h + 1) * Dh)
            inv = pl.reciprocal(l_scr[h], approx=True)          # (tq, 1)
            acc_scr[:, sl] = acc_scr[:, sl] * inv
        o_ref[...] = acc_scr[...].astype(o_ref.dtype)


def mha_attention(q, k, v, mask, heads):
    """q: [B, Sq, D]; k/v: [B, Sk, D]; mask: [B, Mq, Sk] with Mq in {1, Sq}."""
    B, Sq, D = q.shape
    Sk = k.shape[1]
    Mq = mask.shape[1]
    Dh = D // heads

    tq = _tile(Sq, 256, 8)      # fits v7x's 64 MiB VMEM with room to spare
    tk = _tile(Sk, 512, 128)

    if Mq == Sq:
        mq_blk = tq
        mask_idx = lambda b, qi, ki: (b, qi, ki)
    else:                        # broadcast (e.g. padding-only source mask)
        mq_blk = 1
        mask_idx = lambda b, qi, ki: (b, 0, ki)

    return pl.pallas_call(
        partial(_flash_mha_kernel, heads=heads, scale=1.0 / math.sqrt(Dh)),
        grid=(B, Sq // tq, Sk // tk),
        out_shape=jax.ShapeDtypeStruct((B, Sq, D), q.dtype),
        in_specs=[
            pl.BlockSpec((None, tq, D), lambda b, qi, ki: (b, qi, 0)),
            pl.BlockSpec((None, tk, D), lambda b, qi, ki: (b, ki, 0)),
            pl.BlockSpec((None, tk, D), lambda b, qi, ki: (b, ki, 0)),
            pl.BlockSpec((None, mq_blk, tk), mask_idx),
        ],
        out_specs=pl.BlockSpec((None, tq, D), lambda b, qi, ki: (b, qi, 0)),
        scratch_shapes=[
            pltpu.VMEM((heads, tq, 1), jnp.float32),   # running max
            pltpu.VMEM((heads, tq, 1), jnp.float32),   # running sum
            pltpu.VMEM((tq, D), jnp.float32),          # output accumulator
        ],
        compiler_params=pltpu.CompilerParams(
            dimension_semantics=("parallel", "parallel", "arbitrary"),
            vmem_limit_bytes=VMEM_LIMIT),
    )(q, k, v, mask)


# ----------------------------- model (glue) --------------------------------

def self_attention_block(p, ln, x, tgt_mask, heads):
    B, S, D = x.shape
    x2d = x.reshape(B * S, D)
    # LN + fused Q|K|V projection: one [M, D] x [D, 3D] matmul.
    qkv = ln_linear(x2d, ln["g"], ln["b"], p["wqkv"], p["bqkv"],
                    out_dtype=jnp.bfloat16)
    q = qkv[:, :D].reshape(B, S, D)
    k = qkv[:, D:2 * D].reshape(B, S, D)
    v = qkv[:, 2 * D:].reshape(B, S, D)
    attn = mha_attention(q, k, v, tgt_mask, heads)          # [B, S, D] bf16
    out = linear(attn.reshape(B * S, D), p["wo"], p["bo"],
                 residual=x2d, out_dtype=jnp.float32)       # residual fused
    return out.reshape(B, S, D)


def cross_attention_block(p, ln, x, enc_out, src_mask, heads):
    B, Sq, D = x.shape
    Sk = enc_out.shape[1]
    x2d = x.reshape(B * Sq, D)
    q = ln_linear(x2d, ln["g"], ln["b"], p["wq"], p["bq"],
                  out_dtype=jnp.bfloat16).reshape(B, Sq, D)
    # K and V of the (un-normalized) encoder output in one fused matmul.
    kv = linear(enc_out.reshape(B * Sk, D), p["wkv"], p["bkv"],
                out_dtype=jnp.bfloat16)
    k = kv[:, :D].reshape(B, Sk, D)
    v = kv[:, D:].reshape(B, Sk, D)
    attn = mha_attention(q, k, v, src_mask, heads)
    out = linear(attn.reshape(B * Sq, D), p["wo"], p["bo"],
                 residual=x2d, out_dtype=jnp.float32)
    return out.reshape(B, Sq, D)


def feed_forward_block(p, ln, x):
    B, S, D = x.shape
    x2d = x.reshape(B * S, D)
    h = ln_linear(x2d, ln["g"], ln["b"], p["w1"], p["b1"],
                  relu=True, out_dtype=jnp.bfloat16)
    out = linear(h, p["w2"], p["b2"], residual=x2d, out_dtype=jnp.float32)
    return out.reshape(B, S, D)


def decoder_layer(p, x, enc_out, src_mask, tgt_mask, heads):
    x = self_attention_block(p["self_attn"], p["ln_self"], x, tgt_mask, heads)
    x = cross_attention_block(p["cross_attn"], p["ln_cross"], x, enc_out,
                              src_mask, heads)
    x = feed_forward_block(p["ff"], p["ln_ff"], x)
    return x


def decoder_forward(params, tokens, encoder_output, source_mask, target_mask,
                    *, heads):
    # Embedding is an externally supplied module in the reference; implemented
    # here as a plain token lookup (gather is glue, not a Pallas hot path).
    # TODO(synk): positional encoding lives inside the external embedding module.
    x = params["embedding"][tokens].astype(jnp.float32)      # [B, S, D]
    B, S_tgt, D = x.shape

    # Compact per-batch masks shared across heads (never broadcast over H);
    # the padding-only source mask also stays un-broadcast over the query dim.
    tgt_mask = target_mask[:, 0].astype(jnp.float32)          # [B, S_tgt, S_tgt]
    src_mask = source_mask[:, 0].astype(jnp.float32)          # [B, 1, S_src]

    for blk in params["blocks"]:
        x = decoder_layer(blk, x, encoder_output, src_mask, tgt_mask, heads)

    x2d = x.reshape(B * S_tgt, D)
    logits = ln_linear(x2d, params["ln_f"]["g"], params["ln_f"]["b"],
                       params["w_out"], params["b_out"], out_dtype=jnp.float32)
    return logits.reshape(B, S_tgt, params["w_out"].shape[1])


# --------------------------- parameter creation -----------------------------

def make_params(key, vocab_size, d_model, d_ff, blocks_count, heads_count):
    del heads_count  # heads are passed statically to the forward fn

    def dense(key, fan_in, fan_out):
        w = jax.random.normal(key, (fan_in, fan_out), jnp.float32) * 0.02
        return w.astype(jnp.bfloat16), jnp.zeros((fan_out,), jnp.float32)

    def ln():
        return {"g": jnp.ones((d_model,), jnp.float32),
                "b": jnp.zeros((d_model,), jnp.float32)}

    def self_mha(key):
        ks = jax.random.split(key, 2)
        wqkv, bqkv = dense(ks[0], d_model, 3 * d_model)   # fused Q|K|V
        wo, bo = dense(ks[1], d_model, d_model)
        return {"wqkv": wqkv, "bqkv": bqkv, "wo": wo, "bo": bo}

    def cross_mha(key):
        ks = jax.random.split(key, 3)
        wq, bq = dense(ks[0], d_model, d_model)
        wkv, bkv = dense(ks[1], d_model, 2 * d_model)     # fused K|V
        wo, bo = dense(ks[2], d_model, d_model)
        return {"wq": wq, "bq": bq, "wkv": wkv, "bkv": bkv, "wo": wo, "bo": bo}

    keys = jax.random.split(key, blocks_count + 3)
    blocks = []
    for bkey in keys[:blocks_count]:
        k1, k2, k3, k4 = jax.random.split(bkey, 4)
        w1, b1 = dense(k3, d_model, d_ff)
        w2, b2 = dense(k4, d_ff, d_model)
        blocks.append({
            "self_attn": self_mha(k1), "cross_attn": cross_mha(k2),
            "ff": {"w1": w1, "b1": b1, "w2": w2, "b2": b2},
            "ln_self": ln(), "ln_cross": ln(), "ln_ff": ln(),
        })

    emb = jax.random.normal(keys[-3], (vocab_size, d_model), jnp.float32) * 0.02
    w_out, b_out = dense(keys[-2], d_model, vocab_size)
    return {"embedding": emb, "blocks": blocks,
            "ln_f": ln(), "w_out": w_out, "b_out": b_out}


# --------------------------------- main -------------------------------------

if __name__ == "__main__":
    vocab_size, d_model, d_ff, blocks_count, heads_count = 16, 32, 64, 2, 4
    B, S_tgt, S_src = 2, 8, 8

    root = jax.random.PRNGKey(0)
    k_params, k_tok, k_enc = jax.random.split(root, 3)

    params = make_params(k_params, vocab_size, d_model, d_ff,
                         blocks_count, heads_count)

    tokens = jax.random.randint(k_tok, (B, S_tgt), 0, vocab_size)
    encoder_output = jax.random.normal(k_enc, (B, S_src, d_model), jnp.float32)
    source_mask = jnp.ones((B, 1, 1, S_src), jnp.float32)          # all visible
    causal = jnp.tril(jnp.ones((S_tgt, S_tgt), jnp.float32))
    target_mask = jnp.broadcast_to(causal, (B, 1, S_tgt, S_tgt))   # causal mask

    fwd = jax.jit(decoder_forward, static_argnames=("heads",))
    logits = fwd(params, tokens, encoder_output, source_mask, target_mask,
                 heads=heads_count)
    logits = jax.block_until_ready(logits)

    assert logits.shape == (B, S_tgt, vocab_size), logits.shape
    assert bool(jnp.all(jnp.isfinite(logits)))
    print("KERNEL_OK")
</pallas_src>

<mosaic_0001>
module attributes {stable_mosaic.version = 11 : i64} {
  func.func @_ln_linear_kernel(%arg0: i32, %arg1: i32, %arg2: memref<16x32xf32, #tpu.memory_space<vmem>>, %arg3: memref<1x32xf32, #tpu.memory_space<vmem>>, %arg4: memref<1x32xf32, #tpu.memory_space<vmem>>, %arg5: memref<32x96xbf16, #tpu.memory_space<vmem>>, %arg6: memref<1x96xf32, #tpu.memory_space<vmem>>, %arg7: memref<16x96xbf16, #tpu.memory_space<vmem>>, %arg8: memref<16x32xbf16, #tpu.memory_space<vmem>>) attributes {dimension_semantics = [#tpu.dimension_semantics<parallel>, #tpu.dimension_semantics<arbitrary>], iteration_bounds = array<i64: 1, 1>, scalar_prefetch = 0 : i64, scratch_operands = 1 : i64, tpu.core_type = #tpu.core_type<tc>, window_params = [{transform_indices = @transform_0, window_bounds = array<i64: 16, 32>}, {pipeline_mode = #tpu.pipeline_mode<synchronous>, transform_indices = @transform_1, window_bounds = array<i64: 1, 32>}, {pipeline_mode = #tpu.pipeline_mode<synchronous>, transform_indices = @transform_2, window_bounds = array<i64: 1, 32>}, {transform_indices = @transform_3, window_bounds = array<i64: 32, 96>}, {transform_indices = @transform_4, window_bounds = array<i64: 1, 96>}, {transform_indices = @transform_5, window_bounds = array<i64: 16, 96>}]} {
    %c0_i32 = arith.constant 0 : i32
    %0 = arith.cmpi eq, %arg1, %c0_i32 : i32
    %1 = arith.extui %0 : i1 to i32
    %c0_i32_0 = arith.constant 0 : i32
    %2 = arith.cmpi ne, %1, %c0_i32_0 : i32
    scf.if %2 {
      %c0_8 = arith.constant 0 : index
      %c0_9 = arith.constant 0 : index
      %11 = vector.load %arg2[%c0_8, %c0_9] : memref<16x32xf32, #tpu.memory_space<vmem>>, vector<16x32xf32>
      %cst_10 = arith.constant dense<0.000000e+00> : vector<16xf32>
      %12 = vector.multi_reduction <add>, %11, %cst_10 [1] : vector<16x32xf32> to vector<16xf32>
      %13 = vector.shape_cast %12 : vector<16xf32> to vector<16x1xf32>
      %cst_11 = arith.constant 3.200000e+01 : f32
      %14 = vector.broadcast %cst_11 : f32 to vector<16x1xf32>
      %15 = arith.divf %13, %14 : vector<16x1xf32>
      %16 = vector.broadcast %15 : vector<16x1xf32> to vector<16x32xf32>
      %17 = arith.subf %11, %16 : vector<16x32xf32>
      %18 = arith.mulf %17, %17 : vector<16x32xf32>
      %cst_12 = arith.constant dense<0.000000e+00> : vector<16xf32>
      %19 = vector.multi_reduction <add>, %18, %cst_12 [1] : vector<16x32xf32> to vector<16xf32>
      %20 = vector.shape_cast %19 : vector<16xf32> to vector<16x1xf32>
      %cst_13 = arith.constant 3.200000e+01 : f32
      %21 = vector.broadcast %cst_13 : f32 to vector<16x1xf32>
      %22 = arith.divf %20, %21 : vector<16x1xf32>
      %23 = vector.broadcast %15 : vector<16x1xf32> to vector<16x32xf32>
      %24 = arith.subf %11, %23 : vector<16x32xf32>
      %cst_14 = arith.constant 9.99999997E-7 : f32
      %25 = vector.broadcast %cst_14 : f32 to vector<16x1xf32>
      %26 = arith.addf %22, %25 : vector<16x1xf32>
      %27 = math.rsqrt %26 : vector<16x1xf32>
      %28 = vector.broadcast %27 : vector<16x1xf32> to vector<16x32xf32>
      %29 = arith.mulf %24, %28 : vector<16x32xf32>
      %c0_15 = arith.constant 0 : index
      %c0_16 = arith.constant 0 : index
      %30 = vector.load %arg3[%c0_15, %c0_16] : memref<1x32xf32, #tpu.memory_space<vmem>>, vector<1x32xf32>
      %31 = vector.broadcast %30 : vector<1x32xf32> to vector<16x32xf32>
      %32 = arith.mulf %29, %31 : vector<16x32xf32>
      %c0_17 = arith.constant 0 : index
      %c0_18 = arith.constant 0 : index
      %33 = vector.load %arg4[%c0_17, %c0_18] : memref<1x32xf32, #tpu.memory_space<vmem>>, vector<1x32xf32>
      %34 = vector.broadcast %33 : vector<1x32xf32> to vector<16x32xf32>
      %35 = arith.addf %32, %34 : vector<16x32xf32>
      %36 = arith.truncf %35 : vector<16x32xf32> to vector<16x32xbf16>
      %c0_19 = arith.constant 0 : index
      %c0_20 = arith.constant 0 : index
      %37 = vector.load %arg8[%c0_19, %c0_20] : memref<16x32xbf16, #tpu.memory_space<vmem>>, vector<16x32xbf16>
      tpu.vector_store %arg8[%c0_19, %c0_20], %36 {strides = array<i32>} : memref<16x32xbf16, #tpu.memory_space<vmem>>, vector<16x32xbf16>,
    } else {
    }
    %c0 = arith.constant 0 : index
    %c0_1 = arith.constant 0 : index
    %3 = vector.load %arg8[%c0, %c0_1] : memref<16x32xbf16, #tpu.memory_space<vmem>>, vector<16x32xbf16>
    %c0_2 = arith.constant 0 : index
    %c0_3 = arith.constant 0 : index
    %4 = vector.load %arg5[%c0_2, %c0_3] : memref<32x96xbf16, #tpu.memory_space<vmem>>, vector<32x96xbf16>
    %cst = arith.constant dense<0.000000e+00> : vector<16x96xf32>
    %5 = tpu.matmul %3, %4, %cst {dimension_numbers = #tpu.dot_dimension_numbers<[1], [0], [0], [1], [0, 0, 1, 1], [], []>} : vector<16x32xbf16>, vector<32x96xbf16>, vector<16x96xf32> -> vector<16x96xf32>
    %c0_4 = arith.constant 0 : index
    %c0_5 = arith.constant 0 : index
    %6 = vector.load %arg6[%c0_4, %c0_5] : memref<1x96xf32, #tpu.memory_space<vmem>>, vector<1x96xf32>
    %7 = vector.broadcast %6 : vector<1x96xf32> to vector<16x96xf32>
    %8 = arith.addf %5, %7 : vector<16x96xf32>
    %9 = arith.truncf %8 : vector<16x96xf32> to vector<16x96xbf16>
    %c0_6 = arith.constant 0 : index
    %c0_7 = arith.constant 0 : index
    %10 = vector.load %arg7[%c0_6, %c0_7] : memref<16x96xbf16, #tpu.memory_space<vmem>>, vector<16x96xbf16>
    tpu.vector_store %arg7[%c0_6, %c0_7], %9 {strides = array<i32>} : memref<16x96xbf16, #tpu.memory_space<vmem>>, vector<16x96xbf16>,
    return
  }
  func.func @transform_0(%arg0: i32, %arg1: i32) -> (i32, i32) {
    %c0_i32 = arith.constant 0 : i32
    %c0_i32_0 = arith.constant 0 : i32
    return %arg0, %c0_i32 : i32, i32
  }
  func.func @transform_1(%arg0: i32, %arg1: i32) -> (i32, i32) {
    %c0_i32 = arith.constant 0 : i32
    %c0_i32_0 = arith.constant 0 : i32
    %c0_i32_1 = arith.constant 0 : i32
    return %c0_i32, %c0_i32_0 : i32, i32
  }
  func.func @transform_2(%arg0: i32, %arg1: i32) -> (i32, i32) {
    %c0_i32 = arith.constant 0 : i32
    %c0_i32_0 = arith.constant 0 : i32
    %c0_i32_1 = arith.constant 0 : i32
    return %c0_i32, %c0_i32_0 : i32, i32
  }
  func.func @transform_3(%arg0: i32, %arg1: i32) -> (i32, i32) {
    %c0_i32 = arith.constant 0 : i32
    %c0_i32_0 = arith.constant 0 : i32
    return %c0_i32, %arg1 : i32, i32
  }
  func.func @transform_4(%arg0: i32, %arg1: i32) -> (i32, i32) {
    %c0_i32 = arith.constant 0 : i32
    %c0_i32_0 = arith.constant 0 : i32
    return %c0_i32, %arg1 : i32, i32
  }
  func.func @transform_5(%arg0: i32, %arg1: i32) -> (i32, i32) {
    %c0_i32 = arith.constant 0 : i32
    return %arg0, %arg1 : i32, i32
  }
}

module attributes {stable_mosaic.version = 11 : i64} {
  func.func @_linear_kernel(%arg0: i32, %arg1: i32, %arg2: i32, %arg3: memref<16x32xbf16, #tpu.memory_space<vmem>>, %arg4: memref<32x32xbf16, #tpu.memory_space<vmem>>, %arg5: memref<1x32xf32, #tpu.memory_space<vmem>>, %arg6: memref<16x32xf32, #tpu.memory_space<vmem>>, %arg7: memref<16x32xf32, #tpu.memory_space<vmem>>, %arg8: memref<16x32xf32, #tpu.memory_space<vmem>>) attributes {dimension_semantics = [#tpu.dimension_semantics<parallel>, #tpu.dimension_semantics<parallel>, #tpu.dimension_semantics<arbitrary>], iteration_bounds = array<i64: 1, 1, 1>, scalar_prefetch = 0 : i64, scratch_operands = 1 : i64, tpu.core_type = #tpu.core_type<tc>, window_params = [{transform_indices = @transform_0, window_bounds = array<i64: 16, 32>}, {transform_indices = @transform_1, window_bounds = array<i64: 32, 32>}, {transform_indices = @transform_2, window_bounds = array<i64: 1, 32>}, {transform_indices = @transform_3, window_bounds = array<i64: 16, 32>}, {transform_indices = @transform_4, window_bounds = array<i64: 16, 32>}]} {
    %c0_i32 = arith.constant 0 : i32
    %0 = arith.cmpi eq, %arg2, %c0_i32 : i32
    %1 = arith.extui %0 : i1 to i32
    %c0_i32_0 = arith.constant 0 : i32
    %2 = arith.cmpi ne, %1, %c0_i32_0 : i32
    scf.if %2 {
      %cst_10 = arith.constant 0.000000e+00 : f32
      %12 = vector.broadcast %cst_10 : f32 to vector<16x32xf32>
      %c0_11 = arith.constant 0 : index
      %c0_12 = arith.constant 0 : index
      %13 = vector.load %arg8[%c0_11, %c0_12] : memref<16x32xf32, #tpu.memory_space<vmem>>, vector<16x32xf32>
      tpu.vector_store %arg8[%c0_11, %c0_12], %12 {strides = array<i32>} : memref<16x32xf32, #tpu.memory_space<vmem>>, vector<16x32xf32>,
    } else {
    }
    %c0 = arith.constant 0 : index
    %c0_1 = arith.constant 0 : index
    %3 = vector.load %arg8[%c0, %c0_1] : memref<16x32xf32, #tpu.memory_space<vmem>>, vector<16x32xf32>
    %c0_2 = arith.constant 0 : index
    %c0_3 = arith.constant 0 : index
    %4 = vector.load %arg3[%c0_2, %c0_3] : memref<16x32xbf16, #tpu.memory_space<vmem>>, vector<16x32xbf16>
    %c0_4 = arith.constant 0 : index
    %c0_5 = arith.constant 0 : index
    %5 = vector.load %arg4[%c0_4, %c0_5] : memref<32x32xbf16, #tpu.memory_space<vmem>>, vector<32x32xbf16>
    %cst = arith.constant dense<0.000000e+00> : vector<16x32xf32>
    %6 = tpu.matmul %4, %5, %cst {dimension_numbers = #tpu.dot_dimension_numbers<[1], [0], [0], [1], [0, 0, 1, 1], [], []>} : vector<16x32xbf16>, vector<32x32xbf16>, vector<16x32xf32> -> vector<16x32xf32>
    %7 = arith.addf %3, %6 : vector<16x32xf32>
    %c0_6 = arith.constant 0 : index
    %c0_7 = arith.constant 0 : index
    %8 = vector.load %arg8[%c0_6, %c0_7] : memref<16x32xf32, #tpu.memory_space<vmem>>, vector<16x32xf32>
    tpu.vector_store %arg8[%c0_6, %c0_7], %7 {strides = array<i32>} : memref<16x32xf32, #tpu.memory_space<vmem>>, vector<16x32xf32>,
    %c0_i32_8 = arith.constant 0 : i32
    %9 = arith.cmpi eq, %arg2, %c0_i32_8 : i32
    %10 = arith.extui %9 : i1 to i32
    %c0_i32_9 = arith.constant 0 : i32
    %11 = arith.cmpi ne, %10, %c0_i32_9 : i32
    scf.if %11 {
      %c0_10 = arith.constant 0 : index
      %c0_11 = arith.constant 0 : index
      %12 = vector.load %arg8[%c0_10, %c0_11] : memref<16x32xf32, #tpu.memory_space<vmem>>, vector<16x32xf32>
      %c0_12 = arith.constant 0 : index
      %c0_13 = arith.constant 0 : index
      %13 = vector.load %arg5[%c0_12, %c0_13] : memref<1x32xf32, #tpu.memory_space<vmem>>, vector<1x32xf32>
      %14 = vector.broadcast %13 : vector<1x32xf32> to vector<16x32xf32>
      %15 = arith.addf %12, %14 : vector<16x32xf32>
      %c0_14 = arith.constant 0 : index
      %c0_15 = arith.constant 0 : index
      %16 = vector.load %arg6[%c0_14, %c0_15] : memref<16x32xf32, #tpu.memory_space<vmem>>, vector<16x32xf32>
      %17 = arith.addf %15, %16 : vector<16x32xf32>
      %c0_16 = arith.constant 0 : index
      %c0_17 = arith.constant 0 : index
      %18 = vector.load %arg7[%c0_16, %c0_17] : memref<16x32xf32, #tpu.memory_space<vmem>>, vector<16x32xf32>
      tpu.vector_store %arg7[%c0_16, %c0_17], %17 {strides = array<i32>} : memref<16x32xf32, #tpu.memory_space<vmem>>, vector<16x32xf32>,
    } else {
    }
    return
  }
  func.func @transform_0(%arg0: i32, %arg1: i32, %arg2: i32) -> (i32, i32) {
    %c0_i32 = arith.constant 0 : i32
    return %arg0, %arg2 : i32, i32
  }
  func.func @transform_1(%arg0: i32, %arg1: i32, %arg2: i32) -> (i32, i32) {
    %c0_i32 = arith.constant 0 : i32
    return %arg2, %arg1 : i32, i32
  }
  func.func @transform_2(%arg0: i32, %arg1: i32, %arg2: i32) -> (i32, i32) {
    %c0_i32 = arith.constant 0 : i32
    %c0_i32_0 = arith.constant 0 : i32
    return %c0_i32, %arg1 : i32, i32
  }
  func.func @transform_3(%arg0: i32, %arg1: i32, %arg2: i32) -> (i32, i32) {
    %c0_i32 = arith.constant 0 : i32
    return %arg0, %arg1 : i32, i32
  }
  func.func @transform_4(%arg0: i32, %arg1: i32, %arg2: i32) -> (i32, i32) {
    %c0_i32 = arith.constant 0 : i32
    return %arg0, %arg1 : i32, i32
  }
}

module attributes {stable_mosaic.version = 11 : i64} {
  func.func @_flash_mha_kernel(%arg0: i32, %arg1: i32, %arg2: i32, %arg3: memref<1x8x32xbf16, #tpu.memory_space<vmem>>, %arg4: memref<1x8x32xbf16, #tpu.memory_space<vmem>>, %arg5: memref<1x8x32xbf16, #tpu.memory_space<vmem>>, %arg6: memref<1x8x8xf32, #tpu.memory_space<vmem>>, %arg7: memref<1x8x32xbf16, #tpu.memory_space<vmem>>, %arg8: memref<4x8x1xf32, #tpu.memory_space<vmem>>, %arg9: memref<4x8x1xf32, #tpu.memory_space<vmem>>, %arg10: memref<8x32xf32, #tpu.memory_space<vmem>>) attributes {dimension_semantics = [#tpu.dimension_semantics<parallel>, #tpu.dimension_semantics<parallel>, #tpu.dimension_semantics<arbitrary>], iteration_bounds = array<i64: 2, 1, 1>, scalar_prefetch = 0 : i64, scratch_operands = 3 : i64, tpu.core_type = #tpu.core_type<tc>, window_params = [{transform_indices = @transform_0, window_bounds = array<i64: 1, 8, 32>}, {transform_indices = @transform_1, window_bounds = array<i64: 1, 8, 32>}, {transform_indices = @transform_2, window_bounds = array<i64: 1, 8, 32>}, {transform_indices = @transform_3, window_bounds = array<i64: 1, 8, 8>}, {transform_indices = @transform_4, window_bounds = array<i64: 1, 8, 32>}]} {
    %c0_i32 = arith.constant 0 : i32
    %0 = arith.cmpi eq, %arg2, %c0_i32 : i32
    %1 = arith.extui %0 : i1 to i32
    %c0_i32_0 = arith.constant 0 : i32
    %2 = arith.cmpi ne, %1, %c0_i32_0 : i32
    scf.if %2 {
      %cst_99 = arith.constant -1.000000e+30 : f32
      %170 = vector.broadcast %cst_99 : f32 to vector<4x8x1xf32>
      %c0_100 = arith.constant 0 : index
      %c0_101 = arith.constant 0 : index
      %c0_102 = arith.constant 0 : index
      %171 = vector.load %arg8[%c0_100, %c0_101, %c0_102] : memref<4x8x1xf32, #tpu.memory_space<vmem>>, vector<4x8x1xf32>
      tpu.vector_store %arg8[%c0_100, %c0_101, %c0_102], %170 {strides = array<i32>} : memref<4x8x1xf32, #tpu.memory_space<vmem>>, vector<4x8x1xf32>,
      %cst_103 = arith.constant 0.000000e+00 : f32
      %172 = vector.broadcast %cst_103 : f32 to vector<4x8x1xf32>
      %c0_104 = arith.constant 0 : index
      %c0_105 = arith.constant 0 : index
      %c0_106 = arith.constant 0 : index
      %173 = vector.load %arg9[%c0_104, %c0_105, %c0_106] : memref<4x8x1xf32, #tpu.memory_space<vmem>>, vector<4x8x1xf32>
      tpu.vector_store %arg9[%c0_104, %c0_105, %c0_106], %172 {strides = array<i32>} : memref<4x8x1xf32, #tpu.memory_space<vmem>>, vector<4x8x1xf32>,
      %cst_107 = arith.constant 0.000000e+00 : f32
      %174 = vector.broadcast %cst_107 : f32 to vector<8x32xf32>
      %c0_108 = arith.constant 0 : index
      %c0_109 = arith.constant 0 : index
      %175 = vector.load %arg10[%c0_108, %c0_109] : memref<8x32xf32, #tpu.memory_space<vmem>>, vector<8x32xf32>
      tpu.vector_store %arg10[%c0_108, %c0_109], %174 {strides = array<i32>} : memref<8x32xf32, #tpu.memory_space<vmem>>, vector<8x32xf32>,
    } else {
    }
    %c0 = arith.constant 0 : index
    %c0_1 = arith.constant 0 : index
    %c0_2 = arith.constant 0 : index
    %3 = vector.load %arg3[%c0, %c0_1, %c0_2] : memref<1x8x32xbf16, #tpu.memory_space<vmem>>, vector<1x8x32xbf16>
    %4 = vector.shape_cast %3 : vector<1x8x32xbf16> to vector<8x32xbf16>
    %c0_3 = arith.constant 0 : index
    %c0_4 = arith.constant 0 : index
    %c0_5 = arith.constant 0 : index
    %5 = vector.load %arg4[%c0_3, %c0_4, %c0_5] : memref<1x8x32xbf16, #tpu.memory_space<vmem>>, vector<1x8x32xbf16>
    %6 = vector.shape_cast %5 : vector<1x8x32xbf16> to vector<8x32xbf16>
    %c0_6 = arith.constant 0 : index
    %c0_7 = arith.constant 0 : index
    %c0_8 = arith.constant 0 : index
    %7 = vector.load %arg5[%c0_6, %c0_7, %c0_8] : memref<1x8x32xbf16, #tpu.memory_space<vmem>>, vector<1x8x32xbf16>
    %8 = vector.shape_cast %7 : vector<1x8x32xbf16> to vector<8x32xbf16>
    %c0_9 = arith.constant 0 : index
    %c0_10 = arith.constant 0 : index
    %c0_11 = arith.constant 0 : index
    %9 = vector.load %arg6[%c0_9, %c0_10, %c0_11] : memref<1x8x8xf32, #tpu.memory_space<vmem>>, vector<1x8x8xf32>
    %10 = vector.shape_cast %9 : vector<1x8x8xf32> to vector<8x8xf32>
    %11 = vector.extract_strided_slice %4 {offsets = [0, 0], sizes = [8, 8], strides = [1, 1]} : vector<8x32xbf16> to vector<8x8xbf16>
    %12 = vector.extract_strided_slice %6 {offsets = [0, 0], sizes = [8, 8], strides = [1, 1]} : vector<8x32xbf16> to vector<8x8xbf16>
    %cst = arith.constant dense<0.000000e+00> : vector<8x8xf32>
    %13 = tpu.matmul %11, %12, %cst {dimension_numbers = #tpu.dot_dimension_numbers<[1], [1], [0], [0], [0, 0, 1, 0], [], []>} : vector<8x8xbf16>, vector<8x8xbf16>, vector<8x8xf32> -> vector<8x8xf32>
    %cst_12 = arith.constant 0.353553385 : f32
    %14 = vector.broadcast %cst_12 : f32 to vector<8x8xf32>
    %15 = arith.mulf %13, %14 : vector<8x8xf32>
    %cst_13 = arith.constant 0.000000e+00 : f32
    %16 = vector.broadcast %cst_13 : f32 to vector<8x8xf32>
    %17 = arith.cmpf ogt, %10, %16 : vector<8x8xf32>
    %cst_14 = arith.constant -1.000000e+09 : f32
    %18 = vector.broadcast %cst_14 : f32 to vector<8x8xf32>
    %19 = arith.select %17, %15, %18 : vector<8x8xi1>, vector<8x8xf32>
    %c0_15 = arith.constant 0 : index
    %c0_16 = arith.constant 0 : index
    %c0_17 = arith.constant 0 : index
    %20 = vector.load %arg8[%c0_15, %c0_16, %c0_17] : memref<4x8x1xf32, #tpu.memory_space<vmem>>, vector<1x8x1xf32>
    %21 = vector.shape_cast %20 : vector<1x8x1xf32> to vector<8x1xf32>
    %cst_18 = arith.constant dense<0xFF800000> : vector<8xf32>
    %22 = vector.multi_reduction <maximumf>, %19, %cst_18 [1] : vector<8x8xf32> to vector<8xf32>
    %23 = vector.shape_cast %22 : vector<8xf32> to vector<8x1xf32>
    %24 = arith.maximumf %21, %23 : vector<8x1xf32>
    %25 = arith.subf %21, %24 : vector<8x1xf32>
    %26 = math.exp %25 : vector<8x1xf32>
    %27 = vector.broadcast %24 : vector<8x1xf32> to vector<8x8xf32>
    %28 = arith.subf %19, %27 : vector<8x8xf32>
    %29 = math.exp %28 : vector<8x8xf32>
    %c0_19 = arith.constant 0 : index
    %c0_20 = arith.constant 0 : index
    %c0_21 = arith.constant 0 : index
    %30 = vector.load %arg9[%c0_19, %c0_20, %c0_21] : memref<4x8x1xf32, #tpu.memory_space<vmem>>, vector<1x8x1xf32>
    %31 = vector.shape_cast %30 : vector<1x8x1xf32> to vector<8x1xf32>
    %32 = arith.mulf %26, %31 : vector<8x1xf32>
    %cst_22 = arith.constant dense<0.000000e+00> : vector<8xf32>
    %33 = vector.multi_reduction <add>, %29, %cst_22 [1] : vector<8x8xf32> to vector<8xf32>
    %34 = vector.shape_cast %33 : vector<8xf32> to vector<8x1xf32>
    %35 = arith.addf %32, %34 : vector<8x1xf32>
    %c0_23 = arith.constant 0 : index
    %c0_24 = arith.constant 0 : index
    %c0_25 = arith.constant 0 : index
    %36 = vector.load %arg9[%c0_23, %c0_24, %c0_25] : memref<4x8x1xf32, #tpu.memory_space<vmem>>, vector<1x8x1xf32>
    %37 = vector.shape_cast %36 : vector<1x8x1xf32> to vector<8x1xf32>
    %38 = vector.shape_cast %35 : vector<8x1xf32> to vector<1x8x1xf32>
    tpu.vector_store %arg9[%c0_23, %c0_24, %c0_25], %38 {strides = array<i32>} : memref<4x8x1xf32, #tpu.memory_space<vmem>>, vector<1x8x1xf32>,
    %39 = arith.truncf %29 : vector<8x8xf32> to vector<8x8xbf16>
    %40 = vector.extract_strided_slice %8 {offsets = [0, 0], sizes = [8, 8], strides = [1, 1]} : vector<8x32xbf16> to vector<8x8xbf16>
    %cst_26 = arith.constant dense<0.000000e+00> : vector<8x8xf32>
    %41 = tpu.matmul %39, %40, %cst_26 {dimension_numbers = #tpu.dot_dimension_numbers<[1], [0], [0], [1], [0, 0, 1, 1], [], []>} : vector<8x8xbf16>, vector<8x8xbf16>, vector<8x8xf32> -> vector<8x8xf32>
    %c0_27 = arith.constant 0 : index
    %c0_28 = arith.constant 0 : index
    %42 = vector.load %arg10[%c0_27, %c0_28] : memref<8x32xf32, #tpu.memory_space<vmem>>, vector<8x8xf32>
    %43 = vector.broadcast %26 : vector<8x1xf32> to vector<8x8xf32>
    %44 = arith.mulf %43, %42 : vector<8x8xf32>
    %45 = arith.addf %44, %41 : vector<8x8xf32>
    %c0_29 = arith.constant 0 : index
    %c0_30 = arith.constant 0 : index
    %46 = vector.load %arg10[%c0_29, %c0_30] : memref<8x32xf32, #tpu.memory_space<vmem>>, vector<8x8xf32>
    tpu.vector_store %arg10[%c0_29, %c0_30], %45 {strides = array<i32>} : memref<8x32xf32, #tpu.memory_space<vmem>>, vector<8x8xf32>,
    %c0_31 = arith.constant 0 : index
    %c0_32 = arith.constant 0 : index
    %c0_33 = arith.constant 0 : index
    %47 = vector.load %arg8[%c0_31, %c0_32, %c0_33] : memref<4x8x1xf32, #tpu.memory_space<vmem>>, vector<1x8x1xf32>
    %48 = vector.shape_cast %47 : vector<1x8x1xf32> to vector<8x1xf32>
    %49 = vector.shape_cast %24 : vector<8x1xf32> to vector<1x8x1xf32>
    tpu.vector_store %arg8[%c0_31, %c0_32, %c0_33], %49 {strides = array<i32>} : memref<4x8x1xf32, #tpu.memory_space<vmem>>, vector<1x8x1xf32>,
    %50 = vector.extract_strided_slice %4 {offsets = [0, 8], sizes = [8, 8], strides = [1, 1]} : vector<8x32xbf16> to vector<8x8xbf16>
    %51 = vector.extract_strided_slice %6 {offsets = [0, 8], sizes = [8, 8], strides = [1, 1]} : vector<8x32xbf16> to vector<8x8xbf16>
    %cst_34 = arith.constant dense<0.000000e+00> : vector<8x8xf32>
    %52 = tpu.matmul %50, %51, %cst_34 {dimension_numbers = #tpu.dot_dimension_numbers<[1], [1], [0], [0], [0, 0, 1, 0], [], []>} : vector<8x8xbf16>, vector<8x8xbf16>, vector<8x8xf32> -> vector<8x8xf32>
    %cst_35 = arith.constant 0.353553385 : f32
    %53 = vector.broadcast %cst_35 : f32 to vector<8x8xf32>
    %54 = arith.mulf %52, %53 : vector<8x8xf32>
    %cst_36 = arith.constant 0.000000e+00 : f32
    %55 = vector.broadcast %cst_36 : f32 to vector<8x8xf32>
    %56 = arith.cmpf ogt, %10, %55 : vector<8x8xf32>
    %cst_37 = arith.constant -1.000000e+09 : f32
    %57 = vector.broadcast %cst_37 : f32 to vector<8x8xf32>
    %58 = arith.select %56, %54, %57 : vector<8x8xi1>, vector<8x8xf32>
    %c1 = arith.constant 1 : index
    %c0_38 = arith.constant 0 : index
    %c0_39 = arith.constant 0 : index
    %59 = vector.load %arg8[%c1, %c0_38, %c0_39] : memref<4x8x1xf32, #tpu.memory_space<vmem>>, vector<1x8x1xf32>
    %60 = vector.shape_cast %59 : vector<1x8x1xf32> to vector<8x1xf32>
    %cst_40 = arith.constant dense<0xFF800000> : vector<8xf32>
    %61 = vector.multi_reduction <maximumf>, %58, %cst_40 [1] : vector<8x8xf32> to vector<8xf32>
    %62 = vector.shape_cast %61 : vector<8xf32> to vector<8x1xf32>
    %63 = arith.maximumf %60, %62 : vector<8x1xf32>
    %64 = arith.subf %60, %63 : vector<8x1xf32>
    %65 = math.exp %64 : vector<8x1xf32>
    %66 = vector.broadcast %63 : vector<8x1xf32> to vector<8x8xf32>
    %67 = arith.subf %58, %66 : vector<8x8xf32>
    %68 = math.exp %67 : vector<8x8xf32>
    %c1_41 = arith.constant 1 : index
    %c0_42 = arith.constant 0 : index
    %c0_43 = arith.constant 0 : index
    %69 = vector.load %arg9[%c1_41, %c0_42, %c0_43] : memref<4x8x1xf32, #tpu.memory_space<vmem>>, vector<1x8x1xf32>
    %70 = vector.shape_cast %69 : vector<1x8x1xf32> to vector<8x1xf32>
    %71 = arith.mulf %65, %70 : vector<8x1xf32>
    %cst_44 = arith.constant dense<0.000000e+00> : vector<8xf32>
    %72 = vector.multi_reduction <add>, %68, %cst_44 [1] : vector<8x8xf32> to vector<8xf32>
    %73 = vector.shape_cast %72 : vector<8xf32> to vector<8x1xf32>
    %74 = arith.addf %71, %73 : vector<8x1xf32>
    %c1_45 = arith.constant 1 : index
    %c0_46 = arith.constant 0 : index
    %c0_47 = arith.constant 0 : index
    %75 = vector.load %arg9[%c1_45, %c0_46, %c0_47] : memref<4x8x1xf32, #tpu.memory_space<vmem>>, vector<1x8x1xf32>
    %76 = vector.shape_cast %75 : vector<1x8x1xf32> to vector<8x1xf32>
    %77 = vector.shape_cast %74 : vector<8x1xf32> to vector<1x8x1xf32>
    tpu.vector_store %arg9[%c1_45, %c0_46, %c0_47], %77 {strides = array<i32>} : memref<4x8x1xf32, #tpu.memory_space<vmem>>, vector<1x8x1xf32>,
    %78 = arith.truncf %68 : vector<8x8xf32> to vector<8x8xbf16>
    %79 = vector.extract_strided_slice %8 {offsets = [0, 8], sizes = [8, 8], strides = [1, 1]} : vector<8x32xbf16> to vector<8x8xbf16>
    %cst_48 = arith.constant dense<0.000000e+00> : vector<8x8xf32>
    %80 = tpu.matmul %78, %79, %cst_48 {dimension_numbers = #tpu.dot_dimension_numbers<[1], [0], [0], [1], [0, 0, 1, 1], [], []>} : vector<8x8xbf16>, vector<8x8xbf16>, vector<8x8xf32> -> vector<8x8xf32>
    %c0_49 = arith.constant 0 : index
    %c8 = arith.constant 8 : index
    %81 = vector.load %arg10[%c0_49, %c8] : memref<8x32xf32, #tpu.memory_space<vmem>>, vector<8x8xf32>
    %82 = vector.broadcast %65 : vector<8x1xf32> to vector<8x8xf32>
    %83 = arith.mulf %82, %81 : vector<8x8xf32>
    %84 = arith.addf %83, %80 : vector<8x8xf32>
    %c0_50 = arith.constant 0 : index
    %c8_51 = arith.constant 8 : index
    %85 = vector.load %arg10[%c0_50, %c8_51] : memref<8x32xf32, #tpu.memory_space<vmem>>, vector<8x8xf32>
    tpu.vector_store %arg10[%c0_50, %c8_51], %84 {strides = array<i32>} : memref<8x32xf32, #tpu.memory_space<vmem>>, vector<8x8xf32>,
    %c1_52 = arith.constant 1 : index
    %c0_53 = arith.constant 0 : index
    %c0_54 = arith.constant 0 : index
    %86 = vector.load %arg8[%c1_52, %c0_53, %c0_54] : memref<4x8x1xf32, #tpu.memory_space<vmem>>, vector<1x8x1xf32>
    %87 = vector.shape_cast %86 : vector<1x8x1xf32> to vector<8x1xf32>
    %88 = vector.shape_cast %63 : vector<8x1xf32> to vector<1x8x1xf32>
    tpu.vector_store %arg8[%c1_52, %c0_53, %c0_54], %88 {strides = array<i32>} : memref<4x8x1xf32, #tpu.memory_space<vmem>>, vector<1x8x1xf32>,
    %89 = vector.extract_strided_slice %4 {offsets = [0, 16], sizes = [8, 8], strides = [1, 1]} : vector<8x32xbf16> to vector<8x8xbf16>
    %90 = vector.extract_strided_slice %6 {offsets = [0, 16], sizes = [8, 8], strides = [1, 1]} : vector<8x32xbf16> to vector<8x8xbf16>
    %cst_55 = arith.constant dense<0.000000e+00> : vector<8x8xf32>
    %91 = tpu.matmul %89, %90, %cst_55 {dimension_numbers = #tpu.dot_dimension_numbers<[1], [1], [0], [0], [0, 0, 1, 0], [], []>} : vector<8x8xbf16>, vector<8x8xbf16>, vector<8x8xf32> -> vector<8x8xf32>
    %cst_56 = arith.constant 0.353553385 : f32
    %92 = vector.broadcast %cst_56 : f32 to vector<8x8xf32>
    %93 = arith.mulf %91, %92 : vector<8x8xf32>
    %cst_57 = arith.constant 0.000000e+00 : f32
    %94 = vector.broadcast %cst_57 : f32 to vector<8x8xf32>
    %95 = arith.cmpf ogt, %10, %94 : vector<8x8xf32>
    %cst_58 = arith.constant -1.000000e+09 : f32
    %96 = vector.broadcast %cst_58 : f32 to vector<8x8xf32>
    %97 = arith.select %95, %93, %96 : vector<8x8xi1>, vector<8x8xf32>
    %c2 = arith.constant 2 : index
    %c0_59 = arith.constant 0 : index
    %c0_60 = arith.constant 0 : index
    %98 = vector.load %arg8[%c2, %c0_59, %c0_60] : memref<4x8x1xf32, #tpu.memory_space<vmem>>, vector<1x8x1xf32>
    %99 = vector.shape_cast %98 : vector<1x8x1xf32> to vector<8x1xf32>
    %cst_61 = arith.constant dense<0xFF800000> : vector<8xf32>
    %100 = vector.multi_reduction <maximumf>, %97, %cst_61 [1] : vector<8x8xf32> to vector<8xf32>
    %101 = vector.shape_cast %100 : vector<8xf32> to vector<8x1xf32>
    %102 = arith.maximumf %99, %101 : vector<8x1xf32>
    %103 = arith.subf %99, %102 : vector<8x1xf32>
    %104 = math.exp %103 : vector<8x1xf32>
    %105 = vector.broadcast %102 : vector<8x1xf32> to vector<8x8xf32>
    %106 = arith.subf %97, %105 : vector<8x8xf32>
    %107 = math.exp %106 : vector<8x8xf32>
    %c2_62 = arith.constant 2 : index
    %c0_63 = arith.constant 0 : index
    %c0_64 = arith.constant 0 : index
    %108 = vector.load %arg9[%c2_62, %c0_63, %c0_64] : memref<4x8x1xf32, #tpu.memory_space<vmem>>, vector<1x8x1xf32>
    %109 = vector.shape_cast %108 : vector<1x8x1xf32> to vector<8x1xf32>
    %110 = arith.mulf %104, %109 : vector<8x1xf32>
    %cst_65 = arith.constant dense<0.000000e+00> : vector<8xf32>
    %111 = vector.multi_reduction <add>, %107, %cst_65 [1] : vector<8x8xf32> to vector<8xf32>
    %112 = vector.shape_cast %111 : vector<8xf32> to vector<8x1xf32>
    %113 = arith.addf %110, %112 : vector<8x1xf32>
    %c2_66 = arith.constant 2 : index
    %c0_67 = arith.constant 0 : index
    %c0_68 = arith.constant 0 : index
    %114 = vector.load %arg9[%c2_66, %c0_67, %c0_68] : memref<4x8x1xf32, #tpu.memory_space<vmem>>, vector<1x8x1xf32>
    %115 = vector.shape_cast %114 : vector<1x8x1xf32> to vector<8x1xf32>
    %116 = vector.shape_cast %113 : vector<8x1xf32> to vector<1x8x1xf32>
    tpu.vector_store %arg9[%c2_66, %c0_67, %c0_68], %116 {strides = array<i32>} : memref<4x8x1xf32, #tpu.memory_space<vmem>>, vector<1x8x1xf32>,
    %117 = arith.truncf %107 : vector<8x8xf32> to vector<8x8xbf16>
    %118 = vector.extract_strided_slice %8 {offsets = [0, 16], sizes = [8, 8], strides = [1, 1]} : vector<8x32xbf16> to vector<8x8xbf16>
    %cst_69 = arith.constant dense<0.000000e+00> : vector<8x8xf32>
    %119 = tpu.matmul %117, %118, %cst_69 {dimension_numbers = #tpu.dot_dimension_numbers<[1], [0], [0], [1], [0, 0, 1, 1], [], []>} : vector<8x8xbf16>, vector<8x8xbf16>, vector<8x8xf32> -> vector<8x8xf32>
    %c0_70 = arith.constant 0 : index
    %c16 = arith.constant 16 : index
    %120 = vector.load %arg10[%c0_70, %c16] : memref<8x32xf32, #tpu.memory_space<vmem>>, vector<8x8xf32>
    %121 = vector.broadcast %104 : vector<8x1xf32> to vector<8x8xf32>
    %122 = arith.mulf %121, %120 : vector<8x8xf32>
    %123 = arith.addf %122, %119 : vector<8x8xf32>
    %c0_71 = arith.constant 0 : index
    %c16_72 = arith.constant 16 : index
    %124 = vector.load %arg10[%c0_71, %c16_72] : memref<8x32xf32, #tpu.memory_space<vmem>>, vector<8x8xf32>
    tpu.vector_store %arg10[%c0_71, %c16_72], %123 {strides = array<i32>} : memref<8x32xf32, #tpu.memory_space<vmem>>, vector<8x8xf32>,
    %c2_73 = arith.constant 2 : index
    %c0_74 = arith.constant 0 : index
    %c0_75 = arith.constant 0 : index
    %125 = vector.load %arg8[%c2_73, %c0_74, %c0_75] : memref<4x8x1xf32, #tpu.memory_space<vmem>>, vector<1x8x1xf32>
    %126 = vector.shape_cast %125 : vector<1x8x1xf32> to vector<8x1xf32>
    %127 = vector.shape_cast %102 : vector<8x1xf32> to vector<1x8x1xf32>
    tpu.vector_store %arg8[%c2_73, %c0_74, %c0_75], %127 {strides = array<i32>} : memref<4x8x1xf32, #tpu.memory_space<vmem>>, vector<1x8x1xf32>,
    %128 = vector.extract_strided_slice %4 {offsets = [0, 24], sizes = [8, 8], strides = [1, 1]} : vector<8x32xbf16> to vector<8x8xbf16>
    %129 = vector.extract_strided_slice %6 {offsets = [0, 24], sizes = [8, 8], strides = [1, 1]} : vector<8x32xbf16> to vector<8x8xbf16>
    %cst_76 = arith.constant dense<0.000000e+00> : vector<8x8xf32>
    %130 = tpu.matmul %128, %129, %cst_76 {dimension_numbers = #tpu.dot_dimension_numbers<[1], [1], [0], [0], [0, 0, 1, 0], [], []>} : vector<8x8xbf16>, vector<8x8xbf16>, vector<8x8xf32> -> vector<8x8xf32>
    %cst_77 = arith.constant 0.353553385 : f32
    %131 = vector.broadcast %cst_77 : f32 to vector<8x8xf32>
    %132 = arith.mulf %130, %131 : vector<8x8xf32>
    %cst_78 = arith.constant 0.000000e+00 : f32
    %133 = vector.broadcast %cst_78 : f32 to vector<8x8xf32>
    %134 = arith.cmpf ogt, %10, %133 : vector<8x8xf32>
    %cst_79 = arith.constant -1.000000e+09 : f32
    %135 = vector.broadcast %cst_79 : f32 to vector<8x8xf32>
    %136 = arith.select %134, %132, %135 : vector<8x8xi1>, vector<8x8xf32>
    %c3 = arith.constant 3 : index
    %c0_80 = arith.constant 0 : index
    %c0_81 = arith.constant 0 : index
    %137 = vector.load %arg8[%c3, %c0_80, %c0_81] : memref<4x8x1xf32, #tpu.memory_space<vmem>>, vector<1x8x1xf32>
    %138 = vector.shape_cast %137 : vector<1x8x1xf32> to vector<8x1xf32>
    %cst_82 = arith.constant dense<0xFF800000> : vector<8xf32>
    %139 = vector.multi_reduction <maximumf>, %136, %cst_82 [1] : vector<8x8xf32> to vector<8xf32>
    %140 = vector.shape_cast %139 : vector<8xf32> to vector<8x1xf32>
    %141 = arith.maximumf %138, %140 : vector<8x1xf32>
    %142 = arith.subf %138, %141 : vector<8x1xf32>
    %143 = math.exp %142 : vector<8x1xf32>
    %144 = vector.broadcast %141 : vector<8x1xf32> to vector<8x8xf32>
    %145 = arith.subf %136, %144 : vector<8x8xf32>
    %146 = math.exp %145 : vector<8x8xf32>
    %c3_83 = arith.constant 3 : index
    %c0_84 = arith.constant 0 : index
    %c0_85 = arith.constant 0 : index
    %147 = vector.load %arg9[%c3_83, %c0_84, %c0_85] : memref<4x8x1xf32, #tpu.memory_space<vmem>>, vector<1x8x1xf32>
    %148 = vector.shape_cast %147 : vector<1x8x1xf32> to vector<8x1xf32>
    %149 = arith.mulf %143, %148 : vector<8x1xf32>
    %cst_86 = arith.constant dense<0.000000e+00> : vector<8xf32>
    %150 = vector.multi_reduction <add>, %146, %cst_86 [1] : vector<8x8xf32> to vector<8xf32>
    %151 = vector.shape_cast %150 : vector<8xf32> to vector<8x1xf32>
    %152 = arith.addf %149, %151 : vector<8x1xf32>
    %c3_87 = arith.constant 3 : index
    %c0_88 = arith.constant 0 : index
    %c0_89 = arith.constant 0 : index
    %153 = vector.load %arg9[%c3_87, %c0_88, %c0_89] : memref<4x8x1xf32, #tpu.memory_space<vmem>>, vector<1x8x1xf32>
    %154 = vector.shape_cast %153 : vector<1x8x1xf32> to vector<8x1xf32>
    %155 = vector.shape_cast %152 : vector<8x1xf32> to vector<1x8x1xf32>
    tpu.vector_store %arg9[%c3_87, %c0_88, %c0_89], %155 {strides = array<i32>} : memref<4x8x1xf32, #tpu.memory_space<vmem>>, vector<1x8x1xf32>,
    %156 = arith.truncf %146 : vector<8x8xf32> to vector<8x8xbf16>
    %157 = vector.extract_strided_slice %8 {offsets = [0, 24], sizes = [8, 8], strides = [1, 1]} : vector<8x32xbf16> to vector<8x8xbf16>
    %cst_90 = arith.constant dense<0.000000e+00> : vector<8x8xf32>
    %158 = tpu.matmul %156, %157, %cst_90 {dimension_numbers = #tpu.dot_dimension_numbers<[1], [0], [0], [1], [0, 0, 1, 1], [], []>} : vector<8x8xbf16>, vector<8x8xbf16>, vector<8x8xf32> -> vector<8x8xf32>
    %c0_91 = arith.constant 0 : index
    %c24 = arith.constant 24 : index
    %159 = vector.load %arg10[%c0_91, %c24] : memref<8x32xf32, #tpu.memory_space<vmem>>, vector<8x8xf32>
    %160 = vector.broadcast %143 : vector<8x1xf32> to vector<8x8xf32>
    %161 = arith.mulf %160, %159 : vector<8x8xf32>
    %162 = arith.addf %161, %158 : vector<8x8xf32>
    %c0_92 = arith.constant 0 : index
    %c24_93 = arith.constant 24 : index
    %163 = vector.load %arg10[%c0_92, %c24_93] : memref<8x32xf32, #tpu.memory_space<vmem>>, vector<8x8xf32>
    tpu.vector_store %arg10[%c0_92, %c24_93], %162 {strides = array<i32>} : memref<8x32xf32, #tpu.memory_space<vmem>>, vector<8x8xf32>,
    %c3_94 = arith.constant 3 : index
    %c0_95 = arith.constant 0 : index
    %c0_96 = arith.constant 0 : index
    %164 = vector.load %arg8[%c3_94, %c0_95, %c0_96] : memref<4x8x1xf32, #tpu.memory_space<vmem>>, vector<1x8x1xf32>
    %165 = vector.shape_cast %164 : vector<1x8x1xf32> to vector<8x1xf32>
    %166 = vector.shape_cast %141 : vector<8x1xf32> to vector<1x8x1xf32>
    tpu.vector_store %arg8[%c3_94, %c0_95, %c0_96], %166 {strides = array<i32>} : memref<4x8x1xf32, #tpu.memory_space<vmem>>, vector<1x8x1xf32>,
    %c0_i32_97 = arith.constant 0 : i32
    %167 = arith.cmpi eq, %arg2, %c0_i32_97 : i32
    %168 = arith.extui %167 : i1 to i32
    %c0_i32_98 = arith.constant 0 : i32
    %169 = arith.cmpi ne, %168, %c0_i32_98 : i32
    scf.if %169 {
      %c0_99 = arith.constant 0 : index
      %c0_100 = arith.constant 0 : index
      %c0_101 = arith.constant 0 : index
      %170 = vector.load %arg9[%c0_99, %c0_100, %c0_101] : memref<4x8x1xf32, #tpu.memory_space<vmem>>, vector<1x8x1xf32>
      %171 = vector.shape_cast %170 : vector<1x8x1xf32> to vector<8x1xf32>
      %172 = tpu.reciprocal %171 {approx = true} : vector<8x1xf32> -> vector<8x1xf32>
      %c0_102 = arith.constant 0 : index
      %c0_103 = arith.constant 0 : index
      %173 = vector.load %arg10[%c0_102, %c0_103] : memref<8x32xf32, #tpu.memory_space<vmem>>, vector<8x8xf32>
      %174 = vector.broadcast %172 : vector<8x1xf32> to vector<8x8xf32>
      %175 = arith.mulf %173, %174 : vector<8x8xf32>
      %c0_104 = arith.constant 0 : index
      %c0_105 = arith.constant 0 : index
      %176 = vector.load %arg10[%c0_104, %c0_105] : memref<8x32xf32, #tpu.memory_space<vmem>>, vector<8x8xf32>
      tpu.vector_store %arg10[%c0_104, %c0_105], %175 {strides = array<i32>} : memref<8x32xf32, #tpu.memory_space<vmem>>, vector<8x8xf32>,
      %c1_106 = arith.constant 1 : index
      %c0_107 = arith.constant 0 : index
      %c0_108 = arith.constant 0 : index
      %177 = vector.load %arg9[%c1_106, %c0_107, %c0_108] : memref<4x8x1xf32, #tpu.memory_space<vmem>>, vector<1x8x1xf32>
      %178 = vector.shape_cast %177 : vector<1x8x1xf32> to vector<8x1xf32>
      %179 = tpu.reciprocal %178 {approx = true} : vector<8x1xf32> -> vector<8x1xf32>
      %c0_109 = arith.constant 0 : index
      %c8_110 = arith.constant 8 : index
      %180 = vector.load %arg10[%c0_109, %c8_110] : memref<8x32xf32, #tpu.memory_space<vmem>>, vector<8x8xf32>
      %181 = vector.broadcast %179 : vector<8x1xf32> to vector<8x8xf32>
      %182 = arith.mulf %180, %181 : vector<8x8xf32>
      %c0_111 = arith.constant 0 : index
      %c8_112 = arith.constant 8 : index
      %183 = vector.load %arg10[%c0_111, %c8_112] : memref<8x32xf32, #tpu.memory_space<vmem>>, vector<8x8xf32>
      tpu.vector_store %arg10[%c0_111, %c8_112], %182 {strides = array<i32>} : memref<8x32xf32, #tpu.memory_space<vmem>>, vector<8x8xf32>,
      %c2_113 = arith.constant 2 : index
      %c0_114 = arith.constant 0 : index
      %c0_115 = arith.constant 0 : index
      %184 = vector.load %arg9[%c2_113, %c0_114, %c0_115] : memref<4x8x1xf32, #tpu.memory_space<vmem>>, vector<1x8x1xf32>
      %185 = vector.shape_cast %184 : vector<1x8x1xf32> to vector<8x1xf32>
      %186 = tpu.reciprocal %185 {approx = true} : vector<8x1xf32> -> vector<8x1xf32>
      %c0_116 = arith.constant 0 : index
      %c16_117 = arith.constant 16 : index
      %187 = vector.load %arg10[%c0_116, %c16_117] : memref<8x32xf32, #tpu.memory_space<vmem>>, vector<8x8xf32>
      %188 = vector.broadcast %186 : vector<8x1xf32> to vector<8x8xf32>
      %189 = arith.mulf %187, %188 : vector<8x8xf32>
      %c0_118 = arith.constant 0 : index
      %c16_119 = arith.constant 16 : index
      %190 = vector.load %arg10[%c0_118, %c16_119] : memref<8x32xf32, #tpu.memory_space<vmem>>, vector<8x8xf32>
      tpu.vector_store %arg10[%c0_118, %c16_119], %189 {strides = array<i32>} : memref<8x32xf32, #tpu.memory_space<vmem>>, vector<8x8xf32>,
      %c3_120 = arith.constant 3 : index
      %c0_121 = arith.constant 0 : index
      %c0_122 = arith.constant 0 : index
      %191 = vector.load %arg9[%c3_120, %c0_121, %c0_122] : memref<4x8x1xf32, #tpu.memory_space<vmem>>, vector<1x8x1xf32>
      %192 = vector.shape_cast %191 : vector<1x8x1xf32> to vector<8x1xf32>
      %193 = tpu.reciprocal %192 {approx = true} : vector<8x1xf32> -> vector<8x1xf32>
      %c0_123 = arith.constant 0 : index
      %c24_124 = arith.constant 24 : index
      %194 = vector.load %arg10[%c0_123, %c24_124] : memref<8x32xf32, #tpu.memory_space<vmem>>, vector<8x8xf32>
      %195 = vector.broadcast %193 : vector<8x1xf32> to vector<8x8xf32>
      %196 = arith.mulf %194, %195 : vector<8x8xf32>
      %c0_125 = arith.constant 0 : index
      %c24_126 = arith.constant 24 : index
      %197 = vector.load %arg10[%c0_125, %c24_126] : memref<8x32xf32, #tpu.memory_space<vmem>>, vector<8x8xf32>
      tpu.vector_store %arg10[%c0_125, %c24_126], %196 {strides = array<i32>} : memref<8x32xf32, #tpu.memory_space<vmem>>, vector<8x8xf32>,
      %c0_127 = arith.constant 0 : index
      %c0_128 = arith.constant 0 : index
      %198 = vector.load %arg10[%c0_127, %c0_128] : memref<8x32xf32, #tpu.memory_space<vmem>>, vector<8x32xf32>
      %199 = arith.truncf %198 : vector<8x32xf32> to vector<8x32xbf16>
      %c0_129 = arith.constant 0 : index
      %c0_130 = arith.constant 0 : index
      %c0_131 = arith.constant 0 : index
      %200 = vector.load %arg7[%c0_129, %c0_130, %c0_131] : memref<1x8x32xbf16, #tpu.memory_space<vmem>>, vector<1x8x32xbf16>
      %201 = vector.shape_cast %200 : vector<1x8x32xbf16> to vector<8x32xbf16>
      %202 = vector.shape_cast %199 : vector<8x32xbf16> to vector<1x8x32xbf16>
      tpu.vector_store %arg7[%c0_129, %c0_130, %c0_131], %202 {strides = array<i32>} : memref<1x8x32xbf16, #tpu.memory_space<vmem>>, vector<1x8x32xbf16>,
    } else {
    }
    return
  }
  func.func @transform_0(%arg0: i32, %arg1: i32, %arg2: i32) -> (i32, i32, i32) {
    %c0_i32 = arith.constant 0 : i32
    %c0_i32_0 = arith.constant 0 : i32
    return %arg0, %arg1, %c0_i32 : i32, i32, i32
  }
  func.func @transform_1(%arg0: i32, %arg1: i32, %arg2: i32) -> (i32, i32, i32) {
    %c0_i32 = arith.constant 0 : i32
    %c0_i32_0 = arith.constant 0 : i32
    return %arg0, %arg2, %c0_i32 : i32, i32, i32
  }
  func.func @transform_2(%arg0: i32, %arg1: i32, %arg2: i32) -> (i32, i32, i32) {
    %c0_i32 = arith.constant 0 : i32
    %c0_i32_0 = arith.constant 0 : i32
    return %arg0, %arg2, %c0_i32 : i32, i32, i32
  }
  func.func @transform_3(%arg0: i32, %arg1: i32, %arg2: i32) -> (i32, i32, i32) {
    %c0_i32 = arith.constant 0 : i32
    return %arg0, %arg1, %arg2 : i32, i32, i32
  }
  func.func @transform_4(%arg0: i32, %arg1: i32, %arg2: i32) -> (i32, i32, i32) {
    %c0_i32 = arith.constant 0 : i32
    %c0_i32_0 = arith.constant 0 : i32
    return %arg0, %arg1, %c0_i32 : i32, i32, i32
  }
}

module attributes {stable_mosaic.version = 11 : i64} {
  func.func @_ln_linear_kernel(%arg0: i32, %arg1: i32, %arg2: memref<16x32xf32, #tpu.memory_space<vmem>>, %arg3: memref<1x32xf32, #tpu.memory_space<vmem>>, %arg4: memref<1x32xf32, #tpu.memory_space<vmem>>, %arg5: memref<32x32xbf16, #tpu.memory_space<vmem>>, %arg6: memref<1x32xf32, #tpu.memory_space<vmem>>, %arg7: memref<16x32xbf16, #tpu.memory_space<vmem>>, %arg8: memref<16x32xbf16, #tpu.memory_space<vmem>>) attributes {dimension_semantics = [#tpu.dimension_semantics<parallel>, #tpu.dimension_semantics<arbitrary>], iteration_bounds = array<i64: 1, 1>, scalar_prefetch = 0 : i64, scratch_operands = 1 : i64, tpu.core_type = #tpu.core_type<tc>, window_params = [{transform_indices = @transform_0, window_bounds = array<i64: 16, 32>}, {pipeline_mode = #tpu.pipeline_mode<synchronous>, transform_indices = @transform_1, window_bounds = array<i64: 1, 32>}, {pipeline_mode = #tpu.pipeline_mode<synchronous>, transform_indices = @transform_2, window_bounds = array<i64: 1, 32>}, {transform_indices = @transform_3, window_bounds = array<i64: 32, 32>}, {transform_indices = @transform_4, window_bounds = array<i64: 1, 32>}, {transform_indices = @transform_5, window_bounds = array<i64: 16, 32>}]} {
    %c0_i32 = arith.constant 0 : i32
    %0 = arith.cmpi eq, %arg1, %c0_i32 : i32
    %1 = arith.extui %0 : i1 to i32
    %c0_i32_0 = arith.constant 0 : i32
    %2 = arith.cmpi ne, %1, %c0_i32_0 : i32
    scf.if %2 {
      %c0_8 = arith.constant 0 : index
      %c0_9 = arith.constant 0 : index
      %11 = vector.load %arg2[%c0_8, %c0_9] : memref<16x32xf32, #tpu.memory_space<vmem>>, vector<16x32xf32>
      %cst_10 = arith.constant dense<0.000000e+00> : vector<16xf32>
      %12 = vector.multi_reduction <add>, %11, %cst_10 [1] : vector<16x32xf32> to vector<16xf32>
      %13 = vector.shape_cast %12 : vector<16xf32> to vector<16x1xf32>
      %cst_11 = arith.constant 3.200000e+01 : f32
      %14 = vector.broadcast %cst_11 : f32 to vector<16x1xf32>
      %15 = arith.divf %13, %14 : vector<16x1xf32>
      %16 = vector.broadcast %15 : vector<16x1xf32> to vector<16x32xf32>
      %17 = arith.subf %11, %16 : vector<16x32xf32>
      %18 = arith.mulf %17, %17 : vector<16x32xf32>
      %cst_12 = arith.constant dense<0.000000e+00> : vector<16xf32>
      %19 = vector.multi_reduction <add>, %18, %cst_12 [1] : vector<16x32xf32> to vector<16xf32>
      %20 = vector.shape_cast %19 : vector<16xf32> to vector<16x1xf32>
      %cst_13 = arith.constant 3.200000e+01 : f32
      %21 = vector.broadcast %cst_13 : f32 to vector<16x1xf32>
      %22 = arith.divf %20, %21 : vector<16x1xf32>
      %23 = vector.broadcast %15 : vector<16x1xf32> to vector<16x32xf32>
      %24 = arith.subf %11, %23 : vector<16x32xf32>
      %cst_14 = arith.constant 9.99999997E-7 : f32
      %25 = vector.broadcast %cst_14 : f32 to vector<16x1xf32>
      %26 = arith.addf %22, %25 : vector<16x1xf32>
      %27 = math.rsqrt %26 : vector<16x1xf32>
      %28 = vector.broadcast %27 : vector<16x1xf32> to vector<16x32xf32>
      %29 = arith.mulf %24, %28 : vector<16x32xf32>
      %c0_15 = arith.constant 0 : index
      %c0_16 = arith.constant 0 : index
      %30 = vector.load %arg3[%c0_15, %c0_16] : memref<1x32xf32, #tpu.memory_space<vmem>>, vector<1x32xf32>
      %31 = vector.broadcast %30 : vector<1x32xf32> to vector<16x32xf32>
      %32 = arith.mulf %29, %31 : vector<16x32xf32>
      %c0_17 = arith.constant 0 : index
      %c0_18 = arith.constant 0 : index
      %33 = vector.load %arg4[%c0_17, %c0_18] : memref<1x32xf32, #tpu.memory_space<vmem>>, vector<1x32xf32>
      %34 = vector.broadcast %33 : vector<1x32xf32> to vector<16x32xf32>
      %35 = arith.addf %32, %34 : vector<16x32xf32>
      %36 = arith.truncf %35 : vector<16x32xf32> to vector<16x32xbf16>
      %c0_19 = arith.constant 0 : index
      %c0_20 = arith.constant 0 : index
      %37 = vector.load %arg8[%c0_19, %c0_20] : memref<16x32xbf16, #tpu.memory_space<vmem>>, vector<16x32xbf16>
      tpu.vector_store %arg8[%c0_19, %c0_20], %36 {strides = array<i32>} : memref<16x32xbf16, #tpu.memory_space<vmem>>, vector<16x32xbf16>,
    } else {
    }
    %c0 = arith.constant 0 : index
    %c0_1 = arith.constant 0 : index
    %3 = vector.load %arg8[%c0, %c0_1] : memref<16x32xbf16, #tpu.memory_space<vmem>>, vector<16x32xbf16>
    %c0_2 = arith.constant 0 : index
    %c0_3 = arith.constant 0 : index
    %4 = vector.load %arg5[%c0_2, %c0_3] : memref<32x32xbf16, #tpu.memory_space<vmem>>, vector<32x32xbf16>
    %cst = arith.constant dense<0.000000e+00> : vector<16x32xf32>
    %5 = tpu.matmul %3, %4, %cst {dimension_numbers = #tpu.dot_dimension_numbers<[1], [0], [0], [1], [0, 0, 1, 1], [], []>} : vector<16x32xbf16>, vector<32x32xbf16>, vector<16x32xf32> -> vector<16x32xf32>
    %c0_4 = arith.constant 0 : index
    %c0_5 = arith.constant 0 : index
    %6 = vector.load %arg6[%c0_4, %c0_5] : memref<1x32xf32, #tpu.memory_space<vmem>>, vector<1x32xf32>
    %7 = vector.broadcast %6 : vector<1x32xf32> to vector<16x32xf32>
    %8 = arith.addf %5, %7 : vector<16x32xf32>
    %9 = arith.truncf %8 : vector<16x32xf32> to vector<16x32xbf16>
    %c0_6 = arith.constant 0 : index
    %c0_7 = arith.constant 0 : index
    %10 = vector.load %arg7[%c0_6, %c0_7] : memref<16x32xbf16, #tpu.memory_space<vmem>>, vector<16x32xbf16>
    tpu.vector_store %arg7[%c0_6, %c0_7], %9 {strides = array<i32>} : memref<16x32xbf16, #tpu.memory_space<vmem>>, vector<16x32xbf16>,
    return
  }
  func.func @transform_0(%arg0: i32, %arg1: i32) -> (i32, i32) {
    %c0_i32 = arith.constant 0 : i32
    %c0_i32_0 = arith.constant 0 : i32
    return %arg0, %c0_i32 : i32, i32
  }
  func.func @transform_1(%arg0: i32, %arg1: i32) -> (i32, i32) {
    %c0_i32 = arith.constant 0 : i32
    %c0_i32_0 = arith.constant 0 : i32
    %c0_i32_1 = arith.constant 0 : i32
    return %c0_i32, %c0_i32_0 : i32, i32
  }
  func.func @transform_2(%arg0: i32, %arg1: i32) -> (i32, i32) {
    %c0_i32 = arith.constant 0 : i32
    %c0_i32_0 = arith.constant 0 : i32
    %c0_i32_1 = arith.constant 0 : i32
    return %c0_i32, %c0_i32_0 : i32, i32
  }
  func.func @transform_3(%arg0: i32, %arg1: i32) -> (i32, i32) {
    %c0_i32 = arith.constant 0 : i32
    %c0_i32_0 = arith.constant 0 : i32
    return %c0_i32, %arg1 : i32, i32
  }
  func.func @transform_4(%arg0: i32, %arg1: i32) -> (i32, i32) {
    %c0_i32 = arith.constant 0 : i32
    %c0_i32_0 = arith.constant 0 : i32
    return %c0_i32, %arg1 : i32, i32
  }
  func.func @transform_5(%arg0: i32, %arg1: i32) -> (i32, i32) {
    %c0_i32 = arith.constant 0 : i32
    return %arg0, %arg1 : i32, i32
  }
}

module attributes {stable_mosaic.version = 11 : i64} {
  func.func @_linear_kernel(%arg0: i32, %arg1: i32, %arg2: i32, %arg3: memref<16x32xf32, #tpu.memory_space<vmem>>, %arg4: memref<32x64xbf16, #tpu.memory_space<vmem>>, %arg5: memref<1x64xf32, #tpu.memory_space<vmem>>, %arg6: memref<16x64xbf16, #tpu.memory_space<vmem>>, %arg7: memref<16x64xf32, #tpu.memory_space<vmem>>) attributes {dimension_semantics = [#tpu.dimension_semantics<parallel>, #tpu.dimension_semantics<parallel>, #tpu.dimension_semantics<arbitrary>], iteration_bounds = array<i64: 1, 1, 1>, scalar_prefetch = 0 : i64, scratch_operands = 1 : i64, tpu.core_type = #tpu.core_type<tc>, window_params = [{transform_indices = @transform_0, window_bounds = array<i64: 16, 32>}, {transform_indices = @transform_1, window_bounds = array<i64: 32, 64>}, {transform_indices = @transform_2, window_bounds = array<i64: 1, 64>}, {transform_indices = @transform_3, window_bounds = array<i64: 16, 64>}]} {
    %c0_i32 = arith.constant 0 : i32
    %0 = arith.cmpi eq, %arg2, %c0_i32 : i32
    %1 = arith.extui %0 : i1 to i32
    %c0_i32_0 = arith.constant 0 : i32
    %2 = arith.cmpi ne, %1, %c0_i32_0 : i32
    scf.if %2 {
      %cst_10 = arith.constant 0.000000e+00 : f32
      %13 = vector.broadcast %cst_10 : f32 to vector<16x64xf32>
      %c0_11 = arith.constant 0 : index
      %c0_12 = arith.constant 0 : index
      %14 = vector.load %arg7[%c0_11, %c0_12] : memref<16x64xf32, #tpu.memory_space<vmem>>, vector<16x64xf32>
      tpu.vector_store %arg7[%c0_11, %c0_12], %13 {strides = array<i32>} : memref<16x64xf32, #tpu.memory_space<vmem>>, vector<16x64xf32>,
    } else {
    }
    %c0 = arith.constant 0 : index
    %c0_1 = arith.constant 0 : index
    %3 = vector.load %arg7[%c0, %c0_1] : memref<16x64xf32, #tpu.memory_space<vmem>>, vector<16x64xf32>
    %c0_2 = arith.constant 0 : index
    %c0_3 = arith.constant 0 : index
    %4 = vector.load %arg3[%c0_2, %c0_3] : memref<16x32xf32, #tpu.memory_space<vmem>>, vector<16x32xf32>
    %5 = arith.truncf %4 : vector<16x32xf32> to vector<16x32xbf16>
    %c0_4 = arith.constant 0 : index
    %c0_5 = arith.constant 0 : index
    %6 = vector.load %arg4[%c0_4, %c0_5] : memref<32x64xbf16, #tpu.memory_space<vmem>>, vector<32x64xbf16>
    %cst = arith.constant dense<0.000000e+00> : vector<16x64xf32>
    %7 = tpu.matmul %5, %6, %cst {dimension_numbers = #tpu.dot_dimension_numbers<[1], [0], [0], [1], [0, 0, 1, 1], [], []>} : vector<16x32xbf16>, vector<32x64xbf16>, vector<16x64xf32> -> vector<16x64xf32>
    %8 = arith.addf %3, %7 : vector<16x64xf32>
    %c0_6 = arith.constant 0 : index
    %c0_7 = arith.constant 0 : index
    %9 = vector.load %arg7[%c0_6, %c0_7] : memref<16x64xf32, #tpu.memory_space<vmem>>, vector<16x64xf32>
    tpu.vector_store %arg7[%c0_6, %c0_7], %8 {strides = array<i32>} : memref<16x64xf32, #tpu.memory_space<vmem>>, vector<16x64xf32>,
    %c0_i32_8 = arith.constant 0 : i32
    %10 = arith.cmpi eq, %arg2, %c0_i32_8 : i32
    %11 = arith.extui %10 : i1 to i32
    %c0_i32_9 = arith.constant 0 : i32
    %12 = arith.cmpi ne, %11, %c0_i32_9 : i32
    scf.if %12 {
      %c0_10 = arith.constant 0 : index
      %c0_11 = arith.constant 0 : index
      %13 = vector.load %arg7[%c0_10, %c0_11] : memref<16x64xf32, #tpu.memory_space<vmem>>, vector<16x64xf32>
      %c0_12 = arith.constant 0 : index
      %c0_13 = arith.constant 0 : index
      %14 = vector.load %arg5[%c0_12, %c0_13] : memref<1x64xf32, #tpu.memory_space<vmem>>, vector<1x64xf32>
      %15 = vector.broadcast %14 : vector<1x64xf32> to vector<16x64xf32>
      %16 = arith.addf %13, %15 : vector<16x64xf32>
      %17 = arith.truncf %16 : vector<16x64xf32> to vector<16x64xbf16>
      %c0_14 = arith.constant 0 : index
      %c0_15 = arith.constant 0 : index
      %18 = vector.load %arg6[%c0_14, %c0_15] : memref<16x64xbf16, #tpu.memory_space<vmem>>, vector<16x64xbf16>
      tpu.vector_store %arg6[%c0_14, %c0_15], %17 {strides = array<i32>} : memref<16x64xbf16, #tpu.memory_space<vmem>>, vector<16x64xbf16>,
    } else {
    }
    return
  }
  func.func @transform_0(%arg0: i32, %arg1: i32, %arg2: i32) -> (i32, i32) {
    %c0_i32 = arith.constant 0 : i32
    return %arg0, %arg2 : i32, i32
  }
  func.func @transform_1(%arg0: i32, %arg1: i32, %arg2: i32) -> (i32, i32) {
    %c0_i32 = arith.constant 0 : i32
    return %arg2, %arg1 : i32, i32
  }
  func.func @transform_2(%arg0: i32, %arg1: i32, %arg2: i32) -> (i32, i32) {
    %c0_i32 = arith.constant 0 : i32
    %c0_i32_0 = arith.constant 0 : i32
    return %c0_i32, %arg1 : i32, i32
  }
  func.func @transform_3(%arg0: i32, %arg1: i32, %arg2: i32) -> (i32, i32) {
    %c0_i32 = arith.constant 0 : i32
    return %arg0, %arg1 : i32, i32
  }
}

module attributes {stable_mosaic.version = 11 : i64} {
  func.func @_ln_linear_kernel(%arg0: i32, %arg1: i32, %arg2: memref<16x32xf32, #tpu.memory_space<vmem>>, %arg3: memref<1x32xf32, #tpu.memory_space<vmem>>, %arg4: memref<1x32xf32, #tpu.memory_space<vmem>>, %arg5: memref<32x64xbf16, #tpu.memory_space<vmem>>, %arg6: memref<1x64xf32, #tpu.memory_space<vmem>>, %arg7: memref<16x64xbf16, #tpu.memory_space<vmem>>, %arg8: memref<16x32xbf16, #tpu.memory_space<vmem>>) attributes {dimension_semantics = [#tpu.dimension_semantics<parallel>, #tpu.dimension_semantics<arbitrary>], iteration_bounds = array<i64: 1, 1>, scalar_prefetch = 0 : i64, scratch_operands = 1 : i64, tpu.core_type = #tpu.core_type<tc>, window_params = [{transform_indices = @transform_0, window_bounds = array<i64: 16, 32>}, {pipeline_mode = #tpu.pipeline_mode<synchronous>, transform_indices = @transform_1, window_bounds = array<i64: 1, 32>}, {pipeline_mode = #tpu.pipeline_mode<synchronous>, transform_indices = @transform_2, window_bounds = array<i64: 1, 32>}, {transform_indices = @transform_3, window_bounds = array<i64: 32, 64>}, {transform_indices = @transform_4, window_bounds = array<i64: 1, 64>}, {transform_indices = @transform_5, window_bounds = array<i64: 16, 64>}]} {
    %c0_i32 = arith.constant 0 : i32
    %0 = arith.cmpi eq, %arg1, %c0_i32 : i32
    %1 = arith.extui %0 : i1 to i32
    %c0_i32_0 = arith.constant 0 : i32
    %2 = arith.cmpi ne, %1, %c0_i32_0 : i32
    scf.if %2 {
      %c0_9 = arith.constant 0 : index
      %c0_10 = arith.constant 0 : index
      %13 = vector.load %arg2[%c0_9, %c0_10] : memref<16x32xf32, #tpu.memory_space<vmem>>, vector<16x32xf32>
      %cst_11 = arith.constant dense<0.000000e+00> : vector<16xf32>
      %14 = vector.multi_reduction <add>, %13, %cst_11 [1] : vector<16x32xf32> to vector<16xf32>
      %15 = vector.shape_cast %14 : vector<16xf32> to vector<16x1xf32>
      %cst_12 = arith.constant 3.200000e+01 : f32
      %16 = vector.broadcast %cst_12 : f32 to vector<16x1xf32>
      %17 = arith.divf %15, %16 : vector<16x1xf32>
      %18 = vector.broadcast %17 : vector<16x1xf32> to vector<16x32xf32>
      %19 = arith.subf %13, %18 : vector<16x32xf32>
      %20 = arith.mulf %19, %19 : vector<16x32xf32>
      %cst_13 = arith.constant dense<0.000000e+00> : vector<16xf32>
      %21 = vector.multi_reduction <add>, %20, %cst_13 [1] : vector<16x32xf32> to vector<16xf32>
      %22 = vector.shape_cast %21 : vector<16xf32> to vector<16x1xf32>
      %cst_14 = arith.constant 3.200000e+01 : f32
      %23 = vector.broadcast %cst_14 : f32 to vector<16x1xf32>
      %24 = arith.divf %22, %23 : vector<16x1xf32>
      %25 = vector.broadcast %17 : vector<16x1xf32> to vector<16x32xf32>
      %26 = arith.subf %13, %25 : vector<16x32xf32>
      %cst_15 = arith.constant 9.99999997E-7 : f32
      %27 = vector.broadcast %cst_15 : f32 to vector<16x1xf32>
      %28 = arith.addf %24, %27 : vector<16x1xf32>
      %29 = math.rsqrt %28 : vector<16x1xf32>
      %30 = vector.broadcast %29 : vector<16x1xf32> to vector<16x32xf32>
      %31 = arith.mulf %26, %30 : vector<16x32xf32>
      %c0_16 = arith.constant 0 : index
      %c0_17 = arith.constant 0 : index
      %32 = vector.load %arg3[%c0_16, %c0_17] : memref<1x32xf32, #tpu.memory_space<vmem>>, vector<1x32xf32>
      %33 = vector.broadcast %32 : vector<1x32xf32> to vector<16x32xf32>
      %34 = arith.mulf %31, %33 : vector<16x32xf32>
      %c0_18 = arith.constant 0 : index
      %c0_19 = arith.constant 0 : index
      %35 = vector.load %arg4[%c0_18, %c0_19] : memref<1x32xf32, #tpu.memory_space<vmem>>, vector<1x32xf32>
      %36 = vector.broadcast %35 : vector<1x32xf32> to vector<16x32xf32>
      %37 = arith.addf %34, %36 : vector<16x32xf32>
      %38 = arith.truncf %37 : vector<16x32xf32> to vector<16x32xbf16>
      %c0_20 = arith.constant 0 : index
      %c0_21 = arith.constant 0 : index
      %39 = vector.load %arg8[%c0_20, %c0_21] : memref<16x32xbf16, #tpu.memory_space<vmem>>, vector<16x32xbf16>
      tpu.vector_store %arg8[%c0_20, %c0_21], %38 {strides = array<i32>} : memref<16x32xbf16, #tpu.memory_space<vmem>>, vector<16x32xbf16>,
    } else {
    }
    %c0 = arith.constant 0 : index
    %c0_1 = arith.constant 0 : index
    %3 = vector.load %arg8[%c0, %c0_1] : memref<16x32xbf16, #tpu.memory_space<vmem>>, vector<16x32xbf16>
    %c0_2 = arith.constant 0 : index
    %c0_3 = arith.constant 0 : index
    %4 = vector.load %arg5[%c0_2, %c0_3] : memref<32x64xbf16, #tpu.memory_space<vmem>>, vector<32x64xbf16>
    %cst = arith.constant dense<0.000000e+00> : vector<16x64xf32>
    %5 = tpu.matmul %3, %4, %cst {dimension_numbers = #tpu.dot_dimension_numbers<[1], [0], [0], [1], [0, 0, 1, 1], [], []>} : vector<16x32xbf16>, vector<32x64xbf16>, vector<16x64xf32> -> vector<16x64xf32>
    %c0_4 = arith.constant 0 : index
    %c0_5 = arith.constant 0 : index
    %6 = vector.load %arg6[%c0_4, %c0_5] : memref<1x64xf32, #tpu.memory_space<vmem>>, vector<1x64xf32>
    %7 = vector.broadcast %6 : vector<1x64xf32> to vector<16x64xf32>
    %8 = arith.addf %5, %7 : vector<16x64xf32>
    %cst_6 = arith.constant 0.000000e+00 : f32
    %9 = vector.broadcast %cst_6 : f32 to vector<16x64xf32>
    %10 = arith.maximumf %8, %9 : vector<16x64xf32>
    %11 = arith.truncf %10 : vector<16x64xf32> to vector<16x64xbf16>
    %c0_7 = arith.constant 0 : index
    %c0_8 = arith.constant 0 : index
    %12 = vector.load %arg7[%c0_7, %c0_8] : memref<16x64xbf16, #tpu.memory_space<vmem>>, vector<16x64xbf16>
    tpu.vector_store %arg7[%c0_7, %c0_8], %11 {strides = array<i32>} : memref<16x64xbf16, #tpu.memory_space<vmem>>, vector<16x64xbf16>,
    return
  }
  func.func @transform_0(%arg0: i32, %arg1: i32) -> (i32, i32) {
    %c0_i32 = arith.constant 0 : i32
    %c0_i32_0 = arith.constant 0 : i32
    return %arg0, %c0_i32 : i32, i32
  }
  func.func @transform_1(%arg0: i32, %arg1: i32) -> (i32, i32) {
    %c0_i32 = arith.constant 0 : i32
    %c0_i32_0 = arith.constant 0 : i32
    %c0_i32_1 = arith.constant 0 : i32
    return %c0_i32, %c0_i32_0 : i32, i32
  }
  func.func @transform_2(%arg0: i32, %arg1: i32) -> (i32, i32) {
    %c0_i32 = arith.constant 0 : i32
    %c0_i32_0 = arith.constant 0 : i32
    %c0_i32_1 = arith.constant 0 : i32
    return %c0_i32, %c0_i32_0 : i32, i32
  }
  func.func @transform_3(%arg0: i32, %arg1: i32) -> (i32, i32) {
    %c0_i32 = arith.constant 0 : i32
    %c0_i32_0 = arith.constant 0 : i32
    return %c0_i32, %arg1 : i32, i32
  }
  func.func @transform_4(%arg0: i32, %arg1: i32) -> (i32, i32) {
    %c0_i32 = arith.constant 0 : i32
    %c0_i32_0 = arith.constant 0 : i32
    return %c0_i32, %arg1 : i32, i32
  }
  func.func @transform_5(%arg0: i32, %arg1: i32) -> (i32, i32) {
    %c0_i32 = arith.constant 0 : i32
    return %arg0, %arg1 : i32, i32
  }
}

module attributes {stable_mosaic.version = 11 : i64} {
  func.func @_flash_mha_kernel(%arg0: i32, %arg1: i32, %arg2: i32, %arg3: memref<1x8x32xbf16, #tpu.memory_space<vmem>>, %arg4: memref<1x8x32xbf16, #tpu.memory_space<vmem>>, %arg5: memref<1x8x32xbf16, #tpu.memory_space<vmem>>, %arg6: memref<1x1x8xf32, #tpu.memory_space<vmem>>, %arg7: memref<1x8x32xbf16, #tpu.memory_space<vmem>>, %arg8: memref<4x8x1xf32, #tpu.memory_space<vmem>>, %arg9: memref<4x8x1xf32, #tpu.memory_space<vmem>>, %arg10: memref<8x32xf32, #tpu.memory_space<vmem>>) attributes {dimension_semantics = [#tpu.dimension_semantics<parallel>, #tpu.dimension_semantics<parallel>, #tpu.dimension_semantics<arbitrary>], iteration_bounds = array<i64: 2, 1, 1>, scalar_prefetch = 0 : i64, scratch_operands = 3 : i64, tpu.core_type = #tpu.core_type<tc>, window_params = [{transform_indices = @transform_0, window_bounds = array<i64: 1, 8, 32>}, {transform_indices = @transform_1, window_bounds = array<i64: 1, 8, 32>}, {transform_indices = @transform_2, window_bounds = array<i64: 1, 8, 32>}, {transform_indices = @transform_3, window_bounds = array<i64: 1, 1, 8>}, {transform_indices = @transform_4, window_bounds = array<i64: 1, 8, 32>}]} {
    %c0_i32 = arith.constant 0 : i32
    %0 = arith.cmpi eq, %arg2, %c0_i32 : i32
    %1 = arith.extui %0 : i1 to i32
    %c0_i32_0 = arith.constant 0 : i32
    %2 = arith.cmpi ne, %1, %c0_i32_0 : i32
    scf.if %2 {
      %cst_99 = arith.constant -1.000000e+30 : f32
      %178 = vector.broadcast %cst_99 : f32 to vector<4x8x1xf32>
      %c0_100 = arith.constant 0 : index
      %c0_101 = arith.constant 0 : index
      %c0_102 = arith.constant 0 : index
      %179 = vector.load %arg8[%c0_100, %c0_101, %c0_102] : memref<4x8x1xf32, #tpu.memory_space<vmem>>, vector<4x8x1xf32>
      tpu.vector_store %arg8[%c0_100, %c0_101, %c0_102], %178 {strides = array<i32>} : memref<4x8x1xf32, #tpu.memory_space<vmem>>, vector<4x8x1xf32>,
      %cst_103 = arith.constant 0.000000e+00 : f32
      %180 = vector.broadcast %cst_103 : f32 to vector<4x8x1xf32>
      %c0_104 = arith.constant 0 : index
      %c0_105 = arith.constant 0 : index
      %c0_106 = arith.constant 0 : index
      %181 = vector.load %arg9[%c0_104, %c0_105, %c0_106] : memref<4x8x1xf32, #tpu.memory_space<vmem>>, vector<4x8x1xf32>
      tpu.vector_store %arg9[%c0_104, %c0_105, %c0_106], %180 {strides = array<i32>} : memref<4x8x1xf32, #tpu.memory_space<vmem>>, vector<4x8x1xf32>,
      %cst_107 = arith.constant 0.000000e+00 : f32
      %182 = vector.broadcast %cst_107 : f32 to vector<8x32xf32>
      %c0_108 = arith.constant 0 : index
      %c0_109 = arith.constant 0 : index
      %183 = vector.load %arg10[%c0_108, %c0_109] : memref<8x32xf32, #tpu.memory_space<vmem>>, vector<8x32xf32>
      tpu.vector_store %arg10[%c0_108, %c0_109], %182 {strides = array<i32>} : memref<8x32xf32, #tpu.memory_space<vmem>>, vector<8x32xf32>,
    } else {
    }
    %c0 = arith.constant 0 : index
    %c0_1 = arith.constant 0 : index
    %c0_2 = arith.constant 0 : index
    %3 = vector.load %arg3[%c0, %c0_1, %c0_2] : memref<1x8x32xbf16, #tpu.memory_space<vmem>>, vector<1x8x32xbf16>
    %4 = vector.shape_cast %3 : vector<1x8x32xbf16> to vector<8x32xbf16>
    %c0_3 = arith.constant 0 : index
    %c0_4 = arith.constant 0 : index
    %c0_5 = arith.constant 0 : index
    %5 = vector.load %arg4[%c0_3, %c0_4, %c0_5] : memref<1x8x32xbf16, #tpu.memory_space<vmem>>, vector<1x8x32xbf16>
    %6 = vector.shape_cast %5 : vector<1x8x32xbf16> to vector<8x32xbf16>
    %c0_6 = arith.constant 0 : index
    %c0_7 = arith.constant 0 : index
    %c0_8 = arith.constant 0 : index
    %7 = vector.load %arg5[%c0_6, %c0_7, %c0_8] : memref<1x8x32xbf16, #tpu.memory_space<vmem>>, vector<1x8x32xbf16>
    %8 = vector.shape_cast %7 : vector<1x8x32xbf16> to vector<8x32xbf16>
    %c0_9 = arith.constant 0 : index
    %c0_10 = arith.constant 0 : index
    %c0_11 = arith.constant 0 : index
    %9 = vector.load %arg6[%c0_9, %c0_10, %c0_11] : memref<1x1x8xf32, #tpu.memory_space<vmem>>, vector<1x1x8xf32>
    %10 = vector.shape_cast %9 : vector<1x1x8xf32> to vector<1x8xf32>
    %11 = vector.extract_strided_slice %4 {offsets = [0, 0], sizes = [8, 8], strides = [1, 1]} : vector<8x32xbf16> to vector<8x8xbf16>
    %12 = vector.extract_strided_slice %6 {offsets = [0, 0], sizes = [8, 8], strides = [1, 1]} : vector<8x32xbf16> to vector<8x8xbf16>
    %cst = arith.constant dense<0.000000e+00> : vector<8x8xf32>
    %13 = tpu.matmul %11, %12, %cst {dimension_numbers = #tpu.dot_dimension_numbers<[1], [1], [0], [0], [0, 0, 1, 0], [], []>} : vector<8x8xbf16>, vector<8x8xbf16>, vector<8x8xf32> -> vector<8x8xf32>
    %cst_12 = arith.constant 0.353553385 : f32
    %14 = vector.broadcast %cst_12 : f32 to vector<8x8xf32>
    %15 = arith.mulf %13, %14 : vector<8x8xf32>
    %cst_13 = arith.constant 0.000000e+00 : f32
    %16 = vector.broadcast %cst_13 : f32 to vector<1x8xf32>
    %17 = arith.cmpf ogt, %10, %16 : vector<1x8xf32>
    %cst_14 = arith.constant -1.000000e+09 : f32
    %18 = vector.shape_cast %17 : vector<1x8xi1> to vector<1x8xi1>
    %19 = vector.broadcast %18 : vector<1x8xi1> to vector<8x8xi1>
    %20 = vector.broadcast %cst_14 : f32 to vector<8x8xf32>
    %21 = arith.select %19, %15, %20 : vector<8x8xi1>, vector<8x8xf32>
    %c0_15 = arith.constant 0 : index
    %c0_16 = arith.constant 0 : index
    %c0_17 = arith.constant 0 : index
    %22 = vector.load %arg8[%c0_15, %c0_16, %c0_17] : memref<4x8x1xf32, #tpu.memory_space<vmem>>, vector<1x8x1xf32>
    %23 = vector.shape_cast %22 : vector<1x8x1xf32> to vector<8x1xf32>
    %cst_18 = arith.constant dense<0xFF800000> : vector<8xf32>
    %24 = vector.multi_reduction <maximumf>, %21, %cst_18 [1] : vector<8x8xf32> to vector<8xf32>
    %25 = vector.shape_cast %24 : vector<8xf32> to vector<8x1xf32>
    %26 = arith.maximumf %23, %25 : vector<8x1xf32>
    %27 = arith.subf %23, %26 : vector<8x1xf32>
    %28 = math.exp %27 : vector<8x1xf32>
    %29 = vector.broadcast %26 : vector<8x1xf32> to vector<8x8xf32>
    %30 = arith.subf %21, %29 : vector<8x8xf32>
    %31 = math.exp %30 : vector<8x8xf32>
    %c0_19 = arith.constant 0 : index
    %c0_20 = arith.constant 0 : index
    %c0_21 = arith.constant 0 : index
    %32 = vector.load %arg9[%c0_19, %c0_20, %c0_21] : memref<4x8x1xf32, #tpu.memory_space<vmem>>, vector<1x8x1xf32>
    %33 = vector.shape_cast %32 : vector<1x8x1xf32> to vector<8x1xf32>
    %34 = arith.mulf %28, %33 : vector<8x1xf32>
    %cst_22 = arith.constant dense<0.000000e+00> : vector<8xf32>
    %35 = vector.multi_reduction <add>, %31, %cst_22 [1] : vector<8x8xf32> to vector<8xf32>
    %36 = vector.shape_cast %35 : vector<8xf32> to vector<8x1xf32>
    %37 = arith.addf %34, %36 : vector<8x1xf32>
    %c0_23 = arith.constant 0 : index
    %c0_24 = arith.constant 0 : index
    %c0_25 = arith.constant 0 : index
    %38 = vector.load %arg9[%c0_23, %c0_24, %c0_25] : memref<4x8x1xf32, #tpu.memory_space<vmem>>, vector<1x8x1xf32>
    %39 = vector.shape_cast %38 : vector<1x8x1xf32> to vector<8x1xf32>
    %40 = vector.shape_cast %37 : vector<8x1xf32> to vector<1x8x1xf32>
    tpu.vector_store %arg9[%c0_23, %c0_24, %c0_25], %40 {strides = array<i32>} : memref<4x8x1xf32, #tpu.memory_space<vmem>>, vector<1x8x1xf32>,
    %41 = arith.truncf %31 : vector<8x8xf32> to vector<8x8xbf16>
    %42 = vector.extract_strided_slice %8 {offsets = [0, 0], sizes = [8, 8], strides = [1, 1]} : vector<8x32xbf16> to vector<8x8xbf16>
    %cst_26 = arith.constant dense<0.000000e+00> : vector<8x8xf32>
    %43 = tpu.matmul %41, %42, %cst_26 {dimension_numbers = #tpu.dot_dimension_numbers<[1], [0], [0], [1], [0, 0, 1, 1], [], []>} : vector<8x8xbf16>, vector<8x8xbf16>, vector<8x8xf32> -> vector<8x8xf32>
    %c0_27 = arith.constant 0 : index
    %c0_28 = arith.constant 0 : index
    %44 = vector.load %arg10[%c0_27, %c0_28] : memref<8x32xf32, #tpu.memory_space<vmem>>, vector<8x8xf32>
    %45 = vector.broadcast %28 : vector<8x1xf32> to vector<8x8xf32>
    %46 = arith.mulf %45, %44 : vector<8x8xf32>
    %47 = arith.addf %46, %43 : vector<8x8xf32>
    %c0_29 = arith.constant 0 : index
    %c0_30 = arith.constant 0 : index
    %48 = vector.load %arg10[%c0_29, %c0_30] : memref<8x32xf32, #tpu.memory_space<vmem>>, vector<8x8xf32>
    tpu.vector_store %arg10[%c0_29, %c0_30], %47 {strides = array<i32>} : memref<8x32xf32, #tpu.memory_space<vmem>>, vector<8x8xf32>,
    %c0_31 = arith.constant 0 : index
    %c0_32 = arith.constant 0 : index
    %c0_33 = arith.constant 0 : index
    %49 = vector.load %arg8[%c0_31, %c0_32, %c0_33] : memref<4x8x1xf32, #tpu.memory_space<vmem>>, vector<1x8x1xf32>
    %50 = vector.shape_cast %49 : vector<1x8x1xf32> to vector<8x1xf32>
    %51 = vector.shape_cast %26 : vector<8x1xf32> to vector<1x8x1xf32>
    tpu.vector_store %arg8[%c0_31, %c0_32, %c0_33], %51 {strides = array<i32>} : memref<4x8x1xf32, #tpu.memory_space<vmem>>, vector<1x8x1xf32>,
    %52 = vector.extract_strided_slice %4 {offsets = [0, 8], sizes = [8, 8], strides = [1, 1]} : vector<8x32xbf16> to vector<8x8xbf16>
    %53 = vector.extract_strided_slice %6 {offsets = [0, 8], sizes = [8, 8], strides = [1, 1]} : vector<8x32xbf16> to vector<8x8xbf16>
    %cst_34 = arith.constant dense<0.000000e+00> : vector<8x8xf32>
    %54 = tpu.matmul %52, %53, %cst_34 {dimension_numbers = #tpu.dot_dimension_numbers<[1], [1], [0], [0], [0, 0, 1, 0], [], []>} : vector<8x8xbf16>, vector<8x8xbf16>, vector<8x8xf32> -> vector<8x8xf32>
    %cst_35 = arith.constant 0.353553385 : f32
    %55 = vector.broadcast %cst_35 : f32 to vector<8x8xf32>
    %56 = arith.mulf %54, %55 : vector<8x8xf32>
    %cst_36 = arith.constant 0.000000e+00 : f32
    %57 = vector.broadcast %cst_36 : f32 to vector<1x8xf32>
    %58 = arith.cmpf ogt, %10, %57 : vector<1x8xf32>
    %cst_37 = arith.constant -1.000000e+09 : f32
    %59 = vector.shape_cast %58 : vector<1x8xi1> to vector<1x8xi1>
    %60 = vector.broadcast %59 : vector<1x8xi1> to vector<8x8xi1>
    %61 = vector.broadcast %cst_37 : f32 to vector<8x8xf32>
    %62 = arith.select %60, %56, %61 : vector<8x8xi1>, vector<8x8xf32>
    %c1 = arith.constant 1 : index
    %c0_38 = arith.constant 0 : index
    %c0_39 = arith.constant 0 : index
    %63 = vector.load %arg8[%c1, %c0_38, %c0_39] : memref<4x8x1xf32, #tpu.memory_space<vmem>>, vector<1x8x1xf32>
    %64 = vector.shape_cast %63 : vector<1x8x1xf32> to vector<8x1xf32>
    %cst_40 = arith.constant dense<0xFF800000> : vector<8xf32>
    %65 = vector.multi_reduction <maximumf>, %62, %cst_40 [1] : vector<8x8xf32> to vector<8xf32>
    %66 = vector.shape_cast %65 : vector<8xf32> to vector<8x1xf32>
    %67 = arith.maximumf %64, %66 : vector<8x1xf32>
    %68 = arith.subf %64, %67 : vector<8x1xf32>
    %69 = math.exp %68 : vector<8x1xf32>
    %70 = vector.broadcast %67 : vector<8x1xf32> to vector<8x8xf32>
    %71 = arith.subf %62, %70 : vector<8x8xf32>
    %72 = math.exp %71 : vector<8x8xf32>
    %c1_41 = arith.constant 1 : index
    %c0_42 = arith.constant 0 : index
    %c0_43 = arith.constant 0 : index
    %73 = vector.load %arg9[%c1_41, %c0_42, %c0_43] : memref<4x8x1xf32, #tpu.memory_space<vmem>>, vector<1x8x1xf32>
    %74 = vector.shape_cast %73 : vector<1x8x1xf32> to vector<8x1xf32>
    %75 = arith.mulf %69, %74 : vector<8x1xf32>
    %cst_44 = arith.constant dense<0.000000e+00> : vector<8xf32>
    %76 = vector.multi_reduction <add>, %72, %cst_44 [1] : vector<8x8xf32> to vector<8xf32>
    %77 = vector.shape_cast %76 : vector<8xf32> to vector<8x1xf32>
    %78 = arith.addf %75, %77 : vector<8x1xf32>
    %c1_45 = arith.constant 1 : index
    %c0_46 = arith.constant 0 : index
    %c0_47 = arith.constant 0 : index
    %79 = vector.load %arg9[%c1_45, %c0_46, %c0_47] : memref<4x8x1xf32, #tpu.memory_space<vmem>>, vector<1x8x1xf32>
    %80 = vector.shape_cast %79 : vector<1x8x1xf32> to vector<8x1xf32>
    %81 = vector.shape_cast %78 : vector<8x1xf32> to vector<1x8x1xf32>
    tpu.vector_store %arg9[%c1_45, %c0_46, %c0_47], %81 {strides = array<i32>} : memref<4x8x1xf32, #tpu.memory_space<vmem>>, vector<1x8x1xf32>,
    %82 = arith.truncf %72 : vector<8x8xf32> to vector<8x8xbf16>
    %83 = vector.extract_strided_slice %8 {offsets = [0, 8], sizes = [8, 8], strides = [1, 1]} : vector<8x32xbf16> to vector<8x8xbf16>
    %cst_48 = arith.constant dense<0.000000e+00> : vector<8x8xf32>
    %84 = tpu.matmul %82, %83, %cst_48 {dimension_numbers = #tpu.dot_dimension_numbers<[1], [0], [0], [1], [0, 0, 1, 1], [], []>} : vector<8x8xbf16>, vector<8x8xbf16>, vector<8x8xf32> -> vector<8x8xf32>
    %c0_49 = arith.constant 0 : index
    %c8 = arith.constant 8 : index
    %85 = vector.load %arg10[%c0_49, %c8] : memref<8x32xf32, #tpu.memory_space<vmem>>, vector<8x8xf32>
    %86 = vector.broadcast %69 : vector<8x1xf32> to vector<8x8xf32>
    %87 = arith.mulf %86, %85 : vector<8x8xf32>
    %88 = arith.addf %87, %84 : vector<8x8xf32>
    %c0_50 = arith.constant 0 : index
    %c8_51 = arith.constant 8 : index
    %89 = vector.load %arg10[%c0_50, %c8_51] : memref<8x32xf32, #tpu.memory_space<vmem>>, vector<8x8xf32>
    tpu.vector_store %arg10[%c0_50, %c8_51], %88 {strides = array<i32>} : memref<8x32xf32, #tpu.memory_space<vmem>>, vector<8x8xf32>,
    %c1_52 = arith.constant 1 : index
    %c0_53 = arith.constant 0 : index
    %c0_54 = arith.constant 0 : index
    %90 = vector.load %arg8[%c1_52, %c0_53, %c0_54] : memref<4x8x1xf32, #tpu.memory_space<vmem>>, vector<1x8x1xf32>
    %91 = vector.shape_cast %90 : vector<1x8x1xf32> to vector<8x1xf32>
    %92 = vector.shape_cast %67 : vector<8x1xf32> to vector<1x8x1xf32>
    tpu.vector_store %arg8[%c1_52, %c0_53, %c0_54], %92 {strides = array<i32>} : memref<4x8x1xf32, #tpu.memory_space<vmem>>, vector<1x8x1xf32>,
    %93 = vector.extract_strided_slice %4 {offsets = [0, 16], sizes = [8, 8], strides = [1, 1]} : vector<8x32xbf16> to vector<8x8xbf16>
    %94 = vector.extract_strided_slice %6 {offsets = [0, 16], sizes = [8, 8], strides = [1, 1]} : vector<8x32xbf16> to vector<8x8xbf16>
    %cst_55 = arith.constant dense<0.000000e+00> : vector<8x8xf32>
    %95 = tpu.matmul %93, %94, %cst_55 {dimension_numbers = #tpu.dot_dimension_numbers<[1], [1], [0], [0], [0, 0, 1, 0], [], []>} : vector<8x8xbf16>, vector<8x8xbf16>, vector<8x8xf32> -> vector<8x8xf32>
    %cst_56 = arith.constant 0.353553385 : f32
    %96 = vector.broadcast %cst_56 : f32 to vector<8x8xf32>
    %97 = arith.mulf %95, %96 : vector<8x8xf32>
    %cst_57 = arith.constant 0.000000e+00 : f32
    %98 = vector.broadcast %cst_57 : f32 to vector<1x8xf32>
    %99 = arith.cmpf ogt, %10, %98 : vector<1x8xf32>
    %cst_58 = arith.constant -1.000000e+09 : f32
    %100 = vector.shape_cast %99 : vector<1x8xi1> to vector<1x8xi1>
    %101 = vector.broadcast %100 : vector<1x8xi1> to vector<8x8xi1>
    %102 = vector.broadcast %cst_58 : f32 to vector<8x8xf32>
    %103 = arith.select %101, %97, %102 : vector<8x8xi1>, vector<8x8xf32>
    %c2 = arith.constant 2 : index
    %c0_59 = arith.constant 0 : index
    %c0_60 = arith.constant 0 : index
    %104 = vector.load %arg8[%c2, %c0_59, %c0_60] : memref<4x8x1xf32, #tpu.memory_space<vmem>>, vector<1x8x1xf32>
    %105 = vector.shape_cast %104 : vector<1x8x1xf32> to vector<8x1xf32>
    %cst_61 = arith.constant dense<0xFF800000> : vector<8xf32>
    %106 = vector.multi_reduction <maximumf>, %103, %cst_61 [1] : vector<8x8xf32> to vector<8xf32>
    %107 = vector.shape_cast %106 : vector<8xf32> to vector<8x1xf32>
    %108 = arith.maximumf %105, %107 : vector<8x1xf32>
    %109 = arith.subf %105, %108 : vector<8x1xf32>
    %110 = math.exp %109 : vector<8x1xf32>
    %111 = vector.broadcast %108 : vector<8x1xf32> to vector<8x8xf32>
    %112 = arith.subf %103, %111 : vector<8x8xf32>
    %113 = math.exp %112 : vector<8x8xf32>
    %c2_62 = arith.constant 2 : index
    %c0_63 = arith.constant 0 : index
    %c0_64 = arith.constant 0 : index
    %114 = vector.load %arg9[%c2_62, %c0_63, %c0_64] : memref<4x8x1xf32, #tpu.memory_space<vmem>>, vector<1x8x1xf32>
    %115 = vector.shape_cast %114 : vector<1x8x1xf32> to vector<8x1xf32>
    %116 = arith.mulf %110, %115 : vector<8x1xf32>
    %cst_65 = arith.constant dense<0.000000e+00> : vector<8xf32>
    %117 = vector.multi_reduction <add>, %113, %cst_65 [1] : vector<8x8xf32> to vector<8xf32>
    %118 = vector.shape_cast %117 : vector<8xf32> to vector<8x1xf32>
    %119 = arith.addf %116, %118 : vector<8x1xf32>
    %c2_66 = arith.constant 2 : index
    %c0_67 = arith.constant 0 : index
    %c0_68 = arith.constant 0 : index
    %120 = vector.load %arg9[%c2_66, %c0_67, %c0_68] : memref<4x8x1xf32, #tpu.memory_space<vmem>>, vector<1x8x1xf32>
    %121 = vector.shape_cast %120 : vector<1x8x1xf32> to vector<8x1xf32>
    %122 = vector.shape_cast %119 : vector<8x1xf32> to vector<1x8x1xf32>
    tpu.vector_store %arg9[%c2_66, %c0_67, %c0_68], %122 {strides = array<i32>} : memref<4x8x1xf32, #tpu.memory_space<vmem>>, vector<1x8x1xf32>,
    %123 = arith.truncf %113 : vector<8x8xf32> to vector<8x8xbf16>
    %124 = vector.extract_strided_slice %8 {offsets = [0, 16], sizes = [8, 8], strides = [1, 1]} : vector<8x32xbf16> to vector<8x8xbf16>
    %cst_69 = arith.constant dense<0.000000e+00> : vector<8x8xf32>
    %125 = tpu.matmul %123, %124, %cst_69 {dimension_numbers = #tpu.dot_dimension_numbers<[1], [0], [0], [1], [0, 0, 1, 1], [], []>} : vector<8x8xbf16>, vector<8x8xbf16>, vector<8x8xf32> -> vector<8x8xf32>
    %c0_70 = arith.constant 0 : index
    %c16 = arith.constant 16 : index
    %126 = vector.load %arg10[%c0_70, %c16] : memref<8x32xf32, #tpu.memory_space<vmem>>, vector<8x8xf32>
    %127 = vector.broadcast %110 : vector<8x1xf32> to vector<8x8xf32>
    %128 = arith.mulf %127, %126 : vector<8x8xf32>
    %129 = arith.addf %128, %125 : vector<8x8xf32>
    %c0_71 = arith.constant 0 : index
    %c16_72 = arith.constant 16 : index
    %130 = vector.load %arg10[%c0_71, %c16_72] : memref<8x32xf32, #tpu.memory_space<vmem>>, vector<8x8xf32>
    tpu.vector_store %arg10[%c0_71, %c16_72], %129 {strides = array<i32>} : memref<8x32xf32, #tpu.memory_space<vmem>>, vector<8x8xf32>,
    %c2_73 = arith.constant 2 : index
    %c0_74 = arith.constant 0 : index
    %c0_75 = arith.constant 0 : index
    %131 = vector.load %arg8[%c2_73, %c0_74, %c0_75] : memref<4x8x1xf32, #tpu.memory_space<vmem>>, vector<1x8x1xf32>
    %132 = vector.shape_cast %131 : vector<1x8x1xf32> to vector<8x1xf32>
    %133 = vector.shape_cast %108 : vector<8x1xf32> to vector<1x8x1xf32>
    tpu.vector_store %arg8[%c2_73, %c0_74, %c0_75], %133 {strides = array<i32>} : memref<4x8x1xf32, #tpu.memory_space<vmem>>, vector<1x8x1xf32>,
    %134 = vector.extract_strided_slice %4 {offsets = [0, 24], sizes = [8, 8], strides = [1, 1]} : vector<8x32xbf16> to vector<8x8xbf16>
    %135 = vector.extract_strided_slice %6 {offsets = [0, 24], sizes = [8, 8], strides = [1, 1]} : vector<8x32xbf16> to vector<8x8xbf16>
    %cst_76 = arith.constant dense<0.000000e+00> : vector<8x8xf32>
    %136 = tpu.matmul %134, %135, %cst_76 {dimension_numbers = #tpu.dot_dimension_numbers<[1], [1], [0], [0], [0, 0, 1, 0], [], []>} : vector<8x8xbf16>, vector<8x8xbf16>, vector<8x8xf32> -> vector<8x8xf32>
    %cst_77 = arith.constant 0.353553385 : f32
    %137 = vector.broadcast %cst_77 : f32 to vector<8x8xf32>
    %138 = arith.mulf %136, %137 : vector<8x8xf32>
    %cst_78 = arith.constant 0.000000e+00 : f32
    %139 = vector.broadcast %cst_78 : f32 to vector<1x8xf32>
    %140 = arith.cmpf ogt, %10, %139 : vector<1x8xf32>
    %cst_79 = arith.constant -1.000000e+09 : f32
    %141 = vector.shape_cast %140 : vector<1x8xi1> to vector<1x8xi1>
    %142 = vector.broadcast %141 : vector<1x8xi1> to vector<8x8xi1>
    %143 = vector.broadcast %cst_79 : f32 to vector<8x8xf32>
    %144 = arith.select %142, %138, %143 : vector<8x8xi1>, vector<8x8xf32>
    %c3 = arith.constant 3 : index
    %c0_80 = arith.constant 0 : index
    %c0_81 = arith.constant 0 : index
    %145 = vector.load %arg8[%c3, %c0_80, %c0_81] : memref<4x8x1xf32, #tpu.memory_space<vmem>>, vector<1x8x1xf32>
    %146 = vector.shape_cast %145 : vector<1x8x1xf32> to vector<8x1xf32>
    %cst_82 = arith.constant dense<0xFF800000> : vector<8xf32>
    %147 = vector.multi_reduction <maximumf>, %144, %cst_82 [1] : vector<8x8xf32> to vector<8xf32>
    %148 = vector.shape_cast %147 : vector<8xf32> to vector<8x1xf32>
    %149 = arith.maximumf %146, %148 : vector<8x1xf32>
    %150 = arith.subf %146, %149 : vector<8x1xf32>
    %151 = math.exp %150 : vector<8x1xf32>
    %152 = vector.broadcast %149 : vector<8x1xf32> to vector<8x8xf32>
    %153 = arith.subf %144, %152 : vector<8x8xf32>
    %154 = math.exp %153 : vector<8x8xf32>
    %c3_83 = arith.constant 3 : index
    %c0_84 = arith.constant 0 : index
    %c0_85 = arith.constant 0 : index
    %155 = vector.load %arg9[%c3_83, %c0_84, %c0_85] : memref<4x8x1xf32, #tpu.memory_space<vmem>>, vector<1x8x1xf32>
    %156 = vector.shape_cast %155 : vector<1x8x1xf32> to vector<8x1xf32>
    %157 = arith.mulf %151, %156 : vector<8x1xf32>
    %cst_86 = arith.constant dense<0.000000e+00> : vector<8xf32>
    %158 = vector.multi_reduction <add>, %154, %cst_86 [1] : vector<8x8xf32> to vector<8xf32>
    %159 = vector.shape_cast %158 : vector<8xf32> to vector<8x1xf32>
    %160 = arith.addf %157, %159 : vector<8x1xf32>
    %c3_87 = arith.constant 3 : index
    %c0_88 = arith.constant 0 : index
    %c0_89 = arith.constant 0 : index
    %161 = vector.load %arg9[%c3_87, %c0_88, %c0_89] : memref<4x8x1xf32, #tpu.memory_space<vmem>>, vector<1x8x1xf32>
    %162 = vector.shape_cast %161 : vector<1x8x1xf32> to vector<8x1xf32>
    %163 = vector.shape_cast %160 : vector<8x1xf32> to vector<1x8x1xf32>
    tpu.vector_store %arg9[%c3_87, %c0_88, %c0_89], %163 {strides = array<i32>} : memref<4x8x1xf32, #tpu.memory_space<vmem>>, vector<1x8x1xf32>,
    %164 = arith.truncf %154 : vector<8x8xf32> to vector<8x8xbf16>
    %165 = vector.extract_strided_slice %8 {offsets = [0, 24], sizes = [8, 8], strides = [1, 1]} : vector<8x32xbf16> to vector<8x8xbf16>
    %cst_90 = arith.constant dense<0.000000e+00> : vector<8x8xf32>
    %166 = tpu.matmul %164, %165, %cst_90 {dimension_numbers = #tpu.dot_dimension_numbers<[1], [0], [0], [1], [0, 0, 1, 1], [], []>} : vector<8x8xbf16>, vector<8x8xbf16>, vector<8x8xf32> -> vector<8x8xf32>
    %c0_91 = arith.constant 0 : index
    %c24 = arith.constant 24 : index
    %167 = vector.load %arg10[%c0_91, %c24] : memref<8x32xf32, #tpu.memory_space<vmem>>, vector<8x8xf32>
    %168 = vector.broadcast %151 : vector<8x1xf32> to vector<8x8xf32>
    %169 = arith.mulf %168, %167 : vector<8x8xf32>
    %170 = arith.addf %169, %166 : vector<8x8xf32>
    %c0_92 = arith.constant 0 : index
    %c24_93 = arith.constant 24 : index
    %171 = vector.load %arg10[%c0_92, %c24_93] : memref<8x32xf32, #tpu.memory_space<vmem>>, vector<8x8xf32>
    tpu.vector_store %arg10[%c0_92, %c24_93], %170 {strides = array<i32>} : memref<8x32xf32, #tpu.memory_space<vmem>>, vector<8x8xf32>,
    %c3_94 = arith.constant 3 : index
    %c0_95 = arith.constant 0 : index
    %c0_96 = arith.constant 0 : index
    %172 = vector.load %arg8[%c3_94, %c0_95, %c0_96] : memref<4x8x1xf32, #tpu.memory_space<vmem>>, vector<1x8x1xf32>
    %173 = vector.shape_cast %172 : vector<1x8x1xf32> to vector<8x1xf32>
    %174 = vector.shape_cast %149 : vector<8x1xf32> to vector<1x8x1xf32>
    tpu.vector_store %arg8[%c3_94, %c0_95, %c0_96], %174 {strides = array<i32>} : memref<4x8x1xf32, #tpu.memory_space<vmem>>, vector<1x8x1xf32>,
    %c0_i32_97 = arith.constant 0 : i32
    %175 = arith.cmpi eq, %arg2, %c0_i32_97 : i32
    %176 = arith.extui %175 : i1 to i32
    %c0_i32_98 = arith.constant 0 : i32
    %177 = arith.cmpi ne, %176, %c0_i32_98 : i32
    scf.if %177 {
      %c0_99 = arith.constant 0 : index
      %c0_100 = arith.constant 0 : index
      %c0_101 = arith.constant 0 : index
      %178 = vector.load %arg9[%c0_99, %c0_100, %c0_101] : memref<4x8x1xf32, #tpu.memory_space<vmem>>, vector<1x8x1xf32>
      %179 = vector.shape_cast %178 : vector<1x8x1xf32> to vector<8x1xf32>
      %180 = tpu.reciprocal %179 {approx = true} : vector<8x1xf32> -> vector<8x1xf32>
      %c0_102 = arith.constant 0 : index
      %c0_103 = arith.constant 0 : index
      %181 = vector.load %arg10[%c0_102, %c0_103] : memref<8x32xf32, #tpu.memory_space<vmem>>, vector<8x8xf32>
      %182 = vector.broadcast %180 : vector<8x1xf32> to vector<8x8xf32>
      %183 = arith.mulf %181, %182 : vector<8x8xf32>
      %c0_104 = arith.constant 0 : index
      %c0_105 = arith.constant 0 : index
      %184 = vector.load %arg10[%c0_104, %c0_105] : memref<8x32xf32, #tpu.memory_space<vmem>>, vector<8x8xf32>
      tpu.vector_store %arg10[%c0_104, %c0_105], %183 {strides = array<i32>} : memref<8x32xf32, #tpu.memory_space<vmem>>, vector<8x8xf32>,
      %c1_106 = arith.constant 1 : index
      %c0_107 = arith.constant 0 : index
      %c0_108 = arith.constant 0 : index
      %185 = vector.load %arg9[%c1_106, %c0_107, %c0_108] : memref<4x8x1xf32, #tpu.memory_space<vmem>>, vector<1x8x1xf32>
      %186 = vector.shape_cast %185 : vector<1x8x1xf32> to vector<8x1xf32>
      %187 = tpu.reciprocal %186 {approx = true} : vector<8x1xf32> -> vector<8x1xf32>
      %c0_109 = arith.constant 0 : index
      %c8_110 = arith.constant 8 : index
      %188 = vector.load %arg10[%c0_109, %c8_110] : memref<8x32xf32, #tpu.memory_space<vmem>>, vector<8x8xf32>
      %189 = vector.broadcast %187 : vector<8x1xf32> to vector<8x8xf32>
      %190 = arith.mulf %188, %189 : vector<8x8xf32>
      %c0_111 = arith.constant 0 : index
      %c8_112 = arith.constant 8 : index
      %191 = vector.load %arg10[%c0_111, %c8_112] : memref<8x32xf32, #tpu.memory_space<vmem>>, vector<8x8xf32>
      tpu.vector_store %arg10[%c0_111, %c8_112], %190 {strides = array<i32>} : memref<8x32xf32, #tpu.memory_space<vmem>>, vector<8x8xf32>,
      %c2_113 = arith.constant 2 : index
      %c0_114 = arith.constant 0 : index
      %c0_115 = arith.constant 0 : index
      %192 = vector.load %arg9[%c2_113, %c0_114, %c0_115] : memref<4x8x1xf32, #tpu.memory_space<vmem>>, vector<1x8x1xf32>
      %193 = vector.shape_cast %192 : vector<1x8x1xf32> to vector<8x1xf32>
      %194 = tpu.reciprocal %193 {approx = true} : vector<8x1xf32> -> vector<8x1xf32>
      %c0_116 = arith.constant 0 : index
      %c16_117 = arith.constant 16 : index
      %195 = vector.load %arg10[%c0_116, %c16_117] : memref<8x32xf32, #tpu.memory_space<vmem>>, vector<8x8xf32>
      %196 = vector.broadcast %194 : vector<8x1xf32> to vector<8x8xf32>
      %197 = arith.mulf %195, %196 : vector<8x8xf32>
      %c0_118 = arith.constant 0 : index
      %c16_119 = arith.constant 16 : index
      %198 = vector.load %arg10[%c0_118, %c16_119] : memref<8x32xf32, #tpu.memory_space<vmem>>, vector<8x8xf32>
      tpu.vector_store %arg10[%c0_118, %c16_119], %197 {strides = array<i32>} : memref<8x32xf32, #tpu.memory_space<vmem>>, vector<8x8xf32>,
      %c3_120 = arith.constant 3 : index
      %c0_121 = arith.constant 0 : index
      %c0_122 = arith.constant 0 : index
      %199 = vector.load %arg9[%c3_120, %c0_121, %c0_122] : memref<4x8x1xf32, #tpu.memory_space<vmem>>, vector<1x8x1xf32>
      %200 = vector.shape_cast %199 : vector<1x8x1xf32> to vector<8x1xf32>
      %201 = tpu.reciprocal %200 {approx = true} : vector<8x1xf32> -> vector<8x1xf32>
      %c0_123 = arith.constant 0 : index
      %c24_124 = arith.constant 24 : index
      %202 = vector.load %arg10[%c0_123, %c24_124] : memref<8x32xf32, #tpu.memory_space<vmem>>, vector<8x8xf32>
      %203 = vector.broadcast %201 : vector<8x1xf32> to vector<8x8xf32>
      %204 = arith.mulf %202, %203 : vector<8x8xf32>
      %c0_125 = arith.constant 0 : index
      %c24_126 = arith.constant 24 : index
      %205 = vector.load %arg10[%c0_125, %c24_126] : memref<8x32xf32, #tpu.memory_space<vmem>>, vector<8x8xf32>
      tpu.vector_store %arg10[%c0_125, %c24_126], %204 {strides = array<i32>} : memref<8x32xf32, #tpu.memory_space<vmem>>, vector<8x8xf32>,
      %c0_127 = arith.constant 0 : index
      %c0_128 = arith.constant 0 : index
      %206 = vector.load %arg10[%c0_127, %c0_128] : memref<8x32xf32, #tpu.memory_space<vmem>>, vector<8x32xf32>
      %207 = arith.truncf %206 : vector<8x32xf32> to vector<8x32xbf16>
      %c0_129 = arith.constant 0 : index
      %c0_130 = arith.constant 0 : index
      %c0_131 = arith.constant 0 : index
      %208 = vector.load %arg7[%c0_129, %c0_130, %c0_131] : memref<1x8x32xbf16, #tpu.memory_space<vmem>>, vector<1x8x32xbf16>
      %209 = vector.shape_cast %208 : vector<1x8x32xbf16> to vector<8x32xbf16>
      %210 = vector.shape_cast %207 : vector<8x32xbf16> to vector<1x8x32xbf16>
      tpu.vector_store %arg7[%c0_129, %c0_130, %c0_131], %210 {strides = array<i32>} : memref<1x8x32xbf16, #tpu.memory_space<vmem>>, vector<1x8x32xbf16>,
    } else {
    }
    return
  }
  func.func @transform_0(%arg0: i32, %arg1: i32, %arg2: i32) -> (i32, i32, i32) {
    %c0_i32 = arith.constant 0 : i32
    %c0_i32_0 = arith.constant 0 : i32
    return %arg0, %arg1, %c0_i32 : i32, i32, i32
  }
  func.func @transform_1(%arg0: i32, %arg1: i32, %arg2: i32) -> (i32, i32, i32) {
    %c0_i32 = arith.constant 0 : i32
    %c0_i32_0 = arith.constant 0 : i32
    return %arg0, %arg2, %c0_i32 : i32, i32, i32
  }
  func.func @transform_2(%arg0: i32, %arg1: i32, %arg2: i32) -> (i32, i32, i32) {
    %c0_i32 = arith.constant 0 : i32
    %c0_i32_0 = arith.constant 0 : i32
    return %arg0, %arg2, %c0_i32 : i32, i32, i32
  }
  func.func @transform_3(%arg0: i32, %arg1: i32, %arg2: i32) -> (i32, i32, i32) {
    %c0_i32 = arith.constant 0 : i32
    %c0_i32_0 = arith.constant 0 : i32
    return %arg0, %c0_i32, %arg2 : i32, i32, i32
  }
  func.func @transform_4(%arg0: i32, %arg1: i32, %arg2: i32) -> (i32, i32, i32) {
    %c0_i32 = arith.constant 0 : i32
    %c0_i32_0 = arith.constant 0 : i32
    return %arg0, %arg1, %c0_i32 : i32, i32, i32
  }
}

module attributes {stable_mosaic.version = 11 : i64} {
  func.func @_linear_kernel(%arg0: i32, %arg1: i32, %arg2: i32, %arg3: memref<16x64xbf16, #tpu.memory_space<vmem>>, %arg4: memref<64x32xbf16, #tpu.memory_space<vmem>>, %arg5: memref<1x32xf32, #tpu.memory_space<vmem>>, %arg6: memref<16x32xf32, #tpu.memory_space<vmem>>, %arg7: memref<16x32xf32, #tpu.memory_space<vmem>>, %arg8: memref<16x32xf32, #tpu.memory_space<vmem>>) attributes {dimension_semantics = [#tpu.dimension_semantics<parallel>, #tpu.dimension_semantics<parallel>, #tpu.dimension_semantics<arbitrary>], iteration_bounds = array<i64: 1, 1, 1>, scalar_prefetch = 0 : i64, scratch_operands = 1 : i64, tpu.core_type = #tpu.core_type<tc>, window_params = [{transform_indices = @transform_0, window_bounds = array<i64: 16, 64>}, {transform_indices = @transform_1, window_bounds = array<i64: 64, 32>}, {transform_indices = @transform_2, window_bounds = array<i64: 1, 32>}, {transform_indices = @transform_3, window_bounds = array<i64: 16, 32>}, {transform_indices = @transform_4, window_bounds = array<i64: 16, 32>}]} {
    %c0_i32 = arith.constant 0 : i32
    %0 = arith.cmpi eq, %arg2, %c0_i32 : i32
    %1 = arith.extui %0 : i1 to i32
    %c0_i32_0 = arith.constant 0 : i32
    %2 = arith.cmpi ne, %1, %c0_i32_0 : i32
    scf.if %2 {
      %cst_10 = arith.constant 0.000000e+00 : f32
      %12 = vector.broadcast %cst_10 : f32 to vector<16x32xf32>
      %c0_11 = arith.constant 0 : index
      %c0_12 = arith.constant 0 : index
      %13 = vector.load %arg8[%c0_11, %c0_12] : memref<16x32xf32, #tpu.memory_space<vmem>>, vector<16x32xf32>
      tpu.vector_store %arg8[%c0_11, %c0_12], %12 {strides = array<i32>} : memref<16x32xf32, #tpu.memory_space<vmem>>, vector<16x32xf32>,
    } else {
    }
    %c0 = arith.constant 0 : index
    %c0_1 = arith.constant 0 : index
    %3 = vector.load %arg8[%c0, %c0_1] : memref<16x32xf32, #tpu.memory_space<vmem>>, vector<16x32xf32>
    %c0_2 = arith.constant 0 : index
    %c0_3 = arith.constant 0 : index
    %4 = vector.load %arg3[%c0_2, %c0_3] : memref<16x64xbf16, #tpu.memory_space<vmem>>, vector<16x64xbf16>
    %c0_4 = arith.constant 0 : index
    %c0_5 = arith.constant 0 : index
    %5 = vector.load %arg4[%c0_4, %c0_5] : memref<64x32xbf16, #tpu.memory_space<vmem>>, vector<64x32xbf16>
    %cst = arith.constant dense<0.000000e+00> : vector<16x32xf32>
    %6 = tpu.matmul %4, %5, %cst {dimension_numbers = #tpu.dot_dimension_numbers<[1], [0], [0], [1], [0, 0, 1, 1], [], []>} : vector<16x64xbf16>, vector<64x32xbf16>, vector<16x32xf32> -> vector<16x32xf32>
    %7 = arith.addf %3, %6 : vector<16x32xf32>
    %c0_6 = arith.constant 0 : index
    %c0_7 = arith.constant 0 : index
    %8 = vector.load %arg8[%c0_6, %c0_7] : memref<16x32xf32, #tpu.memory_space<vmem>>, vector<16x32xf32>
    tpu.vector_store %arg8[%c0_6, %c0_7], %7 {strides = array<i32>} : memref<16x32xf32, #tpu.memory_space<vmem>>, vector<16x32xf32>,
    %c0_i32_8 = arith.constant 0 : i32
    %9 = arith.cmpi eq, %arg2, %c0_i32_8 : i32
    %10 = arith.extui %9 : i1 to i32
    %c0_i32_9 = arith.constant 0 : i32
    %11 = arith.cmpi ne, %10, %c0_i32_9 : i32
    scf.if %11 {
      %c0_10 = arith.constant 0 : index
      %c0_11 = arith.constant 0 : index
      %12 = vector.load %arg8[%c0_10, %c0_11] : memref<16x32xf32, #tpu.memory_space<vmem>>, vector<16x32xf32>
      %c0_12 = arith.constant 0 : index
      %c0_13 = arith.constant 0 : index
      %13 = vector.load %arg5[%c0_12, %c0_13] : memref<1x32xf32, #tpu.memory_space<vmem>>, vector<1x32xf32>
      %14 = vector.broadcast %13 : vector<1x32xf32> to vector<16x32xf32>
      %15 = arith.addf %12, %14 : vector<16x32xf32>
      %c0_14 = arith.constant 0 : index
      %c0_15 = arith.constant 0 : index
      %16 = vector.load %arg6[%c0_14, %c0_15] : memref<16x32xf32, #tpu.memory_space<vmem>>, vector<16x32xf32>
      %17 = arith.addf %15, %16 : vector<16x32xf32>
      %c0_16 = arith.constant 0 : index
      %c0_17 = arith.constant 0 : index
      %18 = vector.load %arg7[%c0_16, %c0_17] : memref<16x32xf32, #tpu.memory_space<vmem>>, vector<16x32xf32>
      tpu.vector_store %arg7[%c0_16, %c0_17], %17 {strides = array<i32>} : memref<16x32xf32, #tpu.memory_space<vmem>>, vector<16x32xf32>,
    } else {
    }
    return
  }
  func.func @transform_0(%arg0: i32, %arg1: i32, %arg2: i32) -> (i32, i32) {
    %c0_i32 = arith.constant 0 : i32
    return %arg0, %arg2 : i32, i32
  }
  func.func @transform_1(%arg0: i32, %arg1: i32, %arg2: i32) -> (i32, i32) {
    %c0_i32 = arith.constant 0 : i32
    return %arg2, %arg1 : i32, i32
  }
  func.func @transform_2(%arg0: i32, %arg1: i32, %arg2: i32) -> (i32, i32) {
    %c0_i32 = arith.constant 0 : i32
    %c0_i32_0 = arith.constant 0 : i32
    return %c0_i32, %arg1 : i32, i32
  }
  func.func @transform_3(%arg0: i32, %arg1: i32, %arg2: i32) -> (i32, i32) {
    %c0_i32 = arith.constant 0 : i32
    return %arg0, %arg1 : i32, i32
  }
  func.func @transform_4(%arg0: i32, %arg1: i32, %arg2: i32) -> (i32, i32) {
    %c0_i32 = arith.constant 0 : i32
    return %arg0, %arg1 : i32, i32
  }
}

module attributes {stable_mosaic.version = 11 : i64} {
  func.func @_ln_linear_kernel(%arg0: i32, %arg1: i32, %arg2: memref<16x32xf32, #tpu.memory_space<vmem>>, %arg3: memref<1x32xf32, #tpu.memory_space<vmem>>, %arg4: memref<1x32xf32, #tpu.memory_space<vmem>>, %arg5: memref<32x16xbf16, #tpu.memory_space<vmem>>, %arg6: memref<1x16xf32, #tpu.memory_space<vmem>>, %arg7: memref<16x16xf32, #tpu.memory_space<vmem>>, %arg8: memref<16x32xbf16, #tpu.memory_space<vmem>>) attributes {dimension_semantics = [#tpu.dimension_semantics<parallel>, #tpu.dimension_semantics<arbitrary>], iteration_bounds = array<i64: 1, 1>, scalar_prefetch = 0 : i64, scratch_operands = 1 : i64, tpu.core_type = #tpu.core_type<tc>, window_params = [{transform_indices = @transform_0, window_bounds = array<i64: 16, 32>}, {pipeline_mode = #tpu.pipeline_mode<synchronous>, transform_indices = @transform_1, window_bounds = array<i64: 1, 32>}, {pipeline_mode = #tpu.pipeline_mode<synchronous>, transform_indices = @transform_2, window_bounds = array<i64: 1, 32>}, {transform_indices = @transform_3, window_bounds = array<i64: 32, 16>}, {transform_indices = @transform_4, window_bounds = array<i64: 1, 16>}, {transform_indices = @transform_5, window_bounds = array<i64: 16, 16>}]} {
    %c0_i32 = arith.constant 0 : i32
    %0 = arith.cmpi eq, %arg1, %c0_i32 : i32
    %1 = arith.extui %0 : i1 to i32
    %c0_i32_0 = arith.constant 0 : i32
    %2 = arith.cmpi ne, %1, %c0_i32_0 : i32
    scf.if %2 {
      %c0_8 = arith.constant 0 : index
      %c0_9 = arith.constant 0 : index
      %10 = vector.load %arg2[%c0_8, %c0_9] : memref<16x32xf32, #tpu.memory_space<vmem>>, vector<16x32xf32>
      %cst_10 = arith.constant dense<0.000000e+00> : vector<16xf32>
      %11 = vector.multi_reduction <add>, %10, %cst_10 [1] : vector<16x32xf32> to vector<16xf32>
      %12 = vector.shape_cast %11 : vector<16xf32> to vector<16x1xf32>
      %cst_11 = arith.constant 3.200000e+01 : f32
      %13 = vector.broadcast %cst_11 : f32 to vector<16x1xf32>
      %14 = arith.divf %12, %13 : vector<16x1xf32>
      %15 = vector.broadcast %14 : vector<16x1xf32> to vector<16x32xf32>
      %16 = arith.subf %10, %15 : vector<16x32xf32>
      %17 = arith.mulf %16, %16 : vector<16x32xf32>
      %cst_12 = arith.constant dense<0.000000e+00> : vector<16xf32>
      %18 = vector.multi_reduction <add>, %17, %cst_12 [1] : vector<16x32xf32> to vector<16xf32>
      %19 = vector.shape_cast %18 : vector<16xf32> to vector<16x1xf32>
      %cst_13 = arith.constant 3.200000e+01 : f32
      %20 = vector.broadcast %cst_13 : f32 to vector<16x1xf32>
      %21 = arith.divf %19, %20 : vector<16x1xf32>
      %22 = vector.broadcast %14 : vector<16x1xf32> to vector<16x32xf32>
      %23 = arith.subf %10, %22 : vector<16x32xf32>
      %cst_14 = arith.constant 9.99999997E-7 : f32
      %24 = vector.broadcast %cst_14 : f32 to vector<16x1xf32>
      %25 = arith.addf %21, %24 : vector<16x1xf32>
      %26 = math.rsqrt %25 : vector<16x1xf32>
      %27 = vector.broadcast %26 : vector<16x1xf32> to vector<16x32xf32>
      %28 = arith.mulf %23, %27 : vector<16x32xf32>
      %c0_15 = arith.constant 0 : index
      %c0_16 = arith.constant 0 : index
      %29 = vector.load %arg3[%c0_15, %c0_16] : memref<1x32xf32, #tpu.memory_space<vmem>>, vector<1x32xf32>
      %30 = vector.broadcast %29 : vector<1x32xf32> to vector<16x32xf32>
      %31 = arith.mulf %28, %30 : vector<16x32xf32>
      %c0_17 = arith.constant 0 : index
      %c0_18 = arith.constant 0 : index
      %32 = vector.load %arg4[%c0_17, %c0_18] : memref<1x32xf32, #tpu.memory_space<vmem>>, vector<1x32xf32>
      %33 = vector.broadcast %32 : vector<1x32xf32> to vector<16x32xf32>
      %34 = arith.addf %31, %33 : vector<16x32xf32>
      %35 = arith.truncf %34 : vector<16x32xf32> to vector<16x32xbf16>
      %c0_19 = arith.constant 0 : index
      %c0_20 = arith.constant 0 : index
      %36 = vector.load %arg8[%c0_19, %c0_20] : memref<16x32xbf16, #tpu.memory_space<vmem>>, vector<16x32xbf16>
      tpu.vector_store %arg8[%c0_19, %c0_20], %35 {strides = array<i32>} : memref<16x32xbf16, #tpu.memory_space<vmem>>, vector<16x32xbf16>,
    } else {
    }
    %c0 = arith.constant 0 : index
    %c0_1 = arith.constant 0 : index
    %3 = vector.load %arg8[%c0, %c0_1] : memref<16x32xbf16, #tpu.memory_space<vmem>>, vector<16x32xbf16>
    %c0_2 = arith.constant 0 : index
    %c0_3 = arith.constant 0 : index
    %4 = vector.load %arg5[%c0_2, %c0_3] : memref<32x16xbf16, #tpu.memory_space<vmem>>, vector<32x16xbf16>
    %cst = arith.constant dense<0.000000e+00> : vector<16x16xf32>
    %5 = tpu.matmul %3, %4, %cst {dimension_numbers = #tpu.dot_dimension_numbers<[1], [0], [0], [1], [0, 0, 1, 1], [], []>} : vector<16x32xbf16>, vector<32x16xbf16>, vector<16x16xf32> -> vector<16x16xf32>
    %c0_4 = arith.constant 0 : index
    %c0_5 = arith.constant 0 : index
    %6 = vector.load %arg6[%c0_4, %c0_5] : memref<1x16xf32, #tpu.memory_space<vmem>>, vector<1x16xf32>
    %7 = vector.broadcast %6 : vector<1x16xf32> to vector<16x16xf32>
    %8 = arith.addf %5, %7 : vector<16x16xf32>
    %c0_6 = arith.constant 0 : index
    %c0_7 = arith.constant 0 : index
    %9 = vector.load %arg7[%c0_6, %c0_7] : memref<16x16xf32, #tpu.memory_space<vmem>>, vector<16x16xf32>
    tpu.vector_store %arg7[%c0_6, %c0_7], %8 {strides = array<i32>} : memref<16x16xf32, #tpu.memory_space<vmem>>, vector<16x16xf32>,
    return
  }
  func.func @transform_0(%arg0: i32, %arg1: i32) -> (i32, i32) {
    %c0_i32 = arith.constant 0 : i32
    %c0_i32_0 = arith.constant 0 : i32
    return %arg0, %c0_i32 : i32, i32
  }
  func.func @transform_1(%arg0: i32, %arg1: i32) -> (i32, i32) {
    %c0_i32 = arith.constant 0 : i32
    %c0_i32_0 = arith.constant 0 : i32
    %c0_i32_1 = arith.constant 0 : i32
    return %c0_i32, %c0_i32_0 : i32, i32
  }
  func.func @transform_2(%arg0: i32, %arg1: i32) -> (i32, i32) {
    %c0_i32 = arith.constant 0 : i32
    %c0_i32_0 = arith.constant 0 : i32
    %c0_i32_1 = arith.constant 0 : i32
    return %c0_i32, %c0_i32_0 : i32, i32
  }
  func.func @transform_3(%arg0: i32, %arg1: i32) -> (i32, i32) {
    %c0_i32 = arith.constant 0 : i32
    %c0_i32_0 = arith.constant 0 : i32
    return %c0_i32, %arg1 : i32, i32
  }
  func.func @transform_4(%arg0: i32, %arg1: i32) -> (i32, i32) {
    %c0_i32 = arith.constant 0 : i32
    %c0_i32_0 = arith.constant 0 : i32
    return %c0_i32, %arg1 : i32, i32
  }
  func.func @transform_5(%arg0: i32, %arg1: i32) -> (i32, i32) {
    %c0_i32 = arith.constant 0 : i32
    return %arg0, %arg1 : i32, i32
  }
}

</mosaic_0001>

<llo_original>
// kernel: decoder_forward.21
$region0: #{decoder_forward.21}
  #allocation0 [shape = 'u32[]', space=smem, size = 0x4, offset = 0x4, fixed_abs, tag = 'smem constant byte address 0x4 - core index']
  #allocation1 [shape = 'u32[144,128]{1,0:T(1,128)}', space=vmem, size = 0x12000, scoped, tag = 'internal scratch']
  #allocation2 [shape = 'f32[16,32]{1,0:T(8,128)}', space=vmem, size = 0x2000, scoped, tag = 'scratch operand']
  %s0 = inlined_call_operand.hbm [shape: bf16[16,32], index: 0, kind: input, shape index: {}]
  %s1 = inlined_call_operand.hbm [shape: bf16[32,32], index: 1, kind: input, shape index: {}]
  %s2 = inlined_call_operand.hbm [shape: f32[1,32], index: 2, kind: input, shape index: {}]
  %s3 = inlined_call_operand.hbm [shape: f32[16,32], index: 3, kind: input, shape index: {}]
  %s4 = inlined_call_operand.hbm [shape: f32[16,32], index: 4, kind: output, shape index: {}]
  %s5 = sld [smem:[#allocation0]]
  $region50: #{decoder_forward.21} parent=0
    _
  %s7 = ssub.s32 1, %s5
  %s8 = scalar_select 0, %s7, %s5
  $region1: #{decoder_forward.21} parent=0
    #allocation3 [shape = 'u8[4096]{0}', space=vmem, size = 0x1000, scoped, tag = 'input window, operand 0, single buffered']
    #allocation4 [shape = 's32[1]{0}', space=sflag, size = 0x4, scoped, tag = 'scoped memory for decoder_forward.21']
    #allocation5 [shape = 's32[1]{0}', space=sflag, size = 0x4, scoped, tag = 'scoped memory for decoder_forward.21']
    #allocation6 [shape = 'u8[8192]{0}', space=vmem, size = 0x2000, scoped, tag = 'input window, operand 1, single buffered']
    #allocation7 [shape = 's32[1]{0}', space=sflag, size = 0x4, scoped, tag = 'scoped memory for decoder_forward.21']
    #allocation8 [shape = 'u8[512]{0}', space=vmem, size = 0x400, scoped, tag = 'input window, operand 2, single buffered']
    #allocation9 [shape = 'u8[8192]{0}', space=vmem, size = 0x2000, scoped, tag = 'input window, operand 3, single buffered']
    #allocation10 [shape = 's32[1]{0}', space=sflag, size = 0x4, scoped, tag = 'scoped memory for decoder_forward.21']
    #allocation11 [shape = 'u8[8192]{0}', space=vmem, size = 0x2000, scoped, tag = 'output window, operand 0, single buffered']
    %9 = vsyncpa [#allocation4], 0
    %10 = vsyncpa [#allocation7], 0
    %11 = vsyncpa [#allocation10], 0
    %12 = vsyncpa [#allocation5], 0
    // Predicated region
    $region2: #{decoder_forward.21} parent=1 // pred_check
      _
    $region3: #{decoder_forward.21} parent=1 // pred_check_branch
      %14 = sbr.rel (0) target = $region5
    $region4: #{decoder_forward.21} parent=1 // pred_region
      %s16 = ssub.s32 128, 128
      %17 = vsyncadd [#allocation4], %s16
      %s18 = sshll.u32 [#allocation3], 4
      %s19 = int_to_ptr.vmem [resolvable:$true] %s18
      %24 = dma.hbm_to_vmem [thread:$0]  %s0, 128, %s19, [#allocation4], 64, 64, 4
    $region5: #{decoder_forward.21} parent=1 // pred_fallthru
      _
    // Predicated region
    $region6: #{decoder_forward.21} parent=1 // pred_check
      _
    $region7: #{decoder_forward.21} parent=1 // pred_check_branch
      %26 = sbr.rel (0) target = $region9
    $region8: #{decoder_forward.21} parent=1 // pred_region
      %s28 = ssub.s32 256, 256
      %29 = vsyncadd [#allocation7], %s28
      %s30 = sshll.u32 [#allocation6], 4
      %s31 = int_to_ptr.vmem [resolvable:$true] %s30
      %36 = dma.hbm_to_vmem [thread:$0]  %s1, 256, %s31, [#allocation7], 64, 64, 4
    $region9: #{decoder_forward.21} parent=1 // pred_fallthru
      _
    // Predicated region
    $region10: #{decoder_forward.21} parent=1 // pred_check
      _
    $region11: #{decoder_forward.21} parent=1 // pred_check_branch
      %38 = sbr.rel (0) target = $region13
    $region12: #{decoder_forward.21} parent=1 // pred_region
      %s40 = ssub.s32 16, 16
      %41 = vsyncadd [#allocation7], %s40
      %s43 = sshll.u32 [#allocation8], 4
      %s44 = int_to_ptr.vmem [resolvable:$true] %s43
      %46 = dma.hbm_to_vmem [thread:$0]  %s2, 16, %s44, [#allocation7]
    $region13: #{decoder_forward.21} parent=1 // pred_fallthru
      _
    // Predicated region
    $region14: #{decoder_forward.21} parent=1 // pred_check
      _
    $region15: #{decoder_forward.21} parent=1 // pred_check_branch
      %48 = sbr.rel (0) target = $region17
    $region16: #{decoder_forward.21} parent=1 // pred_region
      %s50 = ssub.s32 256, 256
      %51 = vsyncadd [#allocation10], %s50
      %s52 = sshll.u32 [#allocation9], 4
      %s53 = int_to_ptr.vmem [resolvable:$true] %s52
      %58 = dma.hbm_to_vmem [thread:$0]  %s3, 256, %s53, [#allocation10], 128, 128, 8
    $region17: #{decoder_forward.21} parent=1 // pred_fallthru
      _
    // Predicated region
    $region18: #{decoder_forward.21} parent=1 // pred_check
      _
    $region19: #{decoder_forward.21} parent=1 // pred_check_branch
      %60 = sbr.rel (0) target = $region21
    $region20: #{decoder_forward.21} parent=1 // pred_region
      %61 = dma.done [#allocation4], 128
    $region21: #{decoder_forward.21} parent=1 // pred_fallthru
      _
    // Predicated region
    $region22: #{decoder_forward.21} parent=1 // pred_check
      _
    $region23: #{decoder_forward.21} parent=1 // pred_check_branch
      %63 = sbr.rel (0) target = $region25
    $region24: #{decoder_forward.21} parent=1 // pred_region
      %64 = dma.done [#allocation7], 256
    $region25: #{decoder_forward.21} parent=1 // pred_fallthru
      _
    // Predicated region
    $region26: #{decoder_forward.21} parent=1 // pred_check
      _
    $region27: #{decoder_forward.21} parent=1 // pred_check_branch
      %66 = sbr.rel (0) target = $region29
    $region28: #{decoder_forward.21} parent=1 // pred_region
      %67 = dma.done [#allocation7], 16
    $region29: #{decoder_forward.21} parent=1 // pred_fallthru
      _
    // Predicated region
    $region30: #{decoder_forward.21} parent=1 // pred_check
      _
    $region31: #{decoder_forward.21} parent=1 // pred_check_branch
      %69 = sbr.rel (0) target = $region33
    $region32: #{decoder_forward.21} parent=1 // pred_region
      %70 = dma.done [#allocation10], 256
    $region33: #{decoder_forward.21} parent=1 // pred_fallthru
      _
    %p72 = scmp.eq.s32.totalorder 0, 0
    // Predicated region
    $region34: #{decoder_forward.21} parent=1 // pred_check
      %p73 = pneg %p72
    $region35: #{decoder_forward.21} parent=1 // pred_check_branch
      %75 = sbr.rel (%p73) target = $region37
    $region36: #{decoder_forward.21} parent=1 // pred_region
      %vm76 = vcmask 261120
      %77 = vst.msk [vmem:[#allocation2] sm:$0xff] %vm76, 0.0
      %78 = vst.msk [vmem:[#allocation2 + $0x8] sm:$0xff] %vm76, 0.0
    $region37: #{decoder_forward.21} parent=1 // pred_fallthru
      _
    %v79 = vld [vmem:[#allocation2] sm:$0xff]
    %v80 = vld [vmem:[#allocation2 + $0x8] sm:$0xff]
    %v81 = vld [vmem:[#allocation3] sm:$0xf]
    %v82 = vld [vmem:[#allocation3 + $0x4] sm:$0xf]
    %v83 = vld [vmem:[#allocation6] sm:$0xf]
    %v84 = vld [vmem:[#allocation6 + $0x4] sm:$0xf]
    %v85 = vld [vmem:[#allocation6 + $0x8] sm:$0xf]
    %v86 = vld [vmem:[#allocation6 + $0xc] sm:$0xf]
    %v89 = vunpack.c.l.b16 %v81
    %v90 = vunpack.c.l.b16 %v82
    %v91 = vpack.c.b16 %v90, %v89
    %v96 = vunpack.c.l.b16 %v83
    %v97 = vunpack.c.l.b16 %v84
    %v98 = vunpack.c.l.b16 %v85
    %v99 = vunpack.c.l.b16 %v86
    %v100 = vpack.c.b16 %v97, %v96
    %v101 = vpack.c.b16 %v99, %v98
    %vm104 = vcmask 261120
    %v106 = vsel %vm104, %v91, 0
    %108 = vmatprep.subr.bf16.mxu0 0
    %109 = vmatpush1.bf16.msra.mxu0 %v100
    %110 = vmatprep.subr.bf16.mxu0 0
    %111 = vmatpush1.bf16.msra.mxu0 %v101
    %112 = vmatprep.subr.bf16.mxu0 0
    %113 = vmatpush1.bf16.msra.mxu0 0
    %114 = vmatprep.subr.bf16.mxu0 0
    %115 = vmatpush1.bf16.msra.mxu0 0
    %116 = vmatprep.subr.bf16.mxu0 0
    %117 = vmatpush1.bf16.msra.mxu0 0
    %118 = vmatprep.subr.bf16.mxu0 0
    %119 = vmatpush1.bf16.msra.mxu0 0
    %120 = vmatprep.subr.bf16.mxu0 0
    %121 = vmatpush1.bf16.msra.mxu0 0
    %122 = vmatprep.subr.bf16.mxu0 0
    %123 = vmatpush1.bf16.msra.mxu0 0
    %124 = vmatprep.subr.bf16.mxu0 0
    %125 = vmatpush1.bf16.msra.mxu0 0
    %126 = vmatprep.subr.bf16.mxu0 0
    %127 = vmatpush1.bf16.msra.mxu0 0
    %128 = vmatprep.subr.bf16.mxu0 0
    %129 = vmatpush1.bf16.msra.mxu0 0
    %130 = vmatprep.subr.bf16.mxu0 0
    %131 = vmatpush1.bf16.msra.mxu0 0
    %132 = vmatprep.subr.bf16.mxu0 0
    %133 = vmatpush1.bf16.msra.mxu0 0
    %134 = vmatprep.subr.bf16.mxu0 0
    %135 = vmatpush1.bf16.msra.mxu0 0
    %136 = vmatprep.subr.bf16.mxu0 0
    %137 = vmatpush1.bf16.msra.mxu0 0
    %138 = vmatprep.subr.bf16.mxu0 0
    %139 = vmatpush1.bf16.msra.mxu0 0
    %140 = vmatprep.mubr.bf16.mxu0 0
    %141 = vmatmul.mubr.bf16.gmra.mrb[0].mxu0 %v106
    %v142 = vpop.f32.mrb[0].mxu0
    %v143 = vadd.f32 0.0, %v142
    %v144 = vpop.f32.mrb[0].mxu0
    %v145 = vpop.f32.mrb[0].mxu0
    %v146 = vadd.f32 0.0, %v145
    %v147 = vpop.f32.mrb[0].mxu0
    %148 = vdwg.mxu0
    %v149 = vadd.f32 %v79, %v143
    %v150 = vadd.f32 %v80, %v146
    %151 = vst.msk [vmem:[#allocation2] sm:$0xff] %vm104, %v149
    %152 = vst.msk [vmem:[#allocation2 + $0x8] sm:$0xff] %vm104, %v150
    // Predicated region
    $region38: #{decoder_forward.21} parent=1 // pred_check
      %p153 = pneg %p72
    $region39: #{decoder_forward.21} parent=1 // pred_check_branch
      %155 = sbr.rel (%p153) target = $region41
    $region40: #{decoder_forward.21} parent=1 // pred_region
      %v156 = vld [vmem:[#allocation2] sm:$0xff]
      %v157 = vld [vmem:[#allocation2 + $0x8] sm:$0xff]
      %v158 = vld [vmem:[#allocation8] sm:$0x1]
      %v160 = vlaneseq
      %v161 = vshrl.u32 %v160, 7
      %v162 = vsub.s32 0, %v161
      %v163 = vrot.slane %v158, %v162
      %v165 = vadd.f32 %v156, %v163
      %v166 = vadd.f32 %v157, %v163
      %v167 = vld [vmem:[#allocation9] sm:$0xff]
      %v168 = vld [vmem:[#allocation9 + $0x8] sm:$0xff]
      %v169 = vadd.f32 %v165, %v167
      %v170 = vadd.f32 %v166, %v168
      %171 = vst.msk [vmem:[#allocation11] sm:$0xff] %vm104, %v169
      %172 = vst.msk [vmem:[#allocation11 + $0x8] sm:$0xff] %vm104, %v170
    $region41: #{decoder_forward.21} parent=1 // pred_fallthru
      _
    // Predicated region
    $region42: #{decoder_forward.21} parent=1 // pred_check
      _
    $region43: #{decoder_forward.21} parent=1 // pred_check_branch
      %174 = sbr.rel (0) target = $region45
    $region44: #{decoder_forward.21} parent=1 // pred_region
      %s176 = ssub.s32 256, 256
      %177 = vsyncadd [#allocation5], %s176
      %s178 = sshll.u32 [#allocation11], 4
      %s179 = int_to_ptr.vmem [resolvable:$true] %s178
      %184 = dma.vmem_to_hbm [thread:$0]  %s179, 256, %s4, [#allocation5], 128, 128, 8
    $region45: #{decoder_forward.21} parent=1 // pred_fallthru
      _
    // Predicated region
    $region46: #{decoder_forward.21} parent=1 // pred_check
      _
    $region47: #{decoder_forward.21} parent=1 // pred_check_branch
      %186 = sbr.rel (0) target = $region49
    $region48: #{decoder_forward.21} parent=1 // pred_region
      %187 = dma.done [#allocation5], 256
    $region49: #{decoder_forward.21} parent=1 // pred_fallthru
      _
    %188 = vsyncpa [#allocation4], 1
    %189 = vsyncpa [#allocation7], 1
    %190 = vsyncpa [#allocation10], 1
    %191 = vsyncpa [#allocation5], 1

// kernel: decoder_forward.19
$region0: #{decoder_forward.19}
  #allocation0 [shape = 'u32[]', space=smem, size = 0x4, offset = 0x4, fixed_abs, tag = 'smem constant byte address 0x4 - core index']
  #allocation1 [shape = 'u32[144,128]{1,0:T(1,128)}', space=vmem, size = 0x12000, scoped, tag = 'internal scratch']
  #allocation2 [shape = 'bf16[16,32]{1,0:T(16,128)(2,1)}', space=vmem, size = 0x1000, scoped, tag = 'scratch operand']
  %s0 = inlined_call_operand.hbm [shape: f32[16,32], index: 0, kind: input, shape index: {}]
  %s1 = inlined_call_operand.hbm [shape: f32[1,32], index: 1, kind: input, shape index: {}]
  %s2 = inlined_call_operand.hbm [shape: f32[1,32], index: 2, kind: input, shape index: {}]
  %s3 = inlined_call_operand.hbm [shape: bf16[32,96], index: 3, kind: input, shape index: {}]
  %s4 = inlined_call_operand.hbm [shape: f32[1,96], index: 4, kind: input, shape index: {}]
  %s5 = inlined_call_operand.hbm [shape: bf16[16,96], index: 5, kind: output, shape index: {}]
  %s6 = sld [smem:[#allocation0]]
  $region54: #{decoder_forward.19} parent=0
    _
  %s8 = ssub.s32 1, %s6
  %s9 = scalar_select 0, %s8, %s6
  $region1: #{decoder_forward.19} parent=0
    #allocation3 [shape = 'u8[8192]{0}', space=vmem, size = 0x2000, scoped, tag = 'input window, operand 0, single buffered']
    #allocation4 [shape = 's32[1]{0}', space=sflag, size = 0x4, scoped, tag = 'scoped memory for decoder_forward.19']
    #allocation5 [shape = 's32[1]{0}', space=sflag, size = 0x4, scoped, tag = 'scoped memory for decoder_forward.19']
    #allocation6 [shape = 'u8[512]{0}', space=vmem, size = 0x400, scoped, tag = 'input window, operand 1, single buffered']
    #allocation7 [shape = 's32[1]{0}', space=sflag, size = 0x4, scoped, tag = 'scoped memory for decoder_forward.19']
    #allocation8 [shape = 'u8[512]{0}', space=vmem, size = 0x400, scoped, tag = 'input window, operand 2, single buffered']
    #allocation9 [shape = 'u8[8192]{0}', space=vmem, size = 0x2000, scoped, tag = 'input window, operand 3, single buffered']
    #allocation10 [shape = 's32[1]{0}', space=sflag, size = 0x4, scoped, tag = 'scoped memory for decoder_forward.19']
    #allocation11 [shape = 'u8[512]{0}', space=vmem, size = 0x400, scoped, tag = 'input window, operand 4, single buffered']
    #allocation12 [shape = 'u8[4096]{0}', space=vmem, size = 0x1000, scoped, tag = 'output window, operand 0, single buffered']
    %10 = vsyncpa [#allocation4], 0
    %11 = vsyncpa [#allocation7], 0
    %12 = vsyncpa [#allocation10], 0
    %13 = vsyncpa [#allocation5], 0
    // Predicated region
    $region2: #{decoder_forward.19} parent=1 // pred_check
      _
    $region3: #{decoder_forward.19} parent=1 // pred_check_branch
      %15 = sbr.rel (0) target = $region5
    $region4: #{decoder_forward.19} parent=1 // pred_region
      %s17 = ssub.s32 256, 256
      %18 = vsyncadd [#allocation4], %s17
      %s19 = sshll.u32 [#allocation3], 4
      %s20 = int_to_ptr.vmem [resolvable:$true] %s19
      %25 = dma.hbm_to_vmem [thread:$0]  %s0, 256, %s20, [#allocation4], 128, 128, 8
    $region5: #{decoder_forward.19} parent=1 // pred_fallthru
      _
    // Predicated region
    $region6: #{decoder_forward.19} parent=1 // pred_check
      _
    $region7: #{decoder_forward.19} parent=1 // pred_check_branch
      %27 = sbr.rel (0) target = $region9
    $region8: #{decoder_forward.19} parent=1 // pred_region
      %s29 = ssub.s32 16, 16
      %30 = vsyncadd [#allocation7], %s29
      %s32 = sshll.u32 [#allocation6], 4
      %s33 = int_to_ptr.vmem [resolvable:$true] %s32
      %35 = dma.hbm_to_vmem [thread:$0]  %s1, 16, %s33, [#allocation7]
    $region9: #{decoder_forward.19} parent=1 // pred_fallthru
      _
    // Predicated region
    $region10: #{decoder_forward.19} parent=1 // pred_check
      _
    $region11: #{decoder_forward.19} parent=1 // pred_check_branch
      %37 = sbr.rel (0) target = $region13
    $region12: #{decoder_forward.19} parent=1 // pred_region
      %s39 = ssub.s32 16, 16
      %40 = vsyncadd [#allocation7], %s39
      %s42 = sshll.u32 [#allocation8], 4
      %s43 = int_to_ptr.vmem [resolvable:$true] %s42
      %45 = dma.hbm_to_vmem [thread:$0]  %s2, 16, %s43, [#allocation7]
    $region13: #{decoder_forward.19} parent=1 // pred_fallthru
      _
    // Predicated region
    $region14: #{decoder_forward.19} parent=1 // pred_check
      _
    $region15: #{decoder_forward.19} parent=1 // pred_check_branch
      %47 = sbr.rel (0) target = $region17
    $region16: #{decoder_forward.19} parent=1 // pred_region
      %s49 = ssub.s32 256, 256
      %50 = vsyncadd [#allocation10], %s49
      %s51 = sshll.u32 [#allocation9], 4
      %s52 = int_to_ptr.vmem [resolvable:$true] %s51
      %57 = dma.hbm_to_vmem [thread:$0]  %s3, 256, %s52, [#allocation10], 64, 64, 4
    $region17: #{decoder_forward.19} parent=1 // pred_fallthru
      _
    // Predicated region
    $region18: #{decoder_forward.19} parent=1 // pred_check
      _
    $region19: #{decoder_forward.19} parent=1 // pred_check_branch
      %59 = sbr.rel (0) target = $region21
    $region20: #{decoder_forward.19} parent=1 // pred_region
      %s61 = ssub.s32 16, 16
      %62 = vsyncadd [#allocation10], %s61
      %s64 = sshll.u32 [#allocation11], 4
      %s65 = int_to_ptr.vmem [resolvable:$true] %s64
      %67 = dma.hbm_to_vmem [thread:$0]  %s4, 16, %s65, [#allocation10]
    $region21: #{decoder_forward.19} parent=1 // pred_fallthru
      _
    // Predicated region
    $region22: #{decoder_forward.19} parent=1 // pred_check
      _
    $region23: #{decoder_forward.19} parent=1 // pred_check_branch
      %69 = sbr.rel (0) target = $region25
    $region24: #{decoder_forward.19} parent=1 // pred_region
      %70 = dma.done [#allocation4], 256
    $region25: #{decoder_forward.19} parent=1 // pred_fallthru
      _
    // Predicated region
    $region26: #{decoder_forward.19} parent=1 // pred_check
      _
    $region27: #{decoder_forward.19} parent=1 // pred_check_branch
      %72 = sbr.rel (0) target = $region29
    $region28: #{decoder_forward.19} parent=1 // pred_region
      %73 = dma.done [#allocation7], 16
    $region29: #{decoder_forward.19} parent=1 // pred_fallthru
      _
    // Predicated region
    $region30: #{decoder_forward.19} parent=1 // pred_check
      _
    $region31: #{decoder_forward.19} parent=1 // pred_check_branch
      %75 = sbr.rel (0) target = $region33
    $region32: #{decoder_forward.19} parent=1 // pred_region
      %76 = dma.done [#allocation7], 16
    $region33: #{decoder_forward.19} parent=1 // pred_fallthru
      _
    // Predicated region
    $region34: #{decoder_forward.19} parent=1 // pred_check
      _
    $region35: #{decoder_forward.19} parent=1 // pred_check_branch
      %78 = sbr.rel (0) target = $region37
    $region36: #{decoder_forward.19} parent=1 // pred_region
      %79 = dma.done [#allocation10], 256
    $region37: #{decoder_forward.19} parent=1 // pred_fallthru
      _
    // Predicated region
    $region38: #{decoder_forward.19} parent=1 // pred_check
      _
    $region39: #{decoder_forward.19} parent=1 // pred_check_branch
      %81 = sbr.rel (0) target = $region41
    $region40: #{decoder_forward.19} parent=1 // pred_region
      %82 = dma.done [#allocation10], 16
    $region41: #{decoder_forward.19} parent=1 // pred_fallthru
      _
    %p84 = scmp.eq.s32.totalorder 0, 0
    // Predicated region
    $region42: #{decoder_forward.19} parent=1 // pred_check
      %p85 = pneg %p84
    $region43: #{decoder_forward.19} parent=1 // pred_check_branch
      %87 = sbr.rel (%p85) target = $region45
    $region44: #{decoder_forward.19} parent=1 // pred_region
      %v88 = vld [vmem:[#allocation3] sm:$0xff]
      %v89 = vld [vmem:[#allocation3 + $0x8] sm:$0xff]
      %vm90 = vcmask 261120
      %v91 = vsel %vm90, %v88, 0.0
      %92 = vadd.xlane.f32.xlu0 %v91
      %v93 = vpop.xlane.xlu0 %92
      %v94 = vsel %vm90, %v89, 0.0
      %95 = vadd.xlane.f32.xlu0 %v94
      %v96 = vpop.xlane.xlu0 %95
      %v97 = vrcp.pop 32.0
      %v98 = vmul.f32 %v93, %v97
      %v99 = vmul.f32 %v96, %v97
      %v100 = vsub.f32 %v88, %v98
      %v101 = vsub.f32 %v89, %v99
      %v102 = vmul.f32 %v100, %v100
      %v103 = vmul.f32 %v101, %v101
      %v104 = vsel %vm90, %v102, 0.0
      %105 = vadd.xlane.f32.xlu0 %v104
      %v106 = vpop.xlane.xlu0 %105
      %v107 = vsel %vm90, %v103, 0.0
      %108 = vadd.xlane.f32.xlu0 %v107
      %v109 = vpop.xlane.xlu0 %108
      %v110 = vmul.f32 %v106, %v97
      %v111 = vmul.f32 %v109, %v97
      %v112 = vadd.f32 %v110, 1e-06
      %v113 = vadd.f32 %v111, 1e-06
      %v114 = vrsqrt.pop %v112
      %v115 = vrsqrt.pop %v113
      %v116 = vmul.f32 %v100, %v114
      %v117 = vmul.f32 %v101, %v115
      %v118 = vld [vmem:[#allocation6] sm:$0x1]
      %v120 = vlaneseq
      %v121 = vshrl.u32 %v120, 7
      %v122 = vsub.s32 0, %v121
      %v123 = vrot.slane %v118, %v122
      %v125 = vmul.f32 %v116, %v123
      %v126 = vmul.f32 %v117, %v123
      %v127 = vld [vmem:[#allocation8] sm:$0x1]
      %v129 = vlaneseq
      %v130 = vshrl.u32 %v129, 7
      %v131 = vsub.s32 0, %v130
      %v132 = vrot.slane %v127, %v131
      %v134 = vadd.f32 %v125, %v132
      %v135 = vadd.f32 %v126, %v132
      %v136 = vpack.c.bf16 %v135, %v134
      %137 = vst.msk [vmem:[#allocation2] sm:$0xff] %vm90, %v136
    $region45: #{decoder_forward.19} parent=1 // pred_fallthru
      _
    %v138 = vld [vmem:[#allocation2] sm:$0xff]
    %v139 = vld [vmem:[#allocation9] sm:$0xf]
    %v140 = vld [vmem:[#allocation9 + $0x4] sm:$0xf]
    %v141 = vld [vmem:[#allocation9 + $0x8] sm:$0xf]
    %v142 = vld [vmem:[#allocation9 + $0xc] sm:$0xf]
    %v143 = vld [vmem:[#allocation11] sm:$0x1]
    %v145 = vlaneseq
    %v146 = vshrl.u32 %v145, 7
    %v147 = vsub.s32 0, %v146
    %v148 = vrot.slane %v143, %v147
    %v154 = vunpack.c.l.b16 %v139
    %v155 = vunpack.c.l.b16 %v140
    %v156 = vunpack.c.l.b16 %v141
    %v157 = vunpack.c.l.b16 %v142
    %v158 = vpack.c.b16 %v155, %v154
    %v159 = vpack.c.b16 %v157, %v156
    %vm162 = vcmask 261120
    %v164 = vsel %vm162, %v138, 0
    %166 = vmatprep.subr.bf16.mxu0 0
    %167 = vmatpush1.bf16.msra.mxu0 %v158
    %168 = vmatprep.subr.bf16.mxu0 0
    %169 = vmatpush1.bf16.msra.mxu0 %v159
    %170 = vmatprep.subr.bf16.mxu0 0
    %171 = vmatpush1.bf16.msra.mxu0 0
    %172 = vmatprep.subr.bf16.mxu0 0
    %173 = vmatpush1.bf16.msra.mxu0 0
    %174 = vmatprep.subr.bf16.mxu0 0
    %175 = vmatpush1.bf16.msra.mxu0 0
    %176 = vmatprep.subr.bf16.mxu0 0
    %177 = vmatpush1.bf16.msra.mxu0 0
    %178 = vmatprep.subr.bf16.mxu0 0
    %179 = vmatpush1.bf16.msra.mxu0 0
    %180 = vmatprep.subr.bf16.mxu0 0
    %181 = vmatpush1.bf16.msra.mxu0 0
    %182 = vmatprep.subr.bf16.mxu0 0
    %183 = vmatpush1.bf16.msra.mxu0 0
    %184 = vmatprep.subr.bf16.mxu0 0
    %185 = vmatpush1.bf16.msra.mxu0 0
    %186 = vmatprep.subr.bf16.mxu0 0
    %187 = vmatpush1.bf16.msra.mxu0 0
    %188 = vmatprep.subr.bf16.mxu0 0
    %189 = vmatpush1.bf16.msra.mxu0 0
    %190 = vmatprep.subr.bf16.mxu0 0
    %191 = vmatpush1.bf16.msra.mxu0 0
    %192 = vmatprep.subr.bf16.mxu0 0
    %193 = vmatpush1.bf16.msra.mxu0 0
    %194 = vmatprep.subr.bf16.mxu0 0
    %195 = vmatpush1.bf16.msra.mxu0 0
    %196 = vmatprep.subr.bf16.mxu0 0
    %197 = vmatpush1.bf16.msra.mxu0 0
    %198 = vmatprep.mubr.bf16.mxu0 0
    %199 = vmatmul.mubr.bf16.gmra.mrb[0].mxu0 %v164
    %v200 = vpop.f32.mrb[0].mxu0
    %v201 = vadd.f32 %v148, %v200
    %v202 = vpop.f32.mrb[0].mxu0
    %v203 = vpop.f32.mrb[0].mxu0
    %v204 = vadd.f32 %v148, %v203
    %v205 = vpop.f32.mrb[0].mxu0
    %206 = vdwg.mxu0
    %v207 = vpack.c.bf16 %v204, %v201
    %v209 = vunpack.c.l.b16 %v207
    %v210 = vunpack.c.h.b16 %v207
    %v211 = vpack.c.b16 %v209, %v209
    %v212 = vpack.c.b16 %v210, %v210
    %vm215 = vcmask 781312
    %216 = vst.msk [vmem:[#allocation12] sm:$0xf] %vm215, %v211
    %217 = vst.msk [vmem:[#allocation12 + $0x4] sm:$0xf] %vm215, %v212
    // Predicated region
    $region46: #{decoder_forward.19} parent=1 // pred_check
      _
    $region47: #{decoder_forward.19} parent=1 // pred_check_branch
      %219 = sbr.rel (0) target = $region49
    $region48: #{decoder_forward.19} parent=1 // pred_region
      %s221 = ssub.s32 128, 128
      %222 = vsyncadd [#allocation5], %s221
      %s223 = sshll.u32 [#allocation12], 4
      %s224 = int_to_ptr.vmem [resolvable:$true] %s223
      %229 = dma.vmem_to_hbm [thread:$0]  %s224, 128, %s5, [#allocation5], 64, 64, 4
    $region49: #{decoder_forward.19} parent=1 // pred_fallthru
      _
    // Predicated region
    $region50: #{decoder_forward.19} parent=1 // pred_check
      _
    $region51: #{decoder_forward.19} parent=1 // pred_check_branch
      %231 = sbr.rel (0) target = $region53
    $region52: #{decoder_forward.19} parent=1 // pred_region
      %232 = dma.done [#allocation5], 128
    $region53: #{decoder_forward.19} parent=1 // pred_fallthru
      _
    %233 = vsyncpa [#allocation4], 1
    %234 = vsyncpa [#allocation7], 1
    %235 = vsyncpa [#allocation10], 1
    %236 = vsyncpa [#allocation5], 1

// kernel: decoder_forward.22
$region0: #{decoder_forward.22}
  #allocation0 [shape = 'u32[]', space=smem, size = 0x4, offset = 0x4, fixed_abs, tag = 'smem constant byte address 0x4 - core index']
  #allocation1 [shape = 'u32[144,128]{1,0:T(1,128)}', space=vmem, size = 0x12000, scoped, tag = 'internal scratch']
  #allocation2 [shape = 'bf16[16,32]{1,0:T(16,128)(2,1)}', space=vmem, size = 0x1000, scoped, tag = 'scratch operand']
  %s0 = inlined_call_operand.hbm [shape: f32[16,32], index: 0, kind: input, shape index: {}]
  %s1 = inlined_call_operand.hbm [shape: f32[1,32], index: 1, kind: input, shape index: {}]
  %s2 = inlined_call_operand.hbm [shape: f32[1,32], index: 2, kind: input, shape index: {}]
  %s3 = inlined_call_operand.hbm [shape: bf16[32,32], index: 3, kind: input, shape index: {}]
  %s4 = inlined_call_operand.hbm [shape: f32[1,32], index: 4, kind: input, shape index: {}]
  %s5 = inlined_call_operand.hbm [shape: bf16[16,32], index: 5, kind: output, shape index: {}]
  %s6 = sld [smem:[#allocation0]]
  $region54: #{decoder_forward.22} parent=0
    _
  %s8 = ssub.s32 1, %s6
  %s9 = scalar_select 0, %s8, %s6
  $region1: #{decoder_forward.22} parent=0
    #allocation3 [shape = 'u8[8192]{0}', space=vmem, size = 0x2000, scoped, tag = 'input window, operand 0, single buffered']
    #allocation4 [shape = 's32[1]{0}', space=sflag, size = 0x4, scoped, tag = 'scoped memory for decoder_forward.22']
    #allocation5 [shape = 's32[1]{0}', space=sflag, size = 0x4, scoped, tag = 'scoped memory for decoder_forward.22']
    #allocation6 [shape = 'u8[512]{0}', space=vmem, size = 0x400, scoped, tag = 'input window, operand 1, single buffered']
    #allocation7 [shape = 's32[1]{0}', space=sflag, size = 0x4, scoped, tag = 'scoped memory for decoder_forward.22']
    #allocation8 [shape = 'u8[512]{0}', space=vmem, size = 0x400, scoped, tag = 'input window, operand 2, single buffered']
    #allocation9 [shape = 'u8[8192]{0}', space=vmem, size = 0x2000, scoped, tag = 'input window, operand 3, single buffered']
    #allocation10 [shape = 's32[1]{0}', space=sflag, size = 0x4, scoped, tag = 'scoped memory for decoder_forward.22']
    #allocation11 [shape = 'u8[512]{0}', space=vmem, size = 0x400, scoped, tag = 'input window, operand 4, single buffered']
    #allocation12 [shape = 'u8[4096]{0}', space=vmem, size = 0x1000, scoped, tag = 'output window, operand 0, single buffered']
    %10 = vsyncpa [#allocation4], 0
    %11 = vsyncpa [#allocation7], 0
    %12 = vsyncpa [#allocation10], 0
    %13 = vsyncpa [#allocation5], 0
    // Predicated region
    $region2: #{decoder_forward.22} parent=1 // pred_check
      _
    $region3: #{decoder_forward.22} parent=1 // pred_check_branch
      %15 = sbr.rel (0) target = $region5
    $region4: #{decoder_forward.22} parent=1 // pred_region
      %s17 = ssub.s32 256, 256
      %18 = vsyncadd [#allocation4], %s17
      %s19 = sshll.u32 [#allocation3], 4
      %s20 = int_to_ptr.vmem [resolvable:$true] %s19
      %25 = dma.hbm_to_vmem [thread:$0]  %s0, 256, %s20, [#allocation4], 128, 128, 8
    $region5: #{decoder_forward.22} parent=1 // pred_fallthru
      _
    // Predicated region
    $region6: #{decoder_forward.22} parent=1 // pred_check
      _
    $region7: #{decoder_forward.22} parent=1 // pred_check_branch
      %27 = sbr.rel (0) target = $region9
    $region8: #{decoder_forward.22} parent=1 // pred_region
      %s29 = ssub.s32 16, 16
      %30 = vsyncadd [#allocation7], %s29
      %s32 = sshll.u32 [#allocation6], 4
      %s33 = int_to_ptr.vmem [resolvable:$true] %s32
      %35 = dma.hbm_to_vmem [thread:$0]  %s1, 16, %s33, [#allocation7]
    $region9: #{decoder_forward.22} parent=1 // pred_fallthru
      _
    // Predicated region
    $region10: #{decoder_forward.22} parent=1 // pred_check
      _
    $region11: #{decoder_forward.22} parent=1 // pred_check_branch
      %37 = sbr.rel (0) target = $region13
    $region12: #{decoder_forward.22} parent=1 // pred_region
      %s39 = ssub.s32 16, 16
      %40 = vsyncadd [#allocation7], %s39
      %s42 = sshll.u32 [#allocation8], 4
      %s43 = int_to_ptr.vmem [resolvable:$true] %s42
      %45 = dma.hbm_to_vmem [thread:$0]  %s2, 16, %s43, [#allocation7]
    $region13: #{decoder_forward.22} parent=1 // pred_fallthru
      _
    // Predicated region
    $region14: #{decoder_forward.22} parent=1 // pred_check
      _
    $region15: #{decoder_forward.22} parent=1 // pred_check_branch
      %47 = sbr.rel (0) target = $region17
    $region16: #{decoder_forward.22} parent=1 // pred_region
      %s49 = ssub.s32 256, 256
      %50 = vsyncadd [#allocation10], %s49
      %s51 = sshll.u32 [#allocation9], 4
      %s52 = int_to_ptr.vmem [resolvable:$true] %s51
      %57 = dma.hbm_to_vmem [thread:$0]  %s3, 256, %s52, [#allocation10], 64, 64, 4
    $region17: #{decoder_forward.22} parent=1 // pred_fallthru
      _
    // Predicated region
    $region18: #{decoder_forward.22} parent=1 // pred_check
      _
    $region19: #{decoder_forward.22} parent=1 // pred_check_branch
      %59 = sbr.rel (0) target = $region21
    $region20: #{decoder_forward.22} parent=1 // pred_region
      %s61 = ssub.s32 16, 16
      %62 = vsyncadd [#allocation10], %s61
      %s64 = sshll.u32 [#allocation11], 4
      %s65 = int_to_ptr.vmem [resolvable:$true] %s64
      %67 = dma.hbm_to_vmem [thread:$0]  %s4, 16, %s65, [#allocation10]
    $region21: #{decoder_forward.22} parent=1 // pred_fallthru
      _
    // Predicated region
    $region22: #{decoder_forward.22} parent=1 // pred_check
      _
    $region23: #{decoder_forward.22} parent=1 // pred_check_branch
      %69 = sbr.rel (0) target = $region25
    $region24: #{decoder_forward.22} parent=1 // pred_region
      %70 = dma.done [#allocation4], 256
    $region25: #{decoder_forward.22} parent=1 // pred_fallthru
      _
    // Predicated region
    $region26: #{decoder_forward.22} parent=1 // pred_check
      _
    $region27: #{decoder_forward.22} parent=1 // pred_check_branch
      %72 = sbr.rel (0) target = $region29
    $region28: #{decoder_forward.22} parent=1 // pred_region
      %73 = dma.done [#allocation7], 16
    $region29: #{decoder_forward.22} parent=1 // pred_fallthru
      _
    // Predicated region
    $region30: #{decoder_forward.22} parent=1 // pred_check
      _
    $region31: #{decoder_forward.22} parent=1 // pred_check_branch
      %75 = sbr.rel (0) target = $region33
    $region32: #{decoder_forward.22} parent=1 // pred_region
      %76 = dma.done [#allocation7], 16
    $region33: #{decoder_forward.22} parent=1 // pred_fallthru
      _
    // Predicated region
    $region34: #{decoder_forward.22} parent=1 // pred_check
      _
    $region35: #{decoder_forward.22} parent=1 // pred_check_branch
      %78 = sbr.rel (0) target = $region37
    $region36: #{decoder_forward.22} parent=1 // pred_region
      %79 = dma.done [#allocation10], 256
    $region37: #{decoder_forward.22} parent=1 // pred_fallthru
      _
    // Predicated region
    $region38: #{decoder_forward.22} parent=1 // pred_check
      _
    $region39: #{decoder_forward.22} parent=1 // pred_check_branch
      %81 = sbr.rel (0) target = $region41
    $region40: #{decoder_forward.22} parent=1 // pred_region
      %82 = dma.done [#allocation10], 16
    $region41: #{decoder_forward.22} parent=1 // pred_fallthru
      _
    %p84 = scmp.eq.s32.totalorder 0, 0
    // Predicated region
    $region42: #{decoder_forward.22} parent=1 // pred_check
      %p85 = pneg %p84
    $region43: #{decoder_forward.22} parent=1 // pred_check_branch
      %87 = sbr.rel (%p85) target = $region45
    $region44: #{decoder_forward.22} parent=1 // pred_region
      %v88 = vld [vmem:[#allocation3] sm:$0xff]
      %v89 = vld [vmem:[#allocation3 + $0x8] sm:$0xff]
      %vm90 = vcmask 261120
      %v91 = vsel %vm90, %v88, 0.0
      %92 = vadd.xlane.f32.xlu0 %v91
      %v93 = vpop.xlane.xlu0 %92
      %v94 = vsel %vm90, %v89, 0.0
      %95 = vadd.xlane.f32.xlu0 %v94
      %v96 = vpop.xlane.xlu0 %95
      %v97 = vrcp.pop 32.0
      %v98 = vmul.f32 %v93, %v97
      %v99 = vmul.f32 %v96, %v97
      %v100 = vsub.f32 %v88, %v98
      %v101 = vsub.f32 %v89, %v99
      %v102 = vmul.f32 %v100, %v100
      %v103 = vmul.f32 %v101, %v101
      %v104 = vsel %vm90, %v102, 0.0
      %105 = vadd.xlane.f32.xlu0 %v104
      %v106 = vpop.xlane.xlu0 %105
      %v107 = vsel %vm90, %v103, 0.0
      %108 = vadd.xlane.f32.xlu0 %v107
      %v109 = vpop.xlane.xlu0 %108
      %v110 = vmul.f32 %v106, %v97
      %v111 = vmul.f32 %v109, %v97
      %v112 = vadd.f32 %v110, 1e-06
      %v113 = vadd.f32 %v111, 1e-06
      %v114 = vrsqrt.pop %v112
      %v115 = vrsqrt.pop %v113
      %v116 = vmul.f32 %v100, %v114
      %v117 = vmul.f32 %v101, %v115
      %v118 = vld [vmem:[#allocation6] sm:$0x1]
      %v120 = vlaneseq
      %v121 = vshrl.u32 %v120, 7
      %v122 = vsub.s32 0, %v121
      %v123 = vrot.slane %v118, %v122
      %v125 = vmul.f32 %v116, %v123
      %v126 = vmul.f32 %v117, %v123
      %v127 = vld [vmem:[#allocation8] sm:$0x1]
      %v129 = vlaneseq
      %v130 = vshrl.u32 %v129, 7
      %v131 = vsub.s32 0, %v130
      %v132 = vrot.slane %v127, %v131
      %v134 = vadd.f32 %v125, %v132
      %v135 = vadd.f32 %v126, %v132
      %v136 = vpack.c.bf16 %v135, %v134
      %137 = vst.msk [vmem:[#allocation2] sm:$0xff] %vm90, %v136
    $region45: #{decoder_forward.22} parent=1 // pred_fallthru
      _
    %v138 = vld [vmem:[#allocation2] sm:$0xff]
    %v139 = vld [vmem:[#allocation9] sm:$0xf]
    %v140 = vld [vmem:[#allocation9 + $0x4] sm:$0xf]
    %v141 = vld [vmem:[#allocation9 + $0x8] sm:$0xf]
    %v142 = vld [vmem:[#allocation9 + $0xc] sm:$0xf]
    %v143 = vld [vmem:[#allocation11] sm:$0x1]
    %v145 = vlaneseq
    %v146 = vshrl.u32 %v145, 7
    %v147 = vsub.s32 0, %v146
    %v148 = vrot.slane %v143, %v147
    %v154 = vunpack.c.l.b16 %v139
    %v155 = vunpack.c.l.b16 %v140
    %v156 = vunpack.c.l.b16 %v141
    %v157 = vunpack.c.l.b16 %v142
    %v158 = vpack.c.b16 %v155, %v154
    %v159 = vpack.c.b16 %v157, %v156
    %vm162 = vcmask 261120
    %v164 = vsel %vm162, %v138, 0
    %166 = vmatprep.subr.bf16.mxu0 0
    %167 = vmatpush1.bf16.msra.mxu0 %v158
    %168 = vmatprep.subr.bf16.mxu0 0
    %169 = vmatpush1.bf16.msra.mxu0 %v159
    %170 = vmatprep.subr.bf16.mxu0 0
    %171 = vmatpush1.bf16.msra.mxu0 0
    %172 = vmatprep.subr.bf16.mxu0 0
    %173 = vmatpush1.bf16.msra.mxu0 0
    %174 = vmatprep.subr.bf16.mxu0 0
    %175 = vmatpush1.bf16.msra.mxu0 0
    %176 = vmatprep.subr.bf16.mxu0 0
    %177 = vmatpush1.bf16.msra.mxu0 0
    %178 = vmatprep.subr.bf16.mxu0 0
    %179 = vmatpush1.bf16.msra.mxu0 0
    %180 = vmatprep.subr.bf16.mxu0 0
    %181 = vmatpush1.bf16.msra.mxu0 0
    %182 = vmatprep.subr.bf16.mxu0 0
    %183 = vmatpush1.bf16.msra.mxu0 0
    %184 = vmatprep.subr.bf16.mxu0 0
    %185 = vmatpush1.bf16.msra.mxu0 0
    %186 = vmatprep.subr.bf16.mxu0 0
    %187 = vmatpush1.bf16.msra.mxu0 0
    %188 = vmatprep.subr.bf16.mxu0 0
    %189 = vmatpush1.bf16.msra.mxu0 0
    %190 = vmatprep.subr.bf16.mxu0 0
    %191 = vmatpush1.bf16.msra.mxu0 0
    %192 = vmatprep.subr.bf16.mxu0 0
    %193 = vmatpush1.bf16.msra.mxu0 0
    %194 = vmatprep.subr.bf16.mxu0 0
    %195 = vmatpush1.bf16.msra.mxu0 0
    %196 = vmatprep.subr.bf16.mxu0 0
    %197 = vmatpush1.bf16.msra.mxu0 0
    %198 = vmatprep.mubr.bf16.mxu0 0
    %199 = vmatmul.mubr.bf16.gmra.mrb[0].mxu0 %v164
    %v200 = vpop.f32.mrb[0].mxu0
    %v201 = vadd.f32 %v148, %v200
    %v202 = vpop.f32.mrb[0].mxu0
    %v203 = vpop.f32.mrb[0].mxu0
    %v204 = vadd.f32 %v148, %v203
    %v205 = vpop.f32.mrb[0].mxu0
    %206 = vdwg.mxu0
    %v207 = vpack.c.bf16 %v204, %v201
    %v209 = vunpack.c.l.b16 %v207
    %v210 = vunpack.c.h.b16 %v207
    %v211 = vpack.c.b16 %v209, %v209
    %v212 = vpack.c.b16 %v210, %v210
    %vm215 = vcmask 257024
    %216 = vst.msk [vmem:[#allocation12] sm:$0xf] %vm215, %v211
    %217 = vst.msk [vmem:[#allocation12 + $0x4] sm:$0xf] %vm215, %v212
    // Predicated region
    $region46: #{decoder_forward.22} parent=1 // pred_check
      _
    $region47: #{decoder_forward.22} parent=1 // pred_check_branch
      %219 = sbr.rel (0) target = $region49
    $region48: #{decoder_forward.22} parent=1 // pred_region
      %s221 = ssub.s32 128, 128
      %222 = vsyncadd [#allocation5], %s221
      %s223 = sshll.u32 [#allocation12], 4
      %s224 = int_to_ptr.vmem [resolvable:$true] %s223
      %229 = dma.vmem_to_hbm [thread:$0]  %s224, 128, %s5, [#allocation5], 64, 64, 4
    $region49: #{decoder_forward.22} parent=1 // pred_fallthru
      _
    // Predicated region
    $region50: #{decoder_forward.22} parent=1 // pred_check
      _
    $region51: #{decoder_forward.22} parent=1 // pred_check_branch
      %231 = sbr.rel (0) target = $region53
    $region52: #{decoder_forward.22} parent=1 // pred_region
      %232 = dma.done [#allocation5], 128
    $region53: #{decoder_forward.22} parent=1 // pred_fallthru
      _
    %233 = vsyncpa [#allocation4], 1
    %234 = vsyncpa [#allocation7], 1
    %235 = vsyncpa [#allocation10], 1
    %236 = vsyncpa [#allocation5], 1

// kernel: decoder_forward.20
$region0: #{decoder_forward.20}
  #allocation0 [shape = 'u32[]', space=smem, size = 0x4, offset = 0x4, fixed_abs, tag = 'smem constant byte address 0x4 - core index']
  #allocation1 [shape = 'u32[144,128]{1,0:T(1,128)}', space=vmem, size = 0x12000, scoped, tag = 'internal scratch']
  #allocation2 [shape = 'f32[4,8,1]{2,1,0:T(8,128)}', space=vmem, size = 0x4000, scoped, tag = 'scratch operand']
  #allocation3 [shape = 'f32[4,8,1]{2,1,0:T(8,128)}', space=vmem, size = 0x4000, scoped, tag = 'scratch operand']
  #allocation4 [shape = 'f32[8,32]{1,0:T(8,128)}', space=vmem, size = 0x1000, scoped, tag = 'scratch operand']
  %s0 = inlined_call_operand.hbm [shape: bf16[2,8,32], index: 0, kind: input, shape index: {}]
  %s1 = inlined_call_operand.hbm [shape: bf16[2,8,32], index: 1, kind: input, shape index: {}]
  %s2 = inlined_call_operand.hbm [shape: bf16[2,8,32], index: 2, kind: input, shape index: {}]
  %s3 = inlined_call_operand.hbm [shape: f32[2,8,8], index: 3, kind: input, shape index: {}]
  %s4 = inlined_call_operand.hbm [shape: bf16[2,8,32], index: 4, kind: output, shape index: {}]
  %s5 = sld [smem:[#allocation0]]
  $region73: #{decoder_forward.20} parent=0
    _
  %s7 = ssub.s32 1, %s5
  %s8 = scalar_select 0, %s7, %s5
  $region1: #{decoder_forward.20} parent=0
    #allocation5 [shape = 'u8[4096]{0}', space=vmem, size = 0x1000, scoped, tag = 'input window, operand 0']
    #allocation6 [shape = 's32[2]{0}', space=sflag, size = 0x8, scoped, tag = 'scoped memory for decoder_forward.20']
    #allocation7 [shape = 's32[2]{0}', space=sflag, size = 0x8, scoped, tag = 'scoped memory for decoder_forward.20']
    #allocation8 [shape = 'u8[4096]{0}', space=vmem, size = 0x1000, scoped, tag = 'input window, operand 1']
    #allocation9 [shape = 's32[2]{0}', space=sflag, size = 0x8, scoped, tag = 'scoped memory for decoder_forward.20']
    #allocation10 [shape = 'u8[4096]{0}', space=vmem, size = 0x1000, scoped, tag = 'input window, operand 2']
    #allocation11 [shape = 'u8[8192]{0}', space=vmem, size = 0x2000, scoped, tag = 'input window, operand 3']
    #allocation12 [shape = 's32[2]{0}', space=sflag, size = 0x8, scoped, tag = 'scoped memory for decoder_forward.20']
    #allocation13 [shape = 'u8[4096]{0}', space=vmem, size = 0x1000, scoped, tag = 'output window, operand 0']
    %9 = vsyncpa [#allocation6], 0
    %s10 = scalar_lea.sflag [#allocation6], 1
    %11 = vsyncpa %s10, 0
    %12 = vsyncpa [#allocation9], 0
    %s13 = scalar_lea.sflag [#allocation9], 1
    %14 = vsyncpa %s13, 0
    %15 = vsyncpa [#allocation12], 0
    %s16 = scalar_lea.sflag [#allocation12], 1
    %17 = vsyncpa %s16, 0
    %18 = vsyncpa [#allocation7], 0
    %s19 = scalar_lea.sflag [#allocation7], 1
    %20 = vsyncpa %s19, 0
    loop: start=0, step=1, limit=4
    $region2: #{decoder_forward.20} parent=1 // loop_pre_header
      _
    $region3: #{decoder_forward.20} parent=1 // loop_header
      %s22 = sphi 0, %s26
      %p23 = scmp.ge.s32.totalorder %s22, 4
      %s29 = sphi 0, %s48
      %s30 = sphi 0, %s44
      %s31 = sphi 0, %s40
      %s32 = sphi 0, %s29
      %s33 = sphi 0, %s30
      %s34 = sphi 0, %s31
      %s35 = sphi 0, %s32
      %s36 = sphi 0, %s33
      %s37 = sphi 0, %s34
      %s53 = sphi 0, %s55
      %s56 = sphi 0, %s53
      %s57 = sphi 0, %s56
      %s73 = sphi 0, %s57
      %s81 = sphi 0, %s83
      %s84 = sphi 0, %s81
      %s85 = sphi 0, %s84
      %s101 = sphi 0, %s85
      %s109 = sphi 0, %s111
      %s112 = sphi 0, %s109
      %s113 = sphi 0, %s112
      %s129 = sphi 0, %s113
      %s139 = sphi 0, %s141
      %s142 = sphi 0, %s139
      %s143 = sphi 0, %s142
      %s159 = sphi 0, %s143
      %s167 = sphi 0, %s169
      %s170 = sphi 0, %s167
      %s171 = sphi 0, %s170
      %s187 = sphi 0, %s171
    $region4: #{decoder_forward.20} parent=1 // loop_header_branch
      %25 = sbr.rel (%p23) target = $region8
    $region5: #{decoder_forward.20} parent=1 // loop_body
      %s27 = ssub.s32 %s22, 1
      %s28 = ssub.s32 %s22, 2
      %s38 = sadd.s32 1, %s31
      %p39 = scmp.ge.s32.totalorder %s38, 1
      %s40 = scalar_select %p39, 0, %s38
      %s41 = sadd.s32 1, %s30
      %s42 = scalar_select %p39, %s41, %s30
      %p43 = scmp.ge.s32.totalorder %s42, 1
      %s44 = scalar_select %p43, 0, %s42
      %s45 = sadd.s32 1, %s29
      %s46 = scalar_select %p43, %s45, %s29
      %p47 = scmp.ge.s32.totalorder %s46, 2
      %s48 = scalar_select %p47, 0, %s46
      %s49 = ssub.s32 %s29, %s48
      %s50 = ssub.s32 %s30, %s44
      %s51 = sor.u32 %s49, %s50
      %p52 = scmp.eq.s32.totalorder %s51, 0
      %s54 = sadd.s32 %s53, 1
      %s55 = scalar_select %p52, %s53, %s54
      %p58 = pneg %p52
      %p59 = scmp.eq.s32.totalorder %s22, 1
      %p60 = por %p58, %p59
      %p61 = scmp.ne.s32.totalorder %s53, %s56
      %p62 = scmp.eq.s32.totalorder %s22, 0
      %p63 = por %p61, %p62
      %p64 = scmp.ne.s32.totalorder %s53, %s56
      %p65 = scmp.eq.s32.totalorder %s27, 1
      %p66 = por %p64, %p65
      %p67 = scmp.ne.s32.totalorder %s56, %s57
      %p68 = scmp.eq.s32.totalorder %s27, 0
      %p69 = por %p67, %p68
      %p70 = scmp.ne.s32.totalorder %s56, %s57
      %p71 = scmp.eq.s32.totalorder %s28, 1
      %p72 = por %p70, %p71
      %p74 = scmp.ne.s32.totalorder %s57, %s73
      %p75 = scmp.eq.s32.totalorder %s28, 0
      %p76 = por %p74, %p75
      %s77 = ssub.s32 %s29, %s48
      %s78 = ssub.s32 %s31, %s40
      %s79 = sor.u32 %s77, %s78
      %p80 = scmp.eq.s32.totalorder %s79, 0
      %s82 = sadd.s32 %s81, 1
      %s83 = scalar_select %p80, %s81, %s82
      %p86 = pneg %p80
      %p87 = scmp.eq.s32.totalorder %s22, 1
      %p88 = por %p86, %p87
      %p89 = scmp.ne.s32.totalorder %s81, %s84
      %p90 = scmp.eq.s32.totalorder %s22, 0
      %p91 = por %p89, %p90
      %p92 = scmp.ne.s32.totalorder %s81, %s84
      %p93 = scmp.eq.s32.totalorder %s27, 1
      %p94 = por %p92, %p93
      %p95 = scmp.ne.s32.totalorder %s84, %s85
      %p96 = scmp.eq.s32.totalorder %s27, 0
      %p97 = por %p95, %p96
      %p98 = scmp.ne.s32.totalorder %s84, %s85
      %p99 = scmp.eq.s32.totalorder %s28, 1
      %p100 = por %p98, %p99
      %p102 = scmp.ne.s32.totalorder %s85, %s101
      %p103 = scmp.eq.s32.totalorder %s28, 0
      %p104 = por %p102, %p103
      %s105 = ssub.s32 %s29, %s48
      %s106 = ssub.s32 %s31, %s40
      %s107 = sor.u32 %s105, %s106
      %p108 = scmp.eq.s32.totalorder %s107, 0
      %s110 = sadd.s32 %s109, 1
      %s111 = scalar_select %p108, %s109, %s110
      %p114 = pneg %p108
      %p115 = scmp.eq.s32.totalorder %s22, 1
      %p116 = por %p114, %p115
      %p117 = scmp.ne.s32.totalorder %s109, %s112
      %p118 = scmp.eq.s32.totalorder %s22, 0
      %p119 = por %p117, %p118
      %p120 = scmp.ne.s32.totalorder %s109, %s112
      %p121 = scmp.eq.s32.totalorder %s27, 1
      %p122 = por %p120, %p121
      %p123 = scmp.ne.s32.totalorder %s112, %s113
      %p124 = scmp.eq.s32.totalorder %s27, 0
      %p125 = por %p123, %p124
      %p126 = scmp.ne.s32.totalorder %s112, %s113
      %p127 = scmp.eq.s32.totalorder %s28, 1
      %p128 = por %p126, %p127
      %p130 = scmp.ne.s32.totalorder %s113, %s129
      %p131 = scmp.eq.s32.totalorder %s28, 0
      %p132 = por %p130, %p131
      %s133 = ssub.s32 %s29, %s48
      %s134 = ssub.s32 %s30, %s44
      %s135 = sor.u32 %s133, %s134
      %s136 = ssub.s32 %s31, %s40
      %s137 = sor.u32 %s135, %s136
      %p138 = scmp.eq.s32.totalorder %s137, 0
      %s140 = sadd.s32 %s139, 1
      %s141 = scalar_select %p138, %s139, %s140
      %p144 = pneg %p138
      %p145 = scmp.eq.s32.totalorder %s22, 1
      %p146 = por %p144, %p145
      %p147 = scmp.ne.s32.totalorder %s139, %s142
      %p148 = scmp.eq.s32.totalorder %s22, 0
      %p149 = por %p147, %p148
      %p150 = scmp.ne.s32.totalorder %s139, %s142
      %p151 = scmp.eq.s32.totalorder %s27, 1
      %p152 = por %p150, %p151
      %p153 = scmp.ne.s32.totalorder %s142, %s143
      %p154 = scmp.eq.s32.totalorder %s27, 0
      %p155 = por %p153, %p154
      %p156 = scmp.ne.s32.totalorder %s142, %s143
      %p157 = scmp.eq.s32.totalorder %s28, 1
      %p158 = por %p156, %p157
      %p160 = scmp.ne.s32.totalorder %s143, %s159
      %p161 = scmp.eq.s32.totalorder %s28, 0
      %p162 = por %p160, %p161
      %s163 = ssub.s32 %s29, %s48
      %s164 = ssub.s32 %s30, %s44
      %s165 = sor.u32 %s163, %s164
      %p166 = scmp.eq.s32.totalorder %s165, 0
      %s168 = sadd.s32 %s167, 1
      %s169 = scalar_select %p166, %s167, %s168
      %p172 = pneg %p166
      %p173 = scmp.eq.s32.totalorder %s22, 1
      %p174 = por %p172, %p173
      %p175 = scmp.ne.s32.totalorder %s167, %s170
      %p176 = scmp.eq.s32.totalorder %s22, 0
      %p177 = por %p175, %p176
      %p178 = scmp.ne.s32.totalorder %s167, %s170
      %p179 = scmp.eq.s32.totalorder %s27, 1
      %p180 = por %p178, %p179
      %p181 = scmp.ne.s32.totalorder %s170, %s171
      %p182 = scmp.eq.s32.totalorder %s27, 0
      %p183 = por %p181, %p182
      %p184 = scmp.ne.s32.totalorder %s170, %s171
      %p185 = scmp.eq.s32.totalorder %s28, 1
      %p186 = por %p184, %p185
      %p188 = scmp.ne.s32.totalorder %s171, %s187
      %p189 = scmp.eq.s32.totalorder %s28, 0
      %p190 = por %p188, %p189
      %p191 = scmp.le.s32.totalorder 1, %s22
      %p192 = scmp.lt.s32.totalorder %s22, 3
      %p193 = pnand %p191, %p192
      %p194 = pneg %p193
      // Predicated region
      $region9: #{decoder_forward.20} parent=5 // pred_check
        _
      $region10: #{decoder_forward.20} parent=5 // pred_check_branch
        %196 = sbr.rel (%p193) target = $region12
      $region11: #{decoder_forward.20} parent=5 // pred_region
        %s197 = ssub.s32 %s22, 1
      $region12: #{decoder_forward.20} parent=5 // pred_fallthru
        _
      %p198 = scmp.lt.s32.totalorder %s22, 2
      // Predicated region
      $region13: #{decoder_forward.20} parent=5 // pred_check
        %p199 = pneg %p198
      $region14: #{decoder_forward.20} parent=5 // pred_check_branch
        %201 = sbr.rel (%p199) target = $region16
      $region15: #{decoder_forward.20} parent=5 // pred_region
        // Predicated region
        $region17: #{decoder_forward.20} parent=15 // pred_check
          %p202 = pneg %p63
        $region18: #{decoder_forward.20} parent=15 // pred_check_branch
          %204 = sbr.rel (%p202) target = $region20
        $region19: #{decoder_forward.20} parent=15 // pred_region
          %s205 = sand.u32 %s53, 1
          %s206 = scalar_lea.sflag [#allocation6], %s205
          %s207 = sand.u32 %s53, 1
          %s208 = smul.addr %s207, 4
          %s209 = scalar_lea.vmem [#allocation5], %s208
          %s211 = ssub.s32 64, 64
          %212 = vsyncadd %s206, %s211
          %s213 = sadd.s32 %s30, %s29
          %s214 = smul.addr %s213, 64
          %s215 = scalar_lea.hbm %s0, %s214
          %s217 = sshll.u32 %s209, 4
          %s218 = int_to_ptr.vmem [resolvable:$true] %s217
          %220 = dma.hbm_to_vmem [thread:$0]  %s215, 64, %s218, %s206
        $region20: #{decoder_forward.20} parent=15 // pred_fallthru
          _
        // Predicated region
        $region21: #{decoder_forward.20} parent=15 // pred_check
          %p221 = pneg %p91
        $region22: #{decoder_forward.20} parent=15 // pred_check_branch
          %223 = sbr.rel (%p221) target = $region24
        $region23: #{decoder_forward.20} parent=15 // pred_region
          %s224 = sand.u32 %s22, 1
          %s225 = scalar_lea.sflag [#allocation9], %s224
          %s226 = sand.u32 %s81, 1
          %s227 = smul.addr %s226, 4
          %s228 = scalar_lea.vmem [#allocation8], %s227
          %s230 = ssub.s32 64, 64
          %231 = vsyncadd %s225, %s230
          %s232 = sadd.s32 %s31, %s29
          %s233 = smul.addr %s232, 64
          %s234 = scalar_lea.hbm %s1, %s233
          %s236 = sshll.u32 %s228, 4
          %s237 = int_to_ptr.vmem [resolvable:$true] %s236
          %239 = dma.hbm_to_vmem [thread:$0]  %s234, 64, %s237, %s225
        $region24: #{decoder_forward.20} parent=15 // pred_fallthru
          _
        // Predicated region
        $region25: #{decoder_forward.20} parent=15 // pred_check
          %p240 = pneg %p119
        $region26: #{decoder_forward.20} parent=15 // pred_check_branch
          %242 = sbr.rel (%p240) target = $region28
        $region27: #{decoder_forward.20} parent=15 // pred_region
          %s243 = sand.u32 %s22, 1
          %s244 = scalar_lea.sflag [#allocation9], %s243
          %s245 = sand.u32 %s109, 1
          %s246 = smul.addr %s245, 4
          %s247 = scalar_lea.vmem [#allocation10], %s246
          %s249 = ssub.s32 64, 64
          %250 = vsyncadd %s244, %s249
          %s251 = sadd.s32 %s31, %s29
          %s252 = smul.addr %s251, 64
          %s253 = scalar_lea.hbm %s2, %s252
          %s255 = sshll.u32 %s247, 4
          %s256 = int_to_ptr.vmem [resolvable:$true] %s255
          %258 = dma.hbm_to_vmem [thread:$0]  %s253, 64, %s256, %s244
        $region28: #{decoder_forward.20} parent=15 // pred_fallthru
          _
        // Predicated region
        $region29: #{decoder_forward.20} parent=15 // pred_check
          %p259 = pneg %p149
        $region30: #{decoder_forward.20} parent=15 // pred_check_branch
          %261 = sbr.rel (%p259) target = $region32
        $region31: #{decoder_forward.20} parent=15 // pred_region
          %s262 = sand.u32 %s139, 1
          %s263 = scalar_lea.sflag [#allocation12], %s262
          %s264 = sand.u32 %s139, 1
          %s265 = smul.addr %s264, 8
          %s266 = scalar_lea.vmem [#allocation11], %s265
          %s268 = ssub.s32 128, 128
          %269 = vsyncadd %s263, %s268
          %s270 = sadd.s32 %s31, %s30
          %s271 = sadd.s32 %s270, %s29
          %s272 = smul.addr %s271, 128
          %s273 = scalar_lea.hbm %s3, %s272
          %s275 = sshll.u32 %s266, 4
          %s276 = int_to_ptr.vmem [resolvable:$true] %s275
          %278 = dma.hbm_to_vmem [thread:$0]  %s273, 128, %s276, %s263
        $region32: #{decoder_forward.20} parent=15 // pred_fallthru
          _
      $region16: #{decoder_forward.20} parent=5 // pred_fallthru
        _
      %p279 = scmp.le.s32.totalorder 1, %s22
      %p280 = scmp.lt.s32.totalorder %s22, 3
      %p281 = pnand %p279, %p280
      %p282 = pneg %p281
      // Predicated region
      $region33: #{decoder_forward.20} parent=5 // pred_check
        _
      $region34: #{decoder_forward.20} parent=5 // pred_check_branch
        %284 = sbr.rel (%p281) target = $region36
      $region35: #{decoder_forward.20} parent=5 // pred_region
        %s285 = ssub.s32 %s22, 1
        %s286 = sand.u32 %s56, 1
        %s287 = scalar_lea.sflag [#allocation6], %s286
        %s288 = sand.u32 %s56, 1
        %s289 = smul.addr %s288, 4
        %s290 = scalar_lea.vmem [#allocation5], %s289
        // Predicated region
        $region37: #{decoder_forward.20} parent=35 // pred_check
          %p291 = pneg %p69
        $region38: #{decoder_forward.20} parent=35 // pred_check_branch
          %293 = sbr.rel (%p291) target = $region40
        $region39: #{decoder_forward.20} parent=35 // pred_region
          %294 = dma.done %s287, 64
        $region40: #{decoder_forward.20} parent=35 // pred_fallthru
          _
        %s295 = sand.u32 %s27, 1
        %s296 = scalar_lea.sflag [#allocation9], %s295
        %s297 = sand.u32 %s84, 1
        %s298 = smul.addr %s297, 4
        %s299 = scalar_lea.vmem [#allocation8], %s298
        // Predicated region
        $region41: #{decoder_forward.20} parent=35 // pred_check
          %p300 = pneg %p97
        $region42: #{decoder_forward.20} parent=35 // pred_check_branch
          %302 = sbr.rel (%p300) target = $region44
        $region43: #{decoder_forward.20} parent=35 // pred_region
          %303 = dma.done %s296, 64
        $region44: #{decoder_forward.20} parent=35 // pred_fallthru
          _
        %s304 = sand.u32 %s27, 1
        %s305 = scalar_lea.sflag [#allocation9], %s304
        %s306 = sand.u32 %s112, 1
        %s307 = smul.addr %s306, 4
        %s308 = scalar_lea.vmem [#allocation10], %s307
        // Predicated region
        $region45: #{decoder_forward.20} parent=35 // pred_check
          %p309 = pneg %p125
        $region46: #{decoder_forward.20} parent=35 // pred_check_branch
          %311 = sbr.rel (%p309) target = $region48
        $region47: #{decoder_forward.20} parent=35 // pred_region
          %312 = dma.done %s305, 64
        $region48: #{decoder_forward.20} parent=35 // pred_fallthru
          _
        %s313 = sand.u32 %s142, 1
        %s314 = scalar_lea.sflag [#allocation12], %s313
        %s315 = sand.u32 %s142, 1
        %s316 = smul.addr %s315, 8
        %s317 = scalar_lea.vmem [#allocation11], %s316
        // Predicated region
        $region49: #{decoder_forward.20} parent=35 // pred_check
          %p318 = pneg %p155
        $region50: #{decoder_forward.20} parent=35 // pred_check_branch
          %320 = sbr.rel (%p318) target = $region52
        $region51: #{decoder_forward.20} parent=35 // pred_region
          %321 = dma.done %s314, 128
        $region52: #{decoder_forward.20} parent=35 // pred_fallthru
          _
        %s322 = sand.u32 %s56, 1
        %s323 = scalar_lea.sflag [#allocation6], %s322
        %s324 = sand.u32 %s56, 1
        %s325 = smul.addr %s324, 4
        %s326 = scalar_lea.vmem [#allocation5], %s325
        %p327 = pneg %p69
        %p328 = pneg %p66
        %s329 = sand.u32 %s27, 1
        %s330 = scalar_lea.sflag [#allocation9], %s329
        %s331 = sand.u32 %s84, 1
        %s332 = smul.addr %s331, 4
        %s333 = scalar_lea.vmem [#allocation8], %s332
        %p334 = pneg %p97
        %p335 = pneg %p94
        %s336 = sand.u32 %s27, 1
        %s337 = scalar_lea.sflag [#allocation9], %s336
        %s338 = sand.u32 %s112, 1
        %s339 = smul.addr %s338, 4
        %s340 = scalar_lea.vmem [#allocation10], %s339
        %p341 = pneg %p125
        %p342 = pneg %p122
        %s343 = sand.u32 %s142, 1
        %s344 = scalar_lea.sflag [#allocation12], %s343
        %s345 = sand.u32 %s142, 1
        %s346 = smul.addr %s345, 8
        %s347 = scalar_lea.vmem [#allocation11], %s346
        %p348 = pneg %p155
        %p349 = pneg %p152
        %p350 = pneg %p183
        %p351 = pneg %p180
        %s352 = sand.u32 %s170, 1
        %s353 = scalar_lea.sflag [#allocation7], %s352
        %s354 = sand.u32 %s170, 1
        %s355 = smul.addr %s354, 4
        %s356 = scalar_lea.vmem [#allocation13], %s355
        %p358 = scmp.eq.s32.totalorder %s34, 0
        // Predicated region
        $region53: #{decoder_forward.20} parent=35 // pred_check
          %p359 = pneg %p358
        $region54: #{decoder_forward.20} parent=35 // pred_check_branch
          %361 = sbr.rel (%p359) target = $region56
        $region55: #{decoder_forward.20} parent=35 // pred_region
          %vm362 = vcmask 7168
          %363 = vst.msk [vmem:[#allocation2] sm:$0xff] %vm362, -1e+30
          %364 = vst.msk [vmem:[#allocation2 + $0x8] sm:$0xff] %vm362, -1e+30
          %365 = vst.msk [vmem:[#allocation2 + $0x10] sm:$0xff] %vm362, -1e+30
          %366 = vst.msk [vmem:[#allocation2 + $0x18] sm:$0xff] %vm362, -1e+30
          %367 = vst.msk [vmem:[#allocation3] sm:$0xff] %vm362, 0.0
          %368 = vst.msk [vmem:[#allocation3 + $0x8] sm:$0xff] %vm362, 0.0
          %369 = vst.msk [vmem:[#allocation3 + $0x10] sm:$0xff] %vm362, 0.0
          %370 = vst.msk [vmem:[#allocation3 + $0x18] sm:$0xff] %vm362, 0.0
          %vm371 = vcmask 261120
          %372 = vst.msk [vmem:[#allocation4] sm:$0xff] %vm371, 0.0
        $region56: #{decoder_forward.20} parent=35 // pred_fallthru
          _
        %v373 = vld [vmem:[%s290] sm:$0xf]
        %v374 = vld [vmem:[%s299] sm:$0xf]
        %v375 = vld [vmem:[%s308] sm:$0xf]
        %v376 = vld [vmem:[%s317] sm:$0xff]
        %vm377 = vcmask 64512
        %v379 = vsel %vm377, %v373, 0
        %v382 = vsel %vm377, %v374, 0
        %384 = vmatprep.subr.bf16.mxu0 0
        %385 = vmatpush1.bf16.xpose.msra.mxu0 %v382
        %386 = vmatprep.subr.bf16.mxu0 0
        %387 = vmatpush1.bf16.xpose.msra.mxu0 0
        %388 = vmatprep.subr.bf16.mxu0 0
        %389 = vmatpush1.bf16.xpose.msra.mxu0 0
        %390 = vmatprep.subr.bf16.mxu0 0
        %391 = vmatpush1.bf16.xpose.msra.mxu0 0
        %392 = vmatprep.subr.bf16.mxu0 0
        %393 = vmatpush1.bf16.xpose.msra.mxu0 0
        %394 = vmatprep.subr.bf16.mxu0 0
        %395 = vmatpush1.bf16.xpose.msra.mxu0 0
        %396 = vmatprep.subr.bf16.mxu0 0
        %397 = vmatpush1.bf16.xpose.msra.mxu0 0
        %398 = vmatprep.subr.bf16.mxu0 0
        %399 = vmatpush1.bf16.xpose.msra.mxu0 0
        %400 = vmatprep.subr.bf16.mxu0 0
        %401 = vmatpush1.bf16.xpose.msra.mxu0 0
        %402 = vmatprep.subr.bf16.mxu0 0
        %403 = vmatpush1.bf16.xpose.msra.mxu0 0
        %404 = vmatprep.subr.bf16.mxu0 0
        %405 = vmatpush1.bf16.xpose.msra.mxu0 0
        %406 = vmatprep.subr.bf16.mxu0 0
        %407 = vmatpush1.bf16.xpose.msra.mxu0 0
        %408 = vmatprep.subr.bf16.mxu0 0
        %409 = vmatpush1.bf16.xpose.msra.mxu0 0
        %410 = vmatprep.subr.bf16.mxu0 0
        %411 = vmatpush1.bf16.xpose.msra.mxu0 0
        %412 = vmatprep.subr.bf16.mxu0 0
        %413 = vmatpush1.bf16.xpose.msra.mxu0 0
        %414 = vmatprep.subr.bf16.mxu0 0
        %415 = vmatpush1.bf16.xpose.msra.mxu0 0
        %416 = vmatprep.mubr.bf16.mxu0 0
        %417 = vmatmul.mubr.bf16.gmra.mrb[0].mxu0 %v379
        %v418 = vpop.f32.mrb[0].mxu0
        %v419 = vadd.f32 0.0, %v418
        %v420 = vpop.f32.mrb[0].mxu0
        %v421 = vpop.f32.mrb[0].mxu0
        %v422 = vpop.f32.mrb[0].mxu0
        %423 = vdwg.mxu0
        %v424 = vmul.f32 %v419, 0.35355338
        %vm425 = vcmp.gt.f32.partialorder %v376, 0.0
        %v426 = vsel %vm425, %v424, -1e+09
        %v427 = vld [vmem:[#allocation2] sm:$0xff]
        %v428 = vsel %vm377, %v426, -inf
        %429 = vmax.xlane.f32.xlu0 %v428
        %v430 = vpop.xlane.xlu0 %429
        %v431 = vmax.f32 %v427, %v430
        %v432 = vsub.f32 %v427, %v431
        %v433 = vmul.f32 %v432, 1.442695
        %v434 = vpow.pop %v433
        %436 = vset.pattern.permute.xlu0 0
        %437 = vperm.xlu0 %436, %v431
        %v438 = vpop.permute.xlu0 %437
        %v440 = vsub.f32 %v426, %v438
        %v441 = vmul.f32 %v440, 1.442695
        %v442 = vpow.pop %v441
        %v443 = vld [vmem:[#allocation3] sm:$0xff]
        %v444 = vmul.f32 %v434, %v443
        %v445 = vsel %vm377, %v442, 0.0
        %446 = vadd.xlane.f32.xlu0 %v445
        %v447 = vpop.xlane.xlu0 %446
        %v448 = vadd.f32 %v444, %v447
        %vm449 = vcmask 7168
        %450 = vst.msk [vmem:[#allocation3] sm:$0xff] %vm449, %v448
        %v451 = vpack.c.bf16 %v442, %v442
        %v453 = vsel %vm377, %v451, 0
        %vm455 = vcmask 1043456
        %v457 = vsel %vm455, %v375, 0
        %459 = vmatprep.subr.bf16.mxu0 0
        %460 = vmatpush1.bf16.msra.mxu0 %v457
        %461 = vmatprep.subr.bf16.mxu0 0
        %462 = vmatpush1.bf16.msra.mxu0 0
        %463 = vmatprep.subr.bf16.mxu0 0
        %464 = vmatpush1.bf16.msra.mxu0 0
        %465 = vmatprep.subr.bf16.mxu0 0
        %466 = vmatpush1.bf16.msra.mxu0 0
        %467 = vmatprep.subr.bf16.mxu0 0
        %468 = vmatpush1.bf16.msra.mxu0 0
        %469 = vmatprep.subr.bf16.mxu0 0
        %470 = vmatpush1.bf16.msra.mxu0 0
        %471 = vmatprep.subr.bf16.mxu0 0
        %472 = vmatpush1.bf16.msra.mxu0 0
        %473 = vmatprep.subr.bf16.mxu0 0
        %474 = vmatpush1.bf16.msra.mxu0 0
        %475 = vmatprep.subr.bf16.mxu0 0
        %476 = vmatpush1.bf16.msra.mxu0 0
        %477 = vmatprep.subr.bf16.mxu0 0
        %478 = vmatpush1.bf16.msra.mxu0 0
        %479 = vmatprep.subr.bf16.mxu0 0
        %480 = vmatpush1.bf16.msra.mxu0 0
        %481 = vmatprep.subr.bf16.mxu0 0
        %482 = vmatpush1.bf16.msra.mxu0 0
        %483 = vmatprep.subr.bf16.mxu0 0
        %484 = vmatpush1.bf16.msra.mxu0 0
        %485 = vmatprep.subr.bf16.mxu0 0
        %486 = vmatpush1.bf16.msra.mxu0 0
        %487 = vmatprep.subr.bf16.mxu0 0
        %488 = vmatpush1.bf16.msra.mxu0 0
        %489 = vmatprep.subr.bf16.mxu0 0
        %490 = vmatpush1.bf16.msra.mxu0 0
        %491 = vmatprep.mubr.bf16.mxu0 0
        %492 = vmatmul.mubr.bf16.gmra.mrb[0].mxu0 %v453
        %v493 = vpop.f32.mrb[0].mxu0
        %v494 = vadd.f32 0.0, %v493
        %v495 = vpop.f32.mrb[0].mxu0
        %v496 = vpop.f32.mrb[0].mxu0
        %v497 = vpop.f32.mrb[0].mxu0
        %498 = vdwg.mxu0
        %v499 = vld [vmem:[#allocation4] sm:$0xff]
        %501 = vset.pattern.permute.xlu0 0
        %502 = vperm.xlu0 %501, %v434
        %v503 = vpop.permute.xlu0 %502
        %v505 = vmul.f32 %v503, %v499
        %v506 = vadd.f32 %v505, %v494
        %507 = vst.msk [vmem:[#allocation4] sm:$0xff] %vm377, %v506
        %508 = vst.msk [vmem:[#allocation2] sm:$0xff] %vm449, %v431
        %v510 = vunpack.c.l.b16 %v373
        %v511 = vpack.c.b16 %v510, %v510
        %512 = vrot.lane.b32.xlu0 %v511, 120
        %v513 = vpop.permute.xlu0 %512
        %v515 = vunpack.c.l.b16 %v374
        %v516 = vpack.c.b16 %v515, %v515
        %517 = vrot.lane.b32.xlu0 %v516, 120
        %v518 = vpop.permute.xlu0 %517
        %v520 = vsel %vm377, %v513, 0
        %v523 = vsel %vm377, %v518, 0
        %525 = vmatprep.subr.bf16.mxu0 0
        %526 = vmatpush1.bf16.xpose.msra.mxu0 %v523
        %527 = vmatprep.subr.bf16.mxu0 0
        %528 = vmatpush1.bf16.xpose.msra.mxu0 0
        %529 = vmatprep.subr.bf16.mxu0 0
        %530 = vmatpush1.bf16.xpose.msra.mxu0 0
        %531 = vmatprep.subr.bf16.mxu0 0
        %532 = vmatpush1.bf16.xpose.msra.mxu0 0
        %533 = vmatprep.subr.bf16.mxu0 0
        %534 = vmatpush1.bf16.xpose.msra.mxu0 0
        %535 = vmatprep.subr.bf16.mxu0 0
        %536 = vmatpush1.bf16.xpose.msra.mxu0 0
        %537 = vmatprep.subr.bf16.mxu0 0
        %538 = vmatpush1.bf16.xpose.msra.mxu0 0
        %539 = vmatprep.subr.bf16.mxu0 0
        %540 = vmatpush1.bf16.xpose.msra.mxu0 0
        %541 = vmatprep.subr.bf16.mxu0 0
        %542 = vmatpush1.bf16.xpose.msra.mxu0 0
        %543 = vmatprep.subr.bf16.mxu0 0
        %544 = vmatpush1.bf16.xpose.msra.mxu0 0
        %545 = vmatprep.subr.bf16.mxu0 0
        %546 = vmatpush1.bf16.xpose.msra.mxu0 0
        %547 = vmatprep.subr.bf16.mxu0 0
        %548 = vmatpush1.bf16.xpose.msra.mxu0 0
        %549 = vmatprep.subr.bf16.mxu0 0
        %550 = vmatpush1.bf16.xpose.msra.mxu0 0
        %551 = vmatprep.subr.bf16.mxu0 0
        %552 = vmatpush1.bf16.xpose.msra.mxu0 0
        %553 = vmatprep.subr.bf16.mxu0 0
        %554 = vmatpush1.bf16.xpose.msra.mxu0 0
        %555 = vmatprep.subr.bf16.mxu0 0
        %556 = vmatpush1.bf16.xpose.msra.mxu0 0
        %557 = vmatprep.mubr.bf16.mxu0 0
        %558 = vmatmul.mubr.bf16.gmra.mrb[0].mxu0 %v520
        %v559 = vpop.f32.mrb[0].mxu0
        %v560 = vadd.f32 0.0, %v559
        %v561 = vpop.f32.mrb[0].mxu0
        %v562 = vpop.f32.mrb[0].mxu0
        %v563 = vpop.f32.mrb[0].mxu0
        %564 = vdwg.mxu0
        %v565 = vmul.f32 %v560, 0.35355338
        %v566 = vsel %vm425, %v565, -1e+09
        %s567 = scalar_lea.vmem [#allocation2], 8
        %v568 = vld [vmem:[%s567] sm:$0xff]
        %v569 = vsel %vm377, %v566, -inf
        %570 = vmax.xlane.f32.xlu0 %v569
        %v571 = vpop.xlane.xlu0 %570
        %v572 = vmax.f32 %v568, %v571
        %v573 = vsub.f32 %v568, %v572
        %v574 = vmul.f32 %v573, 1.442695
        %v575 = vpow.pop %v574
        %577 = vset.pattern.permute.xlu0 0
        %578 = vperm.xlu0 %577, %v572
        %v579 = vpop.permute.xlu0 %578
        %v581 = vsub.f32 %v566, %v579
        %v582 = vmul.f32 %v581, 1.442695
        %v583 = vpow.pop %v582
        %s584 = scalar_lea.vmem [#allocation3], 8
        %v585 = vld [vmem:[%s584] sm:$0xff]
        %v586 = vmul.f32 %v575, %v585
        %v587 = vsel %vm377, %v583, 0.0
        %588 = vadd.xlane.f32.xlu0 %v587
        %v589 = vpop.xlane.xlu0 %588
        %v590 = vadd.f32 %v586, %v589
        %591 = vst.msk [vmem:[%s584] sm:$0xff] %vm449, %v590
        %v592 = vpack.c.bf16 %v583, %v583
        %v594 = vunpack.c.l.b16 %v375
        %v595 = vpack.c.b16 %v594, %v594
        %596 = vrot.lane.b32.xlu0 %v595, 120
        %v597 = vpop.permute.xlu0 %596
        %v599 = vsel %vm377, %v592, 0
        %v602 = vsel %vm455, %v597, 0
        %604 = vmatprep.subr.bf16.mxu0 0
        %605 = vmatpush1.bf16.msra.mxu0 %v602
        %606 = vmatprep.subr.bf16.mxu0 0
        %607 = vmatpush1.bf16.msra.mxu0 0
        %608 = vmatprep.subr.bf16.mxu0 0
        %609 = vmatpush1.bf16.msra.mxu0 0
        %610 = vmatprep.subr.bf16.mxu0 0
        %611 = vmatpush1.bf16.msra.mxu0 0
        %612 = vmatprep.subr.bf16.mxu0 0
        %613 = vmatpush1.bf16.msra.mxu0 0
        %614 = vmatprep.subr.bf16.mxu0 0
        %615 = vmatpush1.bf16.msra.mxu0 0
        %616 = vmatprep.subr.bf16.mxu0 0
        %617 = vmatpush1.bf16.msra.mxu0 0
        %618 = vmatprep.subr.bf16.mxu0 0
        %619 = vmatpush1.bf16.msra.mxu0 0
        %620 = vmatprep.subr.bf16.mxu0 0
        %621 = vmatpush1.bf16.msra.mxu0 0
        %622 = vmatprep.subr.bf16.mxu0 0
        %623 = vmatpush1.bf16.msra.mxu0 0
        %624 = vmatprep.subr.bf16.mxu0 0
        %625 = vmatpush1.bf16.msra.mxu0 0
        %626 = vmatprep.subr.bf16.mxu0 0
        %627 = vmatpush1.bf16.msra.mxu0 0
        %628 = vmatprep.subr.bf16.mxu0 0
        %629 = vmatpush1.bf16.msra.mxu0 0
        %630 = vmatprep.subr.bf16.mxu0 0
        %631 = vmatpush1.bf16.msra.mxu0 0
        %632 = vmatprep.subr.bf16.mxu0 0
        %633 = vmatpush1.bf16.msra.mxu0 0
        %634 = vmatprep.subr.bf16.mxu0 0
        %635 = vmatpush1.bf16.msra.mxu0 0
        %636 = vmatprep.mubr.bf16.mxu0 0
        %637 = vmatmul.mubr.bf16.gmra.mrb[0].mxu0 %v599
        %v638 = vpop.f32.mrb[0].mxu0
        %v639 = vadd.f32 0.0, %v638
        %v640 = vpop.f32.mrb[0].mxu0
        %v641 = vpop.f32.mrb[0].mxu0
        %v642 = vpop.f32.mrb[0].mxu0
        %643 = vdwg.mxu0
        %v644 = vld [vmem:[#allocation4] sm:$0xff]
        %646 = vset.pattern.permute.xlu0 0
        %647 = vperm.xlu0 %646, %v575
        %v648 = vpop.permute.xlu0 %647
        %v650 = vmul.f32 %v648, %v644
        %652 = vrot.lane.b32.xlu0 %v639, 8
        %v653 = vpop.permute.xlu0 %652
        %v655 = vadd.f32 %v650, %v653
        %vm656 = vcmask 130112
        %657 = vst.msk [vmem:[#allocation4] sm:$0xff] %vm656, %v655
        %658 = vst.msk [vmem:[%s567] sm:$0xff] %vm449, %v572
        %659 = vrot.lane.b32.xlu0 %v511, 112
        %v660 = vpop.permute.xlu0 %659
        %661 = vrot.lane.b32.xlu0 %v516, 112
        %v662 = vpop.permute.xlu0 %661
        %v664 = vsel %vm377, %v660, 0
        %v667 = vsel %vm377, %v662, 0
        %669 = vmatprep.subr.bf16.mxu0 0
        %670 = vmatpush1.bf16.xpose.msra.mxu0 %v667
        %671 = vmatprep.subr.bf16.mxu0 0
        %672 = vmatpush1.bf16.xpose.msra.mxu0 0
        %673 = vmatprep.subr.bf16.mxu0 0
        %674 = vmatpush1.bf16.xpose.msra.mxu0 0
        %675 = vmatprep.subr.bf16.mxu0 0
        %676 = vmatpush1.bf16.xpose.msra.mxu0 0
        %677 = vmatprep.subr.bf16.mxu0 0
        %678 = vmatpush1.bf16.xpose.msra.mxu0 0
        %679 = vmatprep.subr.bf16.mxu0 0
        %680 = vmatpush1.bf16.xpose.msra.mxu0 0
        %681 = vmatprep.subr.bf16.mxu0 0
        %682 = vmatpush1.bf16.xpose.msra.mxu0 0
        %683 = vmatprep.subr.bf16.mxu0 0
        %684 = vmatpush1.bf16.xpose.msra.mxu0 0
        %685 = vmatprep.subr.bf16.mxu0 0
        %686 = vmatpush1.bf16.xpose.msra.mxu0 0
        %687 = vmatprep.subr.bf16.mxu0 0
        %688 = vmatpush1.bf16.xpose.msra.mxu0 0
        %689 = vmatprep.subr.bf16.mxu0 0
        %690 = vmatpush1.bf16.xpose.msra.mxu0 0
        %691 = vmatprep.subr.bf16.mxu0 0
        %692 = vmatpush1.bf16.xpose.msra.mxu0 0
        %693 = vmatprep.subr.bf16.mxu0 0
        %694 = vmatpush1.bf16.xpose.msra.mxu0 0
        %695 = vmatprep.subr.bf16.mxu0 0
        %696 = vmatpush1.bf16.xpose.msra.mxu0 0
        %697 = vmatprep.subr.bf16.mxu0 0
        %698 = vmatpush1.bf16.xpose.msra.mxu0 0
        %699 = vmatprep.subr.bf16.mxu0 0
        %700 = vmatpush1.bf16.xpose.msra.mxu0 0
        %701 = vmatprep.mubr.bf16.mxu0 0
        %702 = vmatmul.mubr.bf16.gmra.mrb[0].mxu0 %v664
        %v703 = vpop.f32.mrb[0].mxu0
        %v704 = vadd.f32 0.0, %v703
        %v705 = vpop.f32.mrb[0].mxu0
        %v706 = vpop.f32.mrb[0].mxu0
        %v707 = vpop.f32.mrb[0].mxu0
        %708 = vdwg.mxu0
        %v709 = vmul.f32 %v704, 0.35355338
        %v710 = vsel %vm425, %v709, -1e+09
        %s711 = scalar_lea.vmem [#allocation2], 16
        %v712 = vld [vmem:[%s711] sm:$0xff]
        %v713 = vsel %vm377, %v710, -inf
        %714 = vmax.xlane.f32.xlu0 %v713
        %v715 = vpop.xlane.xlu0 %714
        %v716 = vmax.f32 %v712, %v715
        %v717 = vsub.f32 %v712, %v716
        %v718 = vmul.f32 %v717, 1.442695
        %v719 = vpow.pop %v718
        %721 = vset.pattern.permute.xlu0 0
        %722 = vperm.xlu0 %721, %v716
        %v723 = vpop.permute.xlu0 %722
        %v725 = vsub.f32 %v710, %v723
        %v726 = vmul.f32 %v725, 1.442695
        %v727 = vpow.pop %v726
        %s728 = scalar_lea.vmem [#allocation3], 16
        %v729 = vld [vmem:[%s728] sm:$0xff]
        %v730 = vmul.f32 %v719, %v729
        %v731 = vsel %vm377, %v727, 0.0
        %732 = vadd.xlane.f32.xlu0 %v731
        %v733 = vpop.xlane.xlu0 %732
        %v734 = vadd.f32 %v730, %v733
        %735 = vst.msk [vmem:[%s728] sm:$0xff] %vm449, %v734
        %v736 = vpack.c.bf16 %v727, %v727
        %737 = vrot.lane.b32.xlu0 %v595, 112
        %v738 = vpop.permute.xlu0 %737
        %v740 = vsel %vm377, %v736, 0
        %v743 = vsel %vm455, %v738, 0
        %745 = vmatprep.subr.bf16.mxu0 0
        %746 = vmatpush1.bf16.msra.mxu0 %v743
        %747 = vmatprep.subr.bf16.mxu0 0
        %748 = vmatpush1.bf16.msra.mxu0 0
        %749 = vmatprep.subr.bf16.mxu0 0
        %750 = vmatpush1.bf16.msra.mxu0 0
        %751 = vmatprep.subr.bf16.mxu0 0
        %752 = vmatpush1.bf16.msra.mxu0 0
        %753 = vmatprep.subr.bf16.mxu0 0
        %754 = vmatpush1.bf16.msra.mxu0 0
        %755 = vmatprep.subr.bf16.mxu0 0
        %756 = vmatpush1.bf16.msra.mxu0 0
        %757 = vmatprep.subr.bf16.mxu0 0
        %758 = vmatpush1.bf16.msra.mxu0 0
        %759 = vmatprep.subr.bf16.mxu0 0
        %760 = vmatpush1.bf16.msra.mxu0 0
        %761 = vmatprep.subr.bf16.mxu0 0
        %762 = vmatpush1.bf16.msra.mxu0 0
        %763 = vmatprep.subr.bf16.mxu0 0
        %764 = vmatpush1.bf16.msra.mxu0 0
        %765 = vmatprep.subr.bf16.mxu0 0
        %766 = vmatpush1.bf16.msra.mxu0 0
        %767 = vmatprep.subr.bf16.mxu0 0
        %768 = vmatpush1.bf16.msra.mxu0 0
        %769 = vmatprep.subr.bf16.mxu0 0
        %770 = vmatpush1.bf16.msra.mxu0 0
        %771 = vmatprep.subr.bf16.mxu0 0
        %772 = vmatpush1.bf16.msra.mxu0 0
        %773 = vmatprep.subr.bf16.mxu0 0
        %774 = vmatpush1.bf16.msra.mxu0 0
        %775 = vmatprep.subr.bf16.mxu0 0
        %776 = vmatpush1.bf16.msra.mxu0 0
        %777 = vmatprep.mubr.bf16.mxu0 0
        %778 = vmatmul.mubr.bf16.gmra.mrb[0].mxu0 %v740
        %v779 = vpop.f32.mrb[0].mxu0
        %v780 = vadd.f32 0.0, %v779
        %v781 = vpop.f32.mrb[0].mxu0
        %v782 = vpop.f32.mrb[0].mxu0
        %v783 = vpop.f32.mrb[0].mxu0
        %784 = vdwg.mxu0
        %v785 = vld [vmem:[#allocation4] sm:$0xff]
        %787 = vset.pattern.permute.xlu0 0
        %788 = vperm.xlu0 %787, %v719
        %v789 = vpop.permute.xlu0 %788
        %v791 = vmul.f32 %v789, %v785
        %793 = vrot.lane.b32.xlu0 %v780, 16
        %v794 = vpop.permute.xlu0 %793
        %v796 = vadd.f32 %v791, %v794
        %vm797 = vcmask 195712
        %798 = vst.msk [vmem:[#allocation4] sm:$0xff] %vm797, %v796
        %799 = vst.msk [vmem:[%s711] sm:$0xff] %vm449, %v716
        %800 = vrot.lane.b32.xlu0 %v511, 104
        %v801 = vpop.permute.xlu0 %800
        %802 = vrot.lane.b32.xlu0 %v516, 104
        %v803 = vpop.permute.xlu0 %802
        %v805 = vsel %vm377, %v801, 0
        %v808 = vsel %vm377, %v803, 0
        %810 = vmatprep.subr.bf16.mxu0 0
        %811 = vmatpush1.bf16.xpose.msra.mxu0 %v808
        %812 = vmatprep.subr.bf16.mxu0 0
        %813 = vmatpush1.bf16.xpose.msra.mxu0 0
        %814 = vmatprep.subr.bf16.mxu0 0
        %815 = vmatpush1.bf16.xpose.msra.mxu0 0
        %816 = vmatprep.subr.bf16.mxu0 0
        %817 = vmatpush1.bf16.xpose.msra.mxu0 0
        %818 = vmatprep.subr.bf16.mxu0 0
        %819 = vmatpush1.bf16.xpose.msra.mxu0 0
        %820 = vmatprep.subr.bf16.mxu0 0
        %821 = vmatpush1.bf16.xpose.msra.mxu0 0
        %822 = vmatprep.subr.bf16.mxu0 0
        %823 = vmatpush1.bf16.xpose.msra.mxu0 0
        %824 = vmatprep.subr.bf16.mxu0 0
        %825 = vmatpush1.bf16.xpose.msra.mxu0 0
        %826 = vmatprep.subr.bf16.mxu0 0
        %827 = vmatpush1.bf16.xpose.msra.mxu0 0
        %828 = vmatprep.subr.bf16.mxu0 0
        %829 = vmatpush1.bf16.xpose.msra.mxu0 0
        %830 = vmatprep.subr.bf16.mxu0 0
        %831 = vmatpush1.bf16.xpose.msra.mxu0 0
        %832 = vmatprep.subr.bf16.mxu0 0
        %833 = vmatpush1.bf16.xpose.msra.mxu0 0
        %834 = vmatprep.subr.bf16.mxu0 0
        %835 = vmatpush1.bf16.xpose.msra.mxu0 0
        %836 = vmatprep.subr.bf16.mxu0 0
        %837 = vmatpush1.bf16.xpose.msra.mxu0 0
        %838 = vmatprep.subr.bf16.mxu0 0
        %839 = vmatpush1.bf16.xpose.msra.mxu0 0
        %840 = vmatprep.subr.bf16.mxu0 0
        %841 = vmatpush1.bf16.xpose.msra.mxu0 0
        %842 = vmatprep.mubr.bf16.mxu0 0
        %843 = vmatmul.mubr.bf16.gmra.mrb[0].mxu0 %v805
        %v844 = vpop.f32.mrb[0].mxu0
        %v845 = vadd.f32 0.0, %v844
        %v846 = vpop.f32.mrb[0].mxu0
        %v847 = vpop.f32.mrb[0].mxu0
        %v848 = vpop.f32.mrb[0].mxu0
        %849 = vdwg.mxu0
        %v850 = vmul.f32 %v845, 0.35355338
        %v851 = vsel %vm425, %v850, -1e+09
        %s852 = scalar_lea.vmem [#allocation2], 24
        %v853 = vld [vmem:[%s852] sm:$0xff]
        %v854 = vsel %vm377, %v851, -inf
        %855 = vmax.xlane.f32.xlu0 %v854
        %v856 = vpop.xlane.xlu0 %855
        %v857 = vmax.f32 %v853, %v856
        %v858 = vsub.f32 %v853, %v857
        %v859 = vmul.f32 %v858, 1.442695
        %v860 = vpow.pop %v859
        %862 = vset.pattern.permute.xlu0 0
        %863 = vperm.xlu0 %862, %v857
        %v864 = vpop.permute.xlu0 %863
        %v866 = vsub.f32 %v851, %v864
        %v867 = vmul.f32 %v866, 1.442695
        %v868 = vpow.pop %v867
        %s869 = scalar_lea.vmem [#allocation3], 24
        %v870 = vld [vmem:[%s869] sm:$0xff]
        %v871 = vmul.f32 %v860, %v870
        %v872 = vsel %vm377, %v868, 0.0
        %873 = vadd.xlane.f32.xlu0 %v872
        %v874 = vpop.xlane.xlu0 %873
        %v875 = vadd.f32 %v871, %v874
        %876 = vst.msk [vmem:[%s869] sm:$0xff] %vm449, %v875
        %v877 = vpack.c.bf16 %v868, %v868
        %878 = vrot.lane.b32.xlu0 %v595, 104
        %v879 = vpop.permute.xlu0 %878
        %v881 = vsel %vm377, %v877, 0
        %v884 = vsel %vm455, %v879, 0
        %886 = vmatprep.subr.bf16.mxu0 0
        %887 = vmatpush1.bf16.msra.mxu0 %v884
        %888 = vmatprep.subr.bf16.mxu0 0
        %889 = vmatpush1.bf16.msra.mxu0 0
        %890 = vmatprep.subr.bf16.mxu0 0
        %891 = vmatpush1.bf16.msra.mxu0 0
        %892 = vmatprep.subr.bf16.mxu0 0
        %893 = vmatpush1.bf16.msra.mxu0 0
        %894 = vmatprep.subr.bf16.mxu0 0
        %895 = vmatpush1.bf16.msra.mxu0 0
        %896 = vmatprep.subr.bf16.mxu0 0
        %897 = vmatpush1.bf16.msra.mxu0 0
        %898 = vmatprep.subr.bf16.mxu0 0
        %899 = vmatpush1.bf16.msra.mxu0 0
        %900 = vmatprep.subr.bf16.mxu0 0
        %901 = vmatpush1.bf16.msra.mxu0 0
        %902 = vmatprep.subr.bf16.mxu0 0
        %903 = vmatpush1.bf16.msra.mxu0 0
        %904 = vmatprep.subr.bf16.mxu0 0
        %905 = vmatpush1.bf16.msra.mxu0 0
        %906 = vmatprep.subr.bf16.mxu0 0
        %907 = vmatpush1.bf16.msra.mxu0 0
        %908 = vmatprep.subr.bf16.mxu0 0
        %909 = vmatpush1.bf16.msra.mxu0 0
        %910 = vmatprep.subr.bf16.mxu0 0
        %911 = vmatpush1.bf16.msra.mxu0 0
        %912 = vmatprep.subr.bf16.mxu0 0
        %913 = vmatpush1.bf16.msra.mxu0 0
        %914 = vmatprep.subr.bf16.mxu0 0
        %915 = vmatpush1.bf16.msra.mxu0 0
        %916 = vmatprep.subr.bf16.mxu0 0
        %917 = vmatpush1.bf16.msra.mxu0 0
        %918 = vmatprep.mubr.bf16.mxu0 0
        %919 = vmatmul.mubr.bf16.gmra.mrb[0].mxu0 %v881
        %v920 = vpop.f32.mrb[0].mxu0
        %v921 = vadd.f32 0.0, %v920
        %v922 = vpop.f32.mrb[0].mxu0
        %v923 = vpop.f32.mrb[0].mxu0
        %v924 = vpop.f32.mrb[0].mxu0
        %925 = vdwg.mxu0
        %v926 = vld [vmem:[#allocation4] sm:$0xff]
        %928 = vset.pattern.permute.xlu0 0
        %929 = vperm.xlu0 %928, %v860
        %v930 = vpop.permute.xlu0 %929
        %v932 = vmul.f32 %v930, %v926
        %934 = vrot.lane.b32.xlu0 %v921, 24
        %v935 = vpop.permute.xlu0 %934
        %v937 = vadd.f32 %v932, %v935
        %vm938 = vcmask 261312
        %939 = vst.msk [vmem:[#allocation4] sm:$0xff] %vm938, %v937
        %940 = vst.msk [vmem:[%s852] sm:$0xff] %vm449, %v857
        // Predicated region
        $region57: #{decoder_forward.20} parent=35 // pred_check
          %p941 = pneg %p358
        $region58: #{decoder_forward.20} parent=35 // pred_check_branch
          %943 = sbr.rel (%p941) target = $region60
        $region59: #{decoder_forward.20} parent=35 // pred_region
          %v944 = vld [vmem:[#allocation3] sm:$0xff]
          %v945 = vrcp.pop %v944
          %v946 = vld [vmem:[#allocation4] sm:$0xff]
          %948 = vset.pattern.permute.xlu0 0
          %949 = vperm.xlu0 %948, %v945
          %v950 = vpop.permute.xlu0 %949
          %v952 = vmul.f32 %v946, %v950
          %953 = vst.msk [vmem:[#allocation4] sm:$0xff] %vm377, %v952
          %v954 = vld [vmem:[%s584] sm:$0xff]
          %v955 = vrcp.pop %v954
          %v956 = vld [vmem:[#allocation4] sm:$0xff]
          %958 = vset.pattern.permute.xlu0 0
          %959 = vperm.xlu0 %958, %v955
          %v960 = vpop.permute.xlu0 %959
          %v962 = vmul.f32 %v956, %v960
          %963 = vst.msk [vmem:[#allocation4] sm:$0xff] %vm656, %v962
          %v964 = vld [vmem:[%s728] sm:$0xff]
          %v965 = vrcp.pop %v964
          %v966 = vld [vmem:[#allocation4] sm:$0xff]
          %968 = vset.pattern.permute.xlu0 0
          %969 = vperm.xlu0 %968, %v965
          %v970 = vpop.permute.xlu0 %969
          %v972 = vmul.f32 %v966, %v970
          %973 = vst.msk [vmem:[#allocation4] sm:$0xff] %vm797, %v972
          %v974 = vld [vmem:[%s869] sm:$0xff]
          %v975 = vrcp.pop %v974
          %v976 = vld [vmem:[#allocation4] sm:$0xff]
          %978 = vset.pattern.permute.xlu0 0
          %979 = vperm.xlu0 %978, %v975
          %v980 = vpop.permute.xlu0 %979
          %v982 = vmul.f32 %v976, %v980
          %983 = vst.msk [vmem:[#allocation4] sm:$0xff] %vm938, %v982
          %v984 = vld [vmem:[#allocation4] sm:$0xff]
          %v985 = vpack.c.bf16 %v984, %v984
          %vm986 = vcmask 257024
          %987 = vst.msk [vmem:[%s356] sm:$0xf] %vm986, %v985
        $region60: #{decoder_forward.20} parent=35 // pred_fallthru
          _
        %s988 = sand.u32 %s170, 1
        %s989 = scalar_lea.sflag [#allocation7], %s988
        %s990 = sand.u32 %s170, 1
        %s991 = smul.addr %s990, 4
        %s992 = scalar_lea.vmem [#allocation13], %s991
        // Predicated region
        $region61: #{decoder_forward.20} parent=35 // pred_check
          %p993 = pneg %p180
        $region62: #{decoder_forward.20} parent=35 // pred_check_branch
          %995 = sbr.rel (%p993) target = $region64
        $region63: #{decoder_forward.20} parent=35 // pred_region
          %s997 = ssub.s32 64, 64
          %998 = vsyncadd %s989, %s997
          %s999 = sadd.s32 %s33, %s32
          %s1000 = smul.addr %s999, 64
          %s1001 = scalar_lea.hbm %s4, %s1000
          %s1003 = sshll.u32 %s992, 4
          %s1004 = int_to_ptr.vmem [resolvable:$true] %s1003
          %1006 = dma.vmem_to_hbm [thread:$0]  %s1004, 64, %s1001, %s989
        $region64: #{decoder_forward.20} parent=35 // pred_fallthru
          _
      $region36: #{decoder_forward.20} parent=5 // pred_fallthru
        _
      %p1007 = scmp.le.s32.totalorder 2, %s22
      // Predicated region
      $region65: #{decoder_forward.20} parent=5 // pred_check
        %p1008 = pneg %p1007
      $region66: #{decoder_forward.20} parent=5 // pred_check_branch
        %1010 = sbr.rel (%p1008) target = $region68
      $region67: #{decoder_forward.20} parent=5 // pred_region
        %s1011 = ssub.s32 %s22, 2
        // Predicated region
        $region69: #{decoder_forward.20} parent=67 // pred_check
          %p1012 = pneg %p186
        $region70: #{decoder_forward.20} parent=67 // pred_check_branch
          %1014 = sbr.rel (%p1012) target = $region72
        $region71: #{decoder_forward.20} parent=67 // pred_region
          %s1015 = sand.u32 %s171, 1
          %s1016 = scalar_lea.sflag [#allocation7], %s1015
          %s1017 = sand.u32 %s171, 1
          %s1018 = smul.addr %s1017, 4
          %s1019 = scalar_lea.vmem [#allocation13], %s1018
          %1020 = dma.done %s1016, 64
        $region72: #{decoder_forward.20} parent=67 // pred_fallthru
          _
      $region68: #{decoder_forward.20} parent=5 // pred_fallthru
        _
    $region6: #{decoder_forward.20} parent=1 // loop_footer
      %s26 = sadd.s32 1, %s22
    $region7: #{decoder_forward.20} parent=1 // loop_footer_branch
      %21 = sbr.rel target = $region3
    $region8: #{decoder_forward.20} parent=1 // loop_exit
      _
    %1021 = vsyncpa [#allocation6], 1
    %s1022 = scalar_lea.sflag [#allocation6], 1
    %1023 = vsyncpa %s1022, 1
    %1024 = vsyncpa [#allocation9], 1
    %s1025 = scalar_lea.sflag [#allocation9], 1
    %1026 = vsyncpa %s1025, 1
    %1027 = vsyncpa [#allocation12], 1
    %s1028 = scalar_lea.sflag [#allocation12], 1
    %1029 = vsyncpa %s1028, 1
    %1030 = vsyncpa [#allocation7], 1
    %s1031 = scalar_lea.sflag [#allocation7], 1
    %1032 = vsyncpa %s1031, 1

// kernel: decoder_forward.23
$region0: #{decoder_forward.23}
  #allocation0 [shape = 'u32[]', space=smem, size = 0x4, offset = 0x4, fixed_abs, tag = 'smem constant byte address 0x4 - core index']
  #allocation1 [shape = 'u32[144,128]{1,0:T(1,128)}', space=vmem, size = 0x12000, scoped, tag = 'internal scratch']
  #allocation2 [shape = 'f32[16,64]{1,0:T(8,128)}', space=vmem, size = 0x2000, scoped, tag = 'scratch operand']
  %s0 = inlined_call_operand.hbm [shape: f32[16,32], index: 0, kind: input, shape index: {}]
  %s1 = inlined_call_operand.hbm [shape: bf16[32,64], index: 1, kind: input, shape index: {}]
  %s2 = inlined_call_operand.hbm [shape: f32[1,64], index: 2, kind: input, shape index: {}]
  %s3 = inlined_call_operand.hbm [shape: bf16[16,64], index: 3, kind: output, shape index: {}]
  %s4 = sld [smem:[#allocation0]]
  $region42: #{decoder_forward.23} parent=0
    _
  %s6 = ssub.s32 1, %s4
  %s7 = scalar_select 0, %s6, %s4
  $region1: #{decoder_forward.23} parent=0
    #allocation3 [shape = 'u8[8192]{0}', space=vmem, size = 0x2000, scoped, tag = 'input window, operand 0, single buffered']
    #allocation4 [shape = 's32[1]{0}', space=sflag, size = 0x4, scoped, tag = 'scoped memory for decoder_forward.23']
    #allocation5 [shape = 's32[1]{0}', space=sflag, size = 0x4, scoped, tag = 'scoped memory for decoder_forward.23']
    #allocation6 [shape = 'u8[8192]{0}', space=vmem, size = 0x2000, scoped, tag = 'input window, operand 1, single buffered']
    #allocation7 [shape = 's32[1]{0}', space=sflag, size = 0x4, scoped, tag = 'scoped memory for decoder_forward.23']
    #allocation8 [shape = 'u8[512]{0}', space=vmem, size = 0x400, scoped, tag = 'input window, operand 2, single buffered']
    #allocation9 [shape = 'u8[4096]{0}', space=vmem, size = 0x1000, scoped, tag = 'output window, operand 0, single buffered']
    %8 = vsyncpa [#allocation4], 0
    %9 = vsyncpa [#allocation7], 0
    %10 = vsyncpa [#allocation5], 0
    // Predicated region
    $region2: #{decoder_forward.23} parent=1 // pred_check
      _
    $region3: #{decoder_forward.23} parent=1 // pred_check_branch
      %12 = sbr.rel (0) target = $region5
    $region4: #{decoder_forward.23} parent=1 // pred_region
      %s14 = ssub.s32 256, 256
      %15 = vsyncadd [#allocation4], %s14
      %s16 = sshll.u32 [#allocation3], 4
      %s17 = int_to_ptr.vmem [resolvable:$true] %s16
      %22 = dma.hbm_to_vmem [thread:$0]  %s0, 256, %s17, [#allocation4], 128, 128, 8
    $region5: #{decoder_forward.23} parent=1 // pred_fallthru
      _
    // Predicated region
    $region6: #{decoder_forward.23} parent=1 // pred_check
      _
    $region7: #{decoder_forward.23} parent=1 // pred_check_branch
      %24 = sbr.rel (0) target = $region9
    $region8: #{decoder_forward.23} parent=1 // pred_region
      %s26 = ssub.s32 256, 256
      %27 = vsyncadd [#allocation7], %s26
      %s28 = sshll.u32 [#allocation6], 4
      %s29 = int_to_ptr.vmem [resolvable:$true] %s28
      %34 = dma.hbm_to_vmem [thread:$0]  %s1, 256, %s29, [#allocation7], 64, 64, 4
    $region9: #{decoder_forward.23} parent=1 // pred_fallthru
      _
    // Predicated region
    $region10: #{decoder_forward.23} parent=1 // pred_check
      _
    $region11: #{decoder_forward.23} parent=1 // pred_check_branch
      %36 = sbr.rel (0) target = $region13
    $region12: #{decoder_forward.23} parent=1 // pred_region
      %s38 = ssub.s32 16, 16
      %39 = vsyncadd [#allocation7], %s38
      %s41 = sshll.u32 [#allocation8], 4
      %s42 = int_to_ptr.vmem [resolvable:$true] %s41
      %44 = dma.hbm_to_vmem [thread:$0]  %s2, 16, %s42, [#allocation7]
    $region13: #{decoder_forward.23} parent=1 // pred_fallthru
      _
    // Predicated region
    $region14: #{decoder_forward.23} parent=1 // pred_check
      _
    $region15: #{decoder_forward.23} parent=1 // pred_check_branch
      %46 = sbr.rel (0) target = $region17
    $region16: #{decoder_forward.23} parent=1 // pred_region
      %47 = dma.done [#allocation4], 256
    $region17: #{decoder_forward.23} parent=1 // pred_fallthru
      _
    // Predicated region
    $region18: #{decoder_forward.23} parent=1 // pred_check
      _
    $region19: #{decoder_forward.23} parent=1 // pred_check_branch
      %49 = sbr.rel (0) target = $region21
    $region20: #{decoder_forward.23} parent=1 // pred_region
      %50 = dma.done [#allocation7], 256
    $region21: #{decoder_forward.23} parent=1 // pred_fallthru
      _
    // Predicated region
    $region22: #{decoder_forward.23} parent=1 // pred_check
      _
    $region23: #{decoder_forward.23} parent=1 // pred_check_branch
      %52 = sbr.rel (0) target = $region25
    $region24: #{decoder_forward.23} parent=1 // pred_region
      %53 = dma.done [#allocation7], 16
    $region25: #{decoder_forward.23} parent=1 // pred_fallthru
      _
    %p55 = scmp.eq.s32.totalorder 0, 0
    // Predicated region
    $region26: #{decoder_forward.23} parent=1 // pred_check
      %p56 = pneg %p55
    $region27: #{decoder_forward.23} parent=1 // pred_check_branch
      %58 = sbr.rel (%p56) target = $region29
    $region28: #{decoder_forward.23} parent=1 // pred_region
      %vm59 = vcmask 523264
      %60 = vst.msk [vmem:[#allocation2] sm:$0xff] %vm59, 0.0
      %61 = vst.msk [vmem:[#allocation2 + $0x8] sm:$0xff] %vm59, 0.0
    $region29: #{decoder_forward.23} parent=1 // pred_fallthru
      _
    %v62 = vld [vmem:[#allocation2] sm:$0xff]
    %v63 = vld [vmem:[#allocation2 + $0x8] sm:$0xff]
    %v64 = vld [vmem:[#allocation3] sm:$0xff]
    %v65 = vld [vmem:[#allocation3 + $0x8] sm:$0xff]
    %v66 = vpack.c.bf16 %v65, %v64
    %v67 = vld [vmem:[#allocation6] sm:$0xf]
    %v68 = vld [vmem:[#allocation6 + $0x4] sm:$0xf]
    %v69 = vld [vmem:[#allocation6 + $0x8] sm:$0xf]
    %v70 = vld [vmem:[#allocation6 + $0xc] sm:$0xf]
    %v75 = vunpack.c.l.b16 %v67
    %v76 = vunpack.c.l.b16 %v68
    %v77 = vunpack.c.l.b16 %v69
    %v78 = vunpack.c.l.b16 %v70
    %v79 = vpack.c.b16 %v76, %v75
    %v80 = vpack.c.b16 %v78, %v77
    %vm83 = vcmask 261120
    %v85 = vsel %vm83, %v66, 0
    %87 = vmatprep.subr.bf16.mxu0 0
    %88 = vmatpush1.bf16.msra.mxu0 %v79
    %89 = vmatprep.subr.bf16.mxu0 0
    %90 = vmatpush1.bf16.msra.mxu0 %v80
    %91 = vmatprep.subr.bf16.mxu0 0
    %92 = vmatpush1.bf16.msra.mxu0 0
    %93 = vmatprep.subr.bf16.mxu0 0
    %94 = vmatpush1.bf16.msra.mxu0 0
    %95 = vmatprep.subr.bf16.mxu0 0
    %96 = vmatpush1.bf16.msra.mxu0 0
    %97 = vmatprep.subr.bf16.mxu0 0
    %98 = vmatpush1.bf16.msra.mxu0 0
    %99 = vmatprep.subr.bf16.mxu0 0
    %100 = vmatpush1.bf16.msra.mxu0 0
    %101 = vmatprep.subr.bf16.mxu0 0
    %102 = vmatpush1.bf16.msra.mxu0 0
    %103 = vmatprep.subr.bf16.mxu0 0
    %104 = vmatpush1.bf16.msra.mxu0 0
    %105 = vmatprep.subr.bf16.mxu0 0
    %106 = vmatpush1.bf16.msra.mxu0 0
    %107 = vmatprep.subr.bf16.mxu0 0
    %108 = vmatpush1.bf16.msra.mxu0 0
    %109 = vmatprep.subr.bf16.mxu0 0
    %110 = vmatpush1.bf16.msra.mxu0 0
    %111 = vmatprep.subr.bf16.mxu0 0
    %112 = vmatpush1.bf16.msra.mxu0 0
    %113 = vmatprep.subr.bf16.mxu0 0
    %114 = vmatpush1.bf16.msra.mxu0 0
    %115 = vmatprep.subr.bf16.mxu0 0
    %116 = vmatpush1.bf16.msra.mxu0 0
    %117 = vmatprep.subr.bf16.mxu0 0
    %118 = vmatpush1.bf16.msra.mxu0 0
    %119 = vmatprep.mubr.bf16.mxu0 0
    %120 = vmatmul.mubr.bf16.gmra.mrb[0].mxu0 %v85
    %v121 = vpop.f32.mrb[0].mxu0
    %v122 = vadd.f32 0.0, %v121
    %v123 = vpop.f32.mrb[0].mxu0
    %v124 = vpop.f32.mrb[0].mxu0
    %v125 = vadd.f32 0.0, %v124
    %v126 = vpop.f32.mrb[0].mxu0
    %127 = vdwg.mxu0
    %v128 = vadd.f32 %v62, %v122
    %v129 = vadd.f32 %v63, %v125
    %vm130 = vcmask 523264
    %131 = vst.msk [vmem:[#allocation2] sm:$0xff] %vm130, %v128
    %132 = vst.msk [vmem:[#allocation2 + $0x8] sm:$0xff] %vm130, %v129
    // Predicated region
    $region30: #{decoder_forward.23} parent=1 // pred_check
      %p133 = pneg %p55
    $region31: #{decoder_forward.23} parent=1 // pred_check_branch
      %135 = sbr.rel (%p133) target = $region33
    $region32: #{decoder_forward.23} parent=1 // pred_region
      %v136 = vld [vmem:[#allocation2] sm:$0xff]
      %v137 = vld [vmem:[#allocation2 + $0x8] sm:$0xff]
      %v138 = vld [vmem:[#allocation8] sm:$0x1]
      %v140 = vlaneseq
      %v141 = vshrl.u32 %v140, 7
      %v142 = vsub.s32 0, %v141
      %v143 = vrot.slane %v138, %v142
      %v145 = vadd.f32 %v136, %v143
      %v146 = vadd.f32 %v137, %v143
      %v147 = vpack.c.bf16 %v146, %v145
      %v149 = vunpack.c.l.b16 %v147
      %v150 = vunpack.c.h.b16 %v147
      %v151 = vpack.c.b16 %v149, %v149
      %v152 = vpack.c.b16 %v150, %v150
      %vm155 = vcmask 519168
      %156 = vst.msk [vmem:[#allocation9] sm:$0xf] %vm155, %v151
      %157 = vst.msk [vmem:[#allocation9 + $0x4] sm:$0xf] %vm155, %v152
    $region33: #{decoder_forward.23} parent=1 // pred_fallthru
      _
    // Predicated region
    $region34: #{decoder_forward.23} parent=1 // pred_check
      _
    $region35: #{decoder_forward.23} parent=1 // pred_check_branch
      %159 = sbr.rel (0) target = $region37
    $region36: #{decoder_forward.23} parent=1 // pred_region
      %s161 = ssub.s32 128, 128
      %162 = vsyncadd [#allocation5], %s161
      %s163 = sshll.u32 [#allocation9], 4
      %s164 = int_to_ptr.vmem [resolvable:$true] %s163
      %169 = dma.vmem_to_hbm [thread:$0]  %s164, 128, %s3, [#allocation5], 64, 64, 4
    $region37: #{decoder_forward.23} parent=1 // pred_fallthru
      _
    // Predicated region
    $region38: #{decoder_forward.23} parent=1 // pred_check
      _
    $region39: #{decoder_forward.23} parent=1 // pred_check_branch
      %171 = sbr.rel (0) target = $region41
    $region40: #{decoder_forward.23} parent=1 // pred_region
      %172 = dma.done [#allocation5], 128
    $region41: #{decoder_forward.23} parent=1 // pred_fallthru
      _
    %173 = vsyncpa [#allocation4], 1
    %174 = vsyncpa [#allocation7], 1
    %175 = vsyncpa [#allocation5], 1

// kernel: decoder_forward.26
$region0: #{decoder_forward.26}
  #allocation0 [shape = 'u32[]', space=smem, size = 0x4, offset = 0x4, fixed_abs, tag = 'smem constant byte address 0x4 - core index']
  #allocation1 [shape = 'u32[144,128]{1,0:T(1,128)}', space=vmem, size = 0x12000, scoped, tag = 'internal scratch']
  #allocation2 [shape = 'bf16[16,32]{1,0:T(16,128)(2,1)}', space=vmem, size = 0x1000, scoped, tag = 'scratch operand']
  %s0 = inlined_call_operand.hbm [shape: f32[16,32], index: 0, kind: input, shape index: {}]
  %s1 = inlined_call_operand.hbm [shape: f32[1,32], index: 1, kind: input, shape index: {}]
  %s2 = inlined_call_operand.hbm [shape: f32[1,32], index: 2, kind: input, shape index: {}]
  %s3 = inlined_call_operand.hbm [shape: bf16[32,64], index: 3, kind: input, shape index: {}]
  %s4 = inlined_call_operand.hbm [shape: f32[1,64], index: 4, kind: input, shape index: {}]
  %s5 = inlined_call_operand.hbm [shape: bf16[16,64], index: 5, kind: output, shape index: {}]
  %s6 = sld [smem:[#allocation0]]
  $region54: #{decoder_forward.26} parent=0
    _
  %s8 = ssub.s32 1, %s6
  %s9 = scalar_select 0, %s8, %s6
  $region1: #{decoder_forward.26} parent=0
    #allocation3 [shape = 'u8[8192]{0}', space=vmem, size = 0x2000, scoped, tag = 'input window, operand 0, single buffered']
    #allocation4 [shape = 's32[1]{0}', space=sflag, size = 0x4, scoped, tag = 'scoped memory for decoder_forward.26']
    #allocation5 [shape = 's32[1]{0}', space=sflag, size = 0x4, scoped, tag = 'scoped memory for decoder_forward.26']
    #allocation6 [shape = 'u8[512]{0}', space=vmem, size = 0x400, scoped, tag = 'input window, operand 1, single buffered']
    #allocation7 [shape = 's32[1]{0}', space=sflag, size = 0x4, scoped, tag = 'scoped memory for decoder_forward.26']
    #allocation8 [shape = 'u8[512]{0}', space=vmem, size = 0x400, scoped, tag = 'input window, operand 2, single buffered']
    #allocation9 [shape = 'u8[8192]{0}', space=vmem, size = 0x2000, scoped, tag = 'input window, operand 3, single buffered']
    #allocation10 [shape = 's32[1]{0}', space=sflag, size = 0x4, scoped, tag = 'scoped memory for decoder_forward.26']
    #allocation11 [shape = 'u8[512]{0}', space=vmem, size = 0x400, scoped, tag = 'input window, operand 4, single buffered']
    #allocation12 [shape = 'u8[4096]{0}', space=vmem, size = 0x1000, scoped, tag = 'output window, operand 0, single buffered']
    %10 = vsyncpa [#allocation4], 0
    %11 = vsyncpa [#allocation7], 0
    %12 = vsyncpa [#allocation10], 0
    %13 = vsyncpa [#allocation5], 0
    // Predicated region
    $region2: #{decoder_forward.26} parent=1 // pred_check
      _
    $region3: #{decoder_forward.26} parent=1 // pred_check_branch
      %15 = sbr.rel (0) target = $region5
    $region4: #{decoder_forward.26} parent=1 // pred_region
      %s17 = ssub.s32 256, 256
      %18 = vsyncadd [#allocation4], %s17
      %s19 = sshll.u32 [#allocation3], 4
      %s20 = int_to_ptr.vmem [resolvable:$true] %s19
      %25 = dma.hbm_to_vmem [thread:$0]  %s0, 256, %s20, [#allocation4], 128, 128, 8
    $region5: #{decoder_forward.26} parent=1 // pred_fallthru
      _
    // Predicated region
    $region6: #{decoder_forward.26} parent=1 // pred_check
      _
    $region7: #{decoder_forward.26} parent=1 // pred_check_branch
      %27 = sbr.rel (0) target = $region9
    $region8: #{decoder_forward.26} parent=1 // pred_region
      %s29 = ssub.s32 16, 16
      %30 = vsyncadd [#allocation7], %s29
      %s32 = sshll.u32 [#allocation6], 4
      %s33 = int_to_ptr.vmem [resolvable:$true] %s32
      %35 = dma.hbm_to_vmem [thread:$0]  %s1, 16, %s33, [#allocation7]
    $region9: #{decoder_forward.26} parent=1 // pred_fallthru
      _
    // Predicated region
    $region10: #{decoder_forward.26} parent=1 // pred_check
      _
    $region11: #{decoder_forward.26} parent=1 // pred_check_branch
      %37 = sbr.rel (0) target = $region13
    $region12: #{decoder_forward.26} parent=1 // pred_region
      %s39 = ssub.s32 16, 16
      %40 = vsyncadd [#allocation7], %s39
      %s42 = sshll.u32 [#allocation8], 4
      %s43 = int_to_ptr.vmem [resolvable:$true] %s42
      %45 = dma.hbm_to_vmem [thread:$0]  %s2, 16, %s43, [#allocation7]
    $region13: #{decoder_forward.26} parent=1 // pred_fallthru
      _
    // Predicated region
    $region14: #{decoder_forward.26} parent=1 // pred_check
      _
    $region15: #{decoder_forward.26} parent=1 // pred_check_branch
      %47 = sbr.rel (0) target = $region17
    $region16: #{decoder_forward.26} parent=1 // pred_region
      %s49 = ssub.s32 256, 256
      %50 = vsyncadd [#allocation10], %s49
      %s51 = sshll.u32 [#allocation9], 4
      %s52 = int_to_ptr.vmem [resolvable:$true] %s51
      %57 = dma.hbm_to_vmem [thread:$0]  %s3, 256, %s52, [#allocation10], 64, 64, 4
    $region17: #{decoder_forward.26} parent=1 // pred_fallthru
      _
    // Predicated region
    $region18: #{decoder_forward.26} parent=1 // pred_check
      _
    $region19: #{decoder_forward.26} parent=1 // pred_check_branch
      %59 = sbr.rel (0) target = $region21
    $region20: #{decoder_forward.26} parent=1 // pred_region
      %s61 = ssub.s32 16, 16
      %62 = vsyncadd [#allocation10], %s61
      %s64 = sshll.u32 [#allocation11], 4
      %s65 = int_to_ptr.vmem [resolvable:$true] %s64
      %67 = dma.hbm_to_vmem [thread:$0]  %s4, 16, %s65, [#allocation10]
    $region21: #{decoder_forward.26} parent=1 // pred_fallthru
      _
    // Predicated region
    $region22: #{decoder_forward.26} parent=1 // pred_check
      _
    $region23: #{decoder_forward.26} parent=1 // pred_check_branch
      %69 = sbr.rel (0) target = $region25
    $region24: #{decoder_forward.26} parent=1 // pred_region
      %70 = dma.done [#allocation4], 256
    $region25: #{decoder_forward.26} parent=1 // pred_fallthru
      _
    // Predicated region
    $region26: #{decoder_forward.26} parent=1 // pred_check
      _
    $region27: #{decoder_forward.26} parent=1 // pred_check_branch
      %72 = sbr.rel (0) target = $region29
    $region28: #{decoder_forward.26} parent=1 // pred_region
      %73 = dma.done [#allocation7], 16
    $region29: #{decoder_forward.26} parent=1 // pred_fallthru
      _
    // Predicated region
    $region30: #{decoder_forward.26} parent=1 // pred_check
      _
    $region31: #{decoder_forward.26} parent=1 // pred_check_branch
      %75 = sbr.rel (0) target = $region33
    $region32: #{decoder_forward.26} parent=1 // pred_region
      %76 = dma.done [#allocation7], 16
    $region33: #{decoder_forward.26} parent=1 // pred_fallthru
      _
    // Predicated region
    $region34: #{decoder_forward.26} parent=1 // pred_check
      _
    $region35: #{decoder_forward.26} parent=1 // pred_check_branch
      %78 = sbr.rel (0) target = $region37
    $region36: #{decoder_forward.26} parent=1 // pred_region
      %79 = dma.done [#allocation10], 256
    $region37: #{decoder_forward.26} parent=1 // pred_fallthru
      _
    // Predicated region
    $region38: #{decoder_forward.26} parent=1 // pred_check
      _
    $region39: #{decoder_forward.26} parent=1 // pred_check_branch
      %81 = sbr.rel (0) target = $region41
    $region40: #{decoder_forward.26} parent=1 // pred_region
      %82 = dma.done [#allocation10], 16
    $region41: #{decoder_forward.26} parent=1 // pred_fallthru
      _
    %p84 = scmp.eq.s32.totalorder 0, 0
    // Predicated region
    $region42: #{decoder_forward.26} parent=1 // pred_check
      %p85 = pneg %p84
    $region43: #{decoder_forward.26} parent=1 // pred_check_branch
      %87 = sbr.rel (%p85) target = $region45
    $region44: #{decoder_forward.26} parent=1 // pred_region
      %v88 = vld [vmem:[#allocation3] sm:$0xff]
      %v89 = vld [vmem:[#allocation3 + $0x8] sm:$0xff]
      %vm90 = vcmask 261120
      %v91 = vsel %vm90, %v88, 0.0
      %92 = vadd.xlane.f32.xlu0 %v91
      %v93 = vpop.xlane.xlu0 %92
      %v94 = vsel %vm90, %v89, 0.0
      %95 = vadd.xlane.f32.xlu0 %v94
      %v96 = vpop.xlane.xlu0 %95
      %v97 = vrcp.pop 32.0
      %v98 = vmul.f32 %v93, %v97
      %v99 = vmul.f32 %v96, %v97
      %v100 = vsub.f32 %v88, %v98
      %v101 = vsub.f32 %v89, %v99
      %v102 = vmul.f32 %v100, %v100
      %v103 = vmul.f32 %v101, %v101
      %v104 = vsel %vm90, %v102, 0.0
      %105 = vadd.xlane.f32.xlu0 %v104
      %v106 = vpop.xlane.xlu0 %105
      %v107 = vsel %vm90, %v103, 0.0
      %108 = vadd.xlane.f32.xlu0 %v107
      %v109 = vpop.xlane.xlu0 %108
      %v110 = vmul.f32 %v106, %v97
      %v111 = vmul.f32 %v109, %v97
      %v112 = vadd.f32 %v110, 1e-06
      %v113 = vadd.f32 %v111, 1e-06
      %v114 = vrsqrt.pop %v112
      %v115 = vrsqrt.pop %v113
      %v116 = vmul.f32 %v100, %v114
      %v117 = vmul.f32 %v101, %v115
      %v118 = vld [vmem:[#allocation6] sm:$0x1]
      %v120 = vlaneseq
      %v121 = vshrl.u32 %v120, 7
      %v122 = vsub.s32 0, %v121
      %v123 = vrot.slane %v118, %v122
      %v125 = vmul.f32 %v116, %v123
      %v126 = vmul.f32 %v117, %v123
      %v127 = vld [vmem:[#allocation8] sm:$0x1]
      %v129 = vlaneseq
      %v130 = vshrl.u32 %v129, 7
      %v131 = vsub.s32 0, %v130
      %v132 = vrot.slane %v127, %v131
      %v134 = vadd.f32 %v125, %v132
      %v135 = vadd.f32 %v126, %v132
      %v136 = vpack.c.bf16 %v135, %v134
      %137 = vst.msk [vmem:[#allocation2] sm:$0xff] %vm90, %v136
    $region45: #{decoder_forward.26} parent=1 // pred_fallthru
      _
    %v138 = vld [vmem:[#allocation2] sm:$0xff]
    %v139 = vld [vmem:[#allocation9] sm:$0xf]
    %v140 = vld [vmem:[#allocation9 + $0x4] sm:$0xf]
    %v141 = vld [vmem:[#allocation9 + $0x8] sm:$0xf]
    %v142 = vld [vmem:[#allocation9 + $0xc] sm:$0xf]
    %v143 = vld [vmem:[#allocation11] sm:$0x1]
    %v145 = vlaneseq
    %v146 = vshrl.u32 %v145, 7
    %v147 = vsub.s32 0, %v146
    %v148 = vrot.slane %v143, %v147
    %v154 = vunpack.c.l.b16 %v139
    %v155 = vunpack.c.l.b16 %v140
    %v156 = vunpack.c.l.b16 %v141
    %v157 = vunpack.c.l.b16 %v142
    %v158 = vpack.c.b16 %v155, %v154
    %v159 = vpack.c.b16 %v157, %v156
    %vm162 = vcmask 261120
    %v164 = vsel %vm162, %v138, 0
    %166 = vmatprep.subr.bf16.mxu0 0
    %167 = vmatpush1.bf16.msra.mxu0 %v158
    %168 = vmatprep.subr.bf16.mxu0 0
    %169 = vmatpush1.bf16.msra.mxu0 %v159
    %170 = vmatprep.subr.bf16.mxu0 0
    %171 = vmatpush1.bf16.msra.mxu0 0
    %172 = vmatprep.subr.bf16.mxu0 0
    %173 = vmatpush1.bf16.msra.mxu0 0
    %174 = vmatprep.subr.bf16.mxu0 0
    %175 = vmatpush1.bf16.msra.mxu0 0
    %176 = vmatprep.subr.bf16.mxu0 0
    %177 = vmatpush1.bf16.msra.mxu0 0
    %178 = vmatprep.subr.bf16.mxu0 0
    %179 = vmatpush1.bf16.msra.mxu0 0
    %180 = vmatprep.subr.bf16.mxu0 0
    %181 = vmatpush1.bf16.msra.mxu0 0
    %182 = vmatprep.subr.bf16.mxu0 0
    %183 = vmatpush1.bf16.msra.mxu0 0
    %184 = vmatprep.subr.bf16.mxu0 0
    %185 = vmatpush1.bf16.msra.mxu0 0
    %186 = vmatprep.subr.bf16.mxu0 0
    %187 = vmatpush1.bf16.msra.mxu0 0
    %188 = vmatprep.subr.bf16.mxu0 0
    %189 = vmatpush1.bf16.msra.mxu0 0
    %190 = vmatprep.subr.bf16.mxu0 0
    %191 = vmatpush1.bf16.msra.mxu0 0
    %192 = vmatprep.subr.bf16.mxu0 0
    %193 = vmatpush1.bf16.msra.mxu0 0
    %194 = vmatprep.subr.bf16.mxu0 0
    %195 = vmatpush1.bf16.msra.mxu0 0
    %196 = vmatprep.subr.bf16.mxu0 0
    %197 = vmatpush1.bf16.msra.mxu0 0
    %198 = vmatprep.mubr.bf16.mxu0 0
    %199 = vmatmul.mubr.bf16.gmra.mrb[0].mxu0 %v164
    %v200 = vpop.f32.mrb[0].mxu0
    %v201 = vadd.f32 %v148, %v200
    %v202 = vpop.f32.mrb[0].mxu0
    %v203 = vpop.f32.mrb[0].mxu0
    %v204 = vadd.f32 %v148, %v203
    %v205 = vpop.f32.mrb[0].mxu0
    %206 = vdwg.mxu0
    %v207 = vmax.f32 %v201, 0.0
    %v208 = vmax.f32 %v204, 0.0
    %v209 = vpack.c.bf16 %v208, %v207
    %v211 = vunpack.c.l.b16 %v209
    %v212 = vunpack.c.h.b16 %v209
    %v213 = vpack.c.b16 %v211, %v211
    %v214 = vpack.c.b16 %v212, %v212
    %vm217 = vcmask 519168
    %218 = vst.msk [vmem:[#allocation12] sm:$0xf] %vm217, %v213
    %219 = vst.msk [vmem:[#allocation12 + $0x4] sm:$0xf] %vm217, %v214
    // Predicated region
    $region46: #{decoder_forward.26} parent=1 // pred_check
      _
    $region47: #{decoder_forward.26} parent=1 // pred_check_branch
      %221 = sbr.rel (0) target = $region49
    $region48: #{decoder_forward.26} parent=1 // pred_region
      %s223 = ssub.s32 128, 128
      %224 = vsyncadd [#allocation5], %s223
      %s225 = sshll.u32 [#allocation12], 4
      %s226 = int_to_ptr.vmem [resolvable:$true] %s225
      %231 = dma.vmem_to_hbm [thread:$0]  %s226, 128, %s5, [#allocation5], 64, 64, 4
    $region49: #{decoder_forward.26} parent=1 // pred_fallthru
      _
    // Predicated region
    $region50: #{decoder_forward.26} parent=1 // pred_check
      _
    $region51: #{decoder_forward.26} parent=1 // pred_check_branch
      %233 = sbr.rel (0) target = $region53
    $region52: #{decoder_forward.26} parent=1 // pred_region
      %234 = dma.done [#allocation5], 128
    $region53: #{decoder_forward.26} parent=1 // pred_fallthru
      _
    %235 = vsyncpa [#allocation4], 1
    %236 = vsyncpa [#allocation7], 1
    %237 = vsyncpa [#allocation10], 1
    %238 = vsyncpa [#allocation5], 1

// kernel: decoder_forward.27
$region0: #{decoder_forward.27}
  #allocation0 [shape = 'u32[]', space=smem, size = 0x4, offset = 0x4, fixed_abs, tag = 'smem constant byte address 0x4 - core index']
  #allocation1 [shape = 'u32[144,128]{1,0:T(1,128)}', space=vmem, size = 0x12000, scoped, tag = 'internal scratch']
  #allocation2 [shape = 'f32[16,32]{1,0:T(8,128)}', space=vmem, size = 0x2000, scoped, tag = 'scratch operand']
  %s0 = inlined_call_operand.hbm [shape: bf16[16,64], index: 0, kind: input, shape index: {}]
  %s1 = inlined_call_operand.hbm [shape: bf16[64,32], index: 1, kind: input, shape index: {}]
  %s2 = inlined_call_operand.hbm [shape: f32[1,32], index: 2, kind: input, shape index: {}]
  %s3 = inlined_call_operand.hbm [shape: f32[16,32], index: 3, kind: input, shape index: {}]
  %s4 = inlined_call_operand.hbm [shape: f32[16,32], index: 4, kind: output, shape index: {}]
  %s5 = sld [smem:[#allocation0]]
  $region50: #{decoder_forward.27} parent=0
    _
  %s7 = ssub.s32 1, %s5
  %s8 = scalar_select 0, %s7, %s5
  $region1: #{decoder_forward.27} parent=0
    #allocation3 [shape = 'u8[4096]{0}', space=vmem, size = 0x1000, scoped, tag = 'input window, operand 0, single buffered']
    #allocation4 [shape = 's32[1]{0}', space=sflag, size = 0x4, scoped, tag = 'scoped memory for decoder_forward.27']
    #allocation5 [shape = 's32[1]{0}', space=sflag, size = 0x4, scoped, tag = 'scoped memory for decoder_forward.27']
    #allocation6 [shape = 'u8[16384]{0}', space=vmem, size = 0x4000, scoped, tag = 'input window, operand 1, single buffered']
    #allocation7 [shape = 's32[1]{0}', space=sflag, size = 0x4, scoped, tag = 'scoped memory for decoder_forward.27']
    #allocation8 [shape = 'u8[512]{0}', space=vmem, size = 0x400, scoped, tag = 'input window, operand 2, single buffered']
    #allocation9 [shape = 'u8[8192]{0}', space=vmem, size = 0x2000, scoped, tag = 'input window, operand 3, single buffered']
    #allocation10 [shape = 's32[1]{0}', space=sflag, size = 0x4, scoped, tag = 'scoped memory for decoder_forward.27']
    #allocation11 [shape = 'u8[8192]{0}', space=vmem, size = 0x2000, scoped, tag = 'output window, operand 0, single buffered']
    %9 = vsyncpa [#allocation4], 0
    %10 = vsyncpa [#allocation7], 0
    %11 = vsyncpa [#allocation10], 0
    %12 = vsyncpa [#allocation5], 0
    // Predicated region
    $region2: #{decoder_forward.27} parent=1 // pred_check
      _
    $region3: #{decoder_forward.27} parent=1 // pred_check_branch
      %14 = sbr.rel (0) target = $region5
    $region4: #{decoder_forward.27} parent=1 // pred_region
      %s16 = ssub.s32 128, 128
      %17 = vsyncadd [#allocation4], %s16
      %s18 = sshll.u32 [#allocation3], 4
      %s19 = int_to_ptr.vmem [resolvable:$true] %s18
      %24 = dma.hbm_to_vmem [thread:$0]  %s0, 128, %s19, [#allocation4], 64, 64, 4
    $region5: #{decoder_forward.27} parent=1 // pred_fallthru
      _
    // Predicated region
    $region6: #{decoder_forward.27} parent=1 // pred_check
      _
    $region7: #{decoder_forward.27} parent=1 // pred_check_branch
      %26 = sbr.rel (0) target = $region9
    $region8: #{decoder_forward.27} parent=1 // pred_region
      %s28 = ssub.s32 512, 512
      %29 = vsyncadd [#allocation7], %s28
      %s30 = sshll.u32 [#allocation6], 4
      %s31 = int_to_ptr.vmem [resolvable:$true] %s30
      %36 = dma.hbm_to_vmem [thread:$0]  %s1, 512, %s31, [#allocation7], 64, 64, 4
    $region9: #{decoder_forward.27} parent=1 // pred_fallthru
      _
    // Predicated region
    $region10: #{decoder_forward.27} parent=1 // pred_check
      _
    $region11: #{decoder_forward.27} parent=1 // pred_check_branch
      %38 = sbr.rel (0) target = $region13
    $region12: #{decoder_forward.27} parent=1 // pred_region
      %s40 = ssub.s32 16, 16
      %41 = vsyncadd [#allocation7], %s40
      %s43 = sshll.u32 [#allocation8], 4
      %s44 = int_to_ptr.vmem [resolvable:$true] %s43
      %46 = dma.hbm_to_vmem [thread:$0]  %s2, 16, %s44, [#allocation7]
    $region13: #{decoder_forward.27} parent=1 // pred_fallthru
      _
    // Predicated region
    $region14: #{decoder_forward.27} parent=1 // pred_check
      _
    $region15: #{decoder_forward.27} parent=1 // pred_check_branch
      %48 = sbr.rel (0) target = $region17
    $region16: #{decoder_forward.27} parent=1 // pred_region
      %s50 = ssub.s32 256, 256
      %51 = vsyncadd [#allocation10], %s50
      %s52 = sshll.u32 [#allocation9], 4
      %s53 = int_to_ptr.vmem [resolvable:$true] %s52
      %58 = dma.hbm_to_vmem [thread:$0]  %s3, 256, %s53, [#allocation10], 128, 128, 8
    $region17: #{decoder_forward.27} parent=1 // pred_fallthru
      _
    // Predicated region
    $region18: #{decoder_forward.27} parent=1 // pred_check
      _
    $region19: #{decoder_forward.27} parent=1 // pred_check_branch
      %60 = sbr.rel (0) target = $region21
    $region20: #{decoder_forward.27} parent=1 // pred_region
      %61 = dma.done [#allocation4], 128
    $region21: #{decoder_forward.27} parent=1 // pred_fallthru
      _
    // Predicated region
    $region22: #{decoder_forward.27} parent=1 // pred_check
      _
    $region23: #{decoder_forward.27} parent=1 // pred_check_branch
      %63 = sbr.rel (0) target = $region25
    $region24: #{decoder_forward.27} parent=1 // pred_region
      %64 = dma.done [#allocation7], 512
    $region25: #{decoder_forward.27} parent=1 // pred_fallthru
      _
    // Predicated region
    $region26: #{decoder_forward.27} parent=1 // pred_check
      _
    $region27: #{decoder_forward.27} parent=1 // pred_check_branch
      %66 = sbr.rel (0) target = $region29
    $region28: #{decoder_forward.27} parent=1 // pred_region
      %67 = dma.done [#allocation7], 16
    $region29: #{decoder_forward.27} parent=1 // pred_fallthru
      _
    // Predicated region
    $region30: #{decoder_forward.27} parent=1 // pred_check
      _
    $region31: #{decoder_forward.27} parent=1 // pred_check_branch
      %69 = sbr.rel (0) target = $region33
    $region32: #{decoder_forward.27} parent=1 // pred_region
      %70 = dma.done [#allocation10], 256
    $region33: #{decoder_forward.27} parent=1 // pred_fallthru
      _
    %p72 = scmp.eq.s32.totalorder 0, 0
    // Predicated region
    $region34: #{decoder_forward.27} parent=1 // pred_check
      %p73 = pneg %p72
    $region35: #{decoder_forward.27} parent=1 // pred_check_branch
      %75 = sbr.rel (%p73) target = $region37
    $region36: #{decoder_forward.27} parent=1 // pred_region
      %vm76 = vcmask 261120
      %77 = vst.msk [vmem:[#allocation2] sm:$0xff] %vm76, 0.0
      %78 = vst.msk [vmem:[#allocation2 + $0x8] sm:$0xff] %vm76, 0.0
    $region37: #{decoder_forward.27} parent=1 // pred_fallthru
      _
    %v79 = vld [vmem:[#allocation2] sm:$0xff]
    %v80 = vld [vmem:[#allocation2 + $0x8] sm:$0xff]
    %v81 = vld [vmem:[#allocation3] sm:$0xf]
    %v82 = vld [vmem:[#allocation3 + $0x4] sm:$0xf]
    %v83 = vld [vmem:[#allocation6] sm:$0xf]
    %v84 = vld [vmem:[#allocation6 + $0x4] sm:$0xf]
    %v85 = vld [vmem:[#allocation6 + $0x8] sm:$0xf]
    %v86 = vld [vmem:[#allocation6 + $0xc] sm:$0xf]
    %v87 = vld [vmem:[#allocation6 + $0x10] sm:$0xf]
    %v88 = vld [vmem:[#allocation6 + $0x14] sm:$0xf]
    %v89 = vld [vmem:[#allocation6 + $0x18] sm:$0xf]
    %v90 = vld [vmem:[#allocation6 + $0x1c] sm:$0xf]
    %v93 = vunpack.c.l.b16 %v81
    %v94 = vunpack.c.l.b16 %v82
    %v95 = vpack.c.b16 %v94, %v93
    %v104 = vunpack.c.l.b16 %v83
    %v105 = vunpack.c.l.b16 %v84
    %v106 = vunpack.c.l.b16 %v85
    %v107 = vunpack.c.l.b16 %v86
    %v108 = vunpack.c.l.b16 %v87
    %v109 = vunpack.c.l.b16 %v88
    %v110 = vunpack.c.l.b16 %v89
    %v111 = vunpack.c.l.b16 %v90
    %v112 = vpack.c.b16 %v105, %v104
    %v113 = vpack.c.b16 %v107, %v106
    %v114 = vpack.c.b16 %v109, %v108
    %v115 = vpack.c.b16 %v111, %v110
    %vm120 = vcmask 523264
    %v122 = vsel %vm120, %v95, 0
    %124 = vmatprep.subr.bf16.mxu0 0
    %125 = vmatpush1.bf16.msra.mxu0 %v112
    %126 = vmatprep.subr.bf16.mxu0 0
    %127 = vmatpush1.bf16.msra.mxu0 %v113
    %128 = vmatprep.subr.bf16.mxu0 0
    %129 = vmatpush1.bf16.msra.mxu0 %v114
    %130 = vmatprep.subr.bf16.mxu0 0
    %131 = vmatpush1.bf16.msra.mxu0 %v115
    %132 = vmatprep.subr.bf16.mxu0 0
    %133 = vmatpush1.bf16.msra.mxu0 0
    %134 = vmatprep.subr.bf16.mxu0 0
    %135 = vmatpush1.bf16.msra.mxu0 0
    %136 = vmatprep.subr.bf16.mxu0 0
    %137 = vmatpush1.bf16.msra.mxu0 0
    %138 = vmatprep.subr.bf16.mxu0 0
    %139 = vmatpush1.bf16.msra.mxu0 0
    %140 = vmatprep.subr.bf16.mxu0 0
    %141 = vmatpush1.bf16.msra.mxu0 0
    %142 = vmatprep.subr.bf16.mxu0 0
    %143 = vmatpush1.bf16.msra.mxu0 0
    %144 = vmatprep.subr.bf16.mxu0 0
    %145 = vmatpush1.bf16.msra.mxu0 0
    %146 = vmatprep.subr.bf16.mxu0 0
    %147 = vmatpush1.bf16.msra.mxu0 0
    %148 = vmatprep.subr.bf16.mxu0 0
    %149 = vmatpush1.bf16.msra.mxu0 0
    %150 = vmatprep.subr.bf16.mxu0 0
    %151 = vmatpush1.bf16.msra.mxu0 0
    %152 = vmatprep.subr.bf16.mxu0 0
    %153 = vmatpush1.bf16.msra.mxu0 0
    %154 = vmatprep.subr.bf16.mxu0 0
    %155 = vmatpush1.bf16.msra.mxu0 0
    %156 = vmatprep.mubr.bf16.mxu0 0
    %157 = vmatmul.mubr.bf16.gmra.mrb[0].mxu0 %v122
    %v158 = vpop.f32.mrb[0].mxu0
    %v159 = vadd.f32 0.0, %v158
    %v160 = vpop.f32.mrb[0].mxu0
    %v161 = vpop.f32.mrb[0].mxu0
    %v162 = vadd.f32 0.0, %v161
    %v163 = vpop.f32.mrb[0].mxu0
    %164 = vdwg.mxu0
    %v165 = vadd.f32 %v79, %v159
    %v166 = vadd.f32 %v80, %v162
    %vm167 = vcmask 261120
    %168 = vst.msk [vmem:[#allocation2] sm:$0xff] %vm167, %v165
    %169 = vst.msk [vmem:[#allocation2 + $0x8] sm:$0xff] %vm167, %v166
    // Predicated region
    $region38: #{decoder_forward.27} parent=1 // pred_check
      %p170 = pneg %p72
    $region39: #{decoder_forward.27} parent=1 // pred_check_branch
      %172 = sbr.rel (%p170) target = $region41
    $region40: #{decoder_forward.27} parent=1 // pred_region
      %v173 = vld [vmem:[#allocation2] sm:$0xff]
      %v174 = vld [vmem:[#allocation2 + $0x8] sm:$0xff]
      %v175 = vld [vmem:[#allocation8] sm:$0x1]
      %v177 = vlaneseq
      %v178 = vshrl.u32 %v177, 7
      %v179 = vsub.s32 0, %v178
      %v180 = vrot.slane %v175, %v179
      %v182 = vadd.f32 %v173, %v180
      %v183 = vadd.f32 %v174, %v180
      %v184 = vld [vmem:[#allocation9] sm:$0xff]
      %v185 = vld [vmem:[#allocation9 + $0x8] sm:$0xff]
      %v186 = vadd.f32 %v182, %v184
      %v187 = vadd.f32 %v183, %v185
      %188 = vst.msk [vmem:[#allocation11] sm:$0xff] %vm167, %v186
      %189 = vst.msk [vmem:[#allocation11 + $0x8] sm:$0xff] %vm167, %v187
    $region41: #{decoder_forward.27} parent=1 // pred_fallthru
      _
    // Predicated region
    $region42: #{decoder_forward.27} parent=1 // pred_check
      _
    $region43: #{decoder_forward.27} parent=1 // pred_check_branch
      %191 = sbr.rel (0) target = $region45
    $region44: #{decoder_forward.27} parent=1 // pred_region
      %s193 = ssub.s32 256, 256
      %194 = vsyncadd [#allocation5], %s193
      %s195 = sshll.u32 [#allocation11], 4
      %s196 = int_to_ptr.vmem [resolvable:$true] %s195
      %201 = dma.vmem_to_hbm [thread:$0]  %s196, 256, %s4, [#allocation5], 128, 128, 8
    $region45: #{decoder_forward.27} parent=1 // pred_fallthru
      _
    // Predicated region
    $region46: #{decoder_forward.27} parent=1 // pred_check
      _
    $region47: #{decoder_forward.27} parent=1 // pred_check_branch
      %203 = sbr.rel (0) target = $region49
    $region48: #{decoder_forward.27} parent=1 // pred_region
      %204 = dma.done [#allocation5], 256
    $region49: #{decoder_forward.27} parent=1 // pred_fallthru
      _
    %205 = vsyncpa [#allocation4], 1
    %206 = vsyncpa [#allocation7], 1
    %207 = vsyncpa [#allocation10], 1
    %208 = vsyncpa [#allocation5], 1

// kernel: decoder_forward.37
$region0: #{decoder_forward.37}
  #allocation0 [shape = 'u32[]', space=smem, size = 0x4, offset = 0x4, fixed_abs, tag = 'smem constant byte address 0x4 - core index']
  #allocation1 [shape = 'u32[144,128]{1,0:T(1,128)}', space=vmem, size = 0x12000, scoped, tag = 'internal scratch']
  #allocation2 [shape = 'bf16[16,32]{1,0:T(16,128)(2,1)}', space=vmem, size = 0x1000, scoped, tag = 'scratch operand']
  %s0 = inlined_call_operand.hbm [shape: f32[16,32], index: 0, kind: input, shape index: {}]
  %s1 = inlined_call_operand.hbm [shape: f32[1,32], index: 1, kind: input, shape index: {}]
  %s2 = inlined_call_operand.hbm [shape: f32[1,32], index: 2, kind: input, shape index: {}]
  %s3 = inlined_call_operand.hbm [shape: bf16[32,16], index: 3, kind: input, shape index: {}]
  %s4 = inlined_call_operand.hbm [shape: f32[1,16], index: 4, kind: input, shape index: {}]
  %s5 = inlined_call_operand.hbm [shape: f32[16,16], index: 5, kind: output, shape index: {}]
  %s6 = sld [smem:[#allocation0]]
  $region54: #{decoder_forward.37} parent=0
    _
  %s8 = ssub.s32 1, %s6
  %s9 = scalar_select 0, %s8, %s6
  $region1: #{decoder_forward.37} parent=0
    #allocation3 [shape = 'u8[8192]{0}', space=vmem, size = 0x2000, scoped, tag = 'input window, operand 0, single buffered']
    #allocation4 [shape = 's32[1]{0}', space=sflag, size = 0x4, scoped, tag = 'scoped memory for decoder_forward.37']
    #allocation5 [shape = 's32[1]{0}', space=sflag, size = 0x4, scoped, tag = 'scoped memory for decoder_forward.37']
    #allocation6 [shape = 'u8[512]{0}', space=vmem, size = 0x400, scoped, tag = 'input window, operand 1, single buffered']
    #allocation7 [shape = 's32[1]{0}', space=sflag, size = 0x4, scoped, tag = 'scoped memory for decoder_forward.37']
    #allocation8 [shape = 'u8[512]{0}', space=vmem, size = 0x400, scoped, tag = 'input window, operand 2, single buffered']
    #allocation9 [shape = 'u8[8192]{0}', space=vmem, size = 0x2000, scoped, tag = 'input window, operand 3, single buffered']
    #allocation10 [shape = 's32[1]{0}', space=sflag, size = 0x4, scoped, tag = 'scoped memory for decoder_forward.37']
    #allocation11 [shape = 'u8[512]{0}', space=vmem, size = 0x400, scoped, tag = 'input window, operand 4, single buffered']
    #allocation12 [shape = 'u8[8192]{0}', space=vmem, size = 0x2000, scoped, tag = 'output window, operand 0, single buffered']
    %10 = vsyncpa [#allocation4], 0
    %11 = vsyncpa [#allocation7], 0
    %12 = vsyncpa [#allocation10], 0
    %13 = vsyncpa [#allocation5], 0
    // Predicated region
    $region2: #{decoder_forward.37} parent=1 // pred_check
      _
    $region3: #{decoder_forward.37} parent=1 // pred_check_branch
      %15 = sbr.rel (0) target = $region5
    $region4: #{decoder_forward.37} parent=1 // pred_region
      %s17 = ssub.s32 256, 256
      %18 = vsyncadd [#allocation4], %s17
      %s19 = sshll.u32 [#allocation3], 4
      %s20 = int_to_ptr.vmem [resolvable:$true] %s19
      %25 = dma.hbm_to_vmem [thread:$0]  %s0, 256, %s20, [#allocation4], 128, 128, 8
    $region5: #{decoder_forward.37} parent=1 // pred_fallthru
      _
    // Predicated region
    $region6: #{decoder_forward.37} parent=1 // pred_check
      _
    $region7: #{decoder_forward.37} parent=1 // pred_check_branch
      %27 = sbr.rel (0) target = $region9
    $region8: #{decoder_forward.37} parent=1 // pred_region
      %s29 = ssub.s32 16, 16
      %30 = vsyncadd [#allocation7], %s29
      %s32 = sshll.u32 [#allocation6], 4
      %s33 = int_to_ptr.vmem [resolvable:$true] %s32
      %35 = dma.hbm_to_vmem [thread:$0]  %s1, 16, %s33, [#allocation7]
    $region9: #{decoder_forward.37} parent=1 // pred_fallthru
      _
    // Predicated region
    $region10: #{decoder_forward.37} parent=1 // pred_check
      _
    $region11: #{decoder_forward.37} parent=1 // pred_check_branch
      %37 = sbr.rel (0) target = $region13
    $region12: #{decoder_forward.37} parent=1 // pred_region
      %s39 = ssub.s32 16, 16
      %40 = vsyncadd [#allocation7], %s39
      %s42 = sshll.u32 [#allocation8], 4
      %s43 = int_to_ptr.vmem [resolvable:$true] %s42
      %45 = dma.hbm_to_vmem [thread:$0]  %s2, 16, %s43, [#allocation7]
    $region13: #{decoder_forward.37} parent=1 // pred_fallthru
      _
    // Predicated region
    $region14: #{decoder_forward.37} parent=1 // pred_check
      _
    $region15: #{decoder_forward.37} parent=1 // pred_check_branch
      %47 = sbr.rel (0) target = $region17
    $region16: #{decoder_forward.37} parent=1 // pred_region
      %s49 = ssub.s32 256, 256
      %50 = vsyncadd [#allocation10], %s49
      %s51 = sshll.u32 [#allocation9], 4
      %s52 = int_to_ptr.vmem [resolvable:$true] %s51
      %57 = dma.hbm_to_vmem [thread:$0]  %s3, 256, %s52, [#allocation10], 64, 64, 4
    $region17: #{decoder_forward.37} parent=1 // pred_fallthru
      _
    // Predicated region
    $region18: #{decoder_forward.37} parent=1 // pred_check
      _
    $region19: #{decoder_forward.37} parent=1 // pred_check_branch
      %59 = sbr.rel (0) target = $region21
    $region20: #{decoder_forward.37} parent=1 // pred_region
      %s61 = ssub.s32 16, 16
      %62 = vsyncadd [#allocation10], %s61
      %s64 = sshll.u32 [#allocation11], 4
      %s65 = int_to_ptr.vmem [resolvable:$true] %s64
      %67 = dma.hbm_to_vmem [thread:$0]  %s4, 16, %s65, [#allocation10]
    $region21: #{decoder_forward.37} parent=1 // pred_fallthru
      _
    // Predicated region
    $region22: #{decoder_forward.37} parent=1 // pred_check
      _
    $region23: #{decoder_forward.37} parent=1 // pred_check_branch
      %69 = sbr.rel (0) target = $region25
    $region24: #{decoder_forward.37} parent=1 // pred_region
      %70 = dma.done [#allocation4], 256
    $region25: #{decoder_forward.37} parent=1 // pred_fallthru
      _
    // Predicated region
    $region26: #{decoder_forward.37} parent=1 // pred_check
      _
    $region27: #{decoder_forward.37} parent=1 // pred_check_branch
      %72 = sbr.rel (0) target = $region29
    $region28: #{decoder_forward.37} parent=1 // pred_region
      %73 = dma.done [#allocation7], 16
    $region29: #{decoder_forward.37} parent=1 // pred_fallthru
      _
    // Predicated region
    $region30: #{decoder_forward.37} parent=1 // pred_check
      _
    $region31: #{decoder_forward.37} parent=1 // pred_check_branch
      %75 = sbr.rel (0) target = $region33
    $region32: #{decoder_forward.37} parent=1 // pred_region
      %76 = dma.done [#allocation7], 16
    $region33: #{decoder_forward.37} parent=1 // pred_fallthru
      _
    // Predicated region
    $region34: #{decoder_forward.37} parent=1 // pred_check
      _
    $region35: #{decoder_forward.37} parent=1 // pred_check_branch
      %78 = sbr.rel (0) target = $region37
    $region36: #{decoder_forward.37} parent=1 // pred_region
      %79 = dma.done [#allocation10], 256
    $region37: #{decoder_forward.37} parent=1 // pred_fallthru
      _
    // Predicated region
    $region38: #{decoder_forward.37} parent=1 // pred_check
      _
    $region39: #{decoder_forward.37} parent=1 // pred_check_branch
      %81 = sbr.rel (0) target = $region41
    $region40: #{decoder_forward.37} parent=1 // pred_region
      %82 = dma.done [#allocation10], 16
    $region41: #{decoder_forward.37} parent=1 // pred_fallthru
      _
    %p84 = scmp.eq.s32.totalorder 0, 0
    // Predicated region
    $region42: #{decoder_forward.37} parent=1 // pred_check
      %p85 = pneg %p84
    $region43: #{decoder_forward.37} parent=1 // pred_check_branch
      %87 = sbr.rel (%p85) target = $region45
    $region44: #{decoder_forward.37} parent=1 // pred_region
      %v88 = vld [vmem:[#allocation3] sm:$0xff]
      %v89 = vld [vmem:[#allocation3 + $0x8] sm:$0xff]
      %vm90 = vcmask 261120
      %v91 = vsel %vm90, %v88, 0.0
      %92 = vadd.xlane.f32.xlu0 %v91
      %v93 = vpop.xlane.xlu0 %92
      %v94 = vsel %vm90, %v89, 0.0
      %95 = vadd.xlane.f32.xlu0 %v94
      %v96 = vpop.xlane.xlu0 %95
      %v97 = vrcp.pop 32.0
      %v98 = vmul.f32 %v93, %v97
      %v99 = vmul.f32 %v96, %v97
      %v100 = vsub.f32 %v88, %v98
      %v101 = vsub.f32 %v89, %v99
      %v102 = vmul.f32 %v100, %v100
      %v103 = vmul.f32 %v101, %v101
      %v104 = vsel %vm90, %v102, 0.0
      %105 = vadd.xlane.f32.xlu0 %v104
      %v106 = vpop.xlane.xlu0 %105
      %v107 = vsel %vm90, %v103, 0.0
      %108 = vadd.xlane.f32.xlu0 %v107
      %v109 = vpop.xlane.xlu0 %108
      %v110 = vmul.f32 %v106, %v97
      %v111 = vmul.f32 %v109, %v97
      %v112 = vadd.f32 %v110, 1e-06
      %v113 = vadd.f32 %v111, 1e-06
      %v114 = vrsqrt.pop %v112
      %v115 = vrsqrt.pop %v113
      %v116 = vmul.f32 %v100, %v114
      %v117 = vmul.f32 %v101, %v115
      %v118 = vld [vmem:[#allocation6] sm:$0x1]
      %v120 = vlaneseq
      %v121 = vshrl.u32 %v120, 7
      %v122 = vsub.s32 0, %v121
      %v123 = vrot.slane %v118, %v122
      %v125 = vmul.f32 %v116, %v123
      %v126 = vmul.f32 %v117, %v123
      %v127 = vld [vmem:[#allocation8] sm:$0x1]
      %v129 = vlaneseq
      %v130 = vshrl.u32 %v129, 7
      %v131 = vsub.s32 0, %v130
      %v132 = vrot.slane %v127, %v131
      %v134 = vadd.f32 %v125, %v132
      %v135 = vadd.f32 %v126, %v132
      %v136 = vpack.c.bf16 %v135, %v134
      %137 = vst.msk [vmem:[#allocation2] sm:$0xff] %vm90, %v136
    $region45: #{decoder_forward.37} parent=1 // pred_fallthru
      _
    %v138 = vld [vmem:[#allocation2] sm:$0xff]
    %v139 = vld [vmem:[#allocation9] sm:$0xf]
    %v140 = vld [vmem:[#allocation9 + $0x4] sm:$0xf]
    %v141 = vld [vmem:[#allocation9 + $0x8] sm:$0xf]
    %v142 = vld [vmem:[#allocation9 + $0xc] sm:$0xf]
    %v143 = vld [vmem:[#allocation11] sm:$0x1]
    %v145 = vlaneseq
    %v146 = vshrl.u32 %v145, 7
    %v147 = vsub.s32 0, %v146
    %v148 = vrot.slane %v143, %v147
    %v154 = vunpack.c.l.b16 %v139
    %v155 = vunpack.c.l.b16 %v140
    %v156 = vunpack.c.l.b16 %v141
    %v157 = vunpack.c.l.b16 %v142
    %v158 = vpack.c.b16 %v155, %v154
    %v159 = vpack.c.b16 %v157, %v156
    %vm162 = vcmask 261120
    %v164 = vsel %vm162, %v138, 0
    %166 = vmatprep.subr.bf16.mxu0 0
    %167 = vmatpush1.bf16.msra.mxu0 %v158
    %168 = vmatprep.subr.bf16.mxu0 0
    %169 = vmatpush1.bf16.msra.mxu0 %v159
    %170 = vmatprep.subr.bf16.mxu0 0
    %171 = vmatpush1.bf16.msra.mxu0 0
    %172 = vmatprep.subr.bf16.mxu0 0
    %173 = vmatpush1.bf16.msra.mxu0 0
    %174 = vmatprep.subr.bf16.mxu0 0
    %175 = vmatpush1.bf16.msra.mxu0 0
    %176 = vmatprep.subr.bf16.mxu0 0
    %177 = vmatpush1.bf16.msra.mxu0 0
    %178 = vmatprep.subr.bf16.mxu0 0
    %179 = vmatpush1.bf16.msra.mxu0 0
    %180 = vmatprep.subr.bf16.mxu0 0
    %181 = vmatpush1.bf16.msra.mxu0 0
    %182 = vmatprep.subr.bf16.mxu0 0
    %183 = vmatpush1.bf16.msra.mxu0 0
    %184 = vmatprep.subr.bf16.mxu0 0
    %185 = vmatpush1.bf16.msra.mxu0 0
    %186 = vmatprep.subr.bf16.mxu0 0
    %187 = vmatpush1.bf16.msra.mxu0 0
    %188 = vmatprep.subr.bf16.mxu0 0
    %189 = vmatpush1.bf16.msra.mxu0 0
    %190 = vmatprep.subr.bf16.mxu0 0
    %191 = vmatpush1.bf16.msra.mxu0 0
    %192 = vmatprep.subr.bf16.mxu0 0
    %193 = vmatpush1.bf16.msra.mxu0 0
    %194 = vmatprep.subr.bf16.mxu0 0
    %195 = vmatpush1.bf16.msra.mxu0 0
    %196 = vmatprep.subr.bf16.mxu0 0
    %197 = vmatpush1.bf16.msra.mxu0 0
    %198 = vmatprep.mubr.bf16.mxu0 0
    %199 = vmatmul.mubr.bf16.gmra.mrb[0].mxu0 %v164
    %v200 = vpop.f32.mrb[0].mxu0
    %v201 = vadd.f32 %v148, %v200
    %v202 = vpop.f32.mrb[0].mxu0
    %v203 = vpop.f32.mrb[0].mxu0
    %v204 = vadd.f32 %v148, %v203
    %v205 = vpop.f32.mrb[0].mxu0
    %206 = vdwg.mxu0
    %vm207 = vcmask 130048
    %208 = vst.msk [vmem:[#allocation12] sm:$0xff] %vm207, %v201
    %209 = vst.msk [vmem:[#allocation12 + $0x8] sm:$0xff] %vm207, %v204
    // Predicated region
    $region46: #{decoder_forward.37} parent=1 // pred_check
      _
    $region47: #{decoder_forward.37} parent=1 // pred_check_branch
      %211 = sbr.rel (0) target = $region49
    $region48: #{decoder_forward.37} parent=1 // pred_region
      %s213 = ssub.s32 256, 256
      %214 = vsyncadd [#allocation5], %s213
      %s215 = sshll.u32 [#allocation12], 4
      %s216 = int_to_ptr.vmem [resolvable:$true] %s215
      %221 = dma.vmem_to_hbm [thread:$0]  %s216, 256, %s5, [#allocation5], 128, 128, 8
    $region49: #{decoder_forward.37} parent=1 // pred_fallthru
      _
    // Predicated region
    $region50: #{decoder_forward.37} parent=1 // pred_check
      _
    $region51: #{decoder_forward.37} parent=1 // pred_check_branch
      %223 = sbr.rel (0) target = $region53
    $region52: #{decoder_forward.37} parent=1 // pred_region
      %224 = dma.done [#allocation5], 256
    $region53: #{decoder_forward.37} parent=1 // pred_fallthru
      _
    %225 = vsyncpa [#allocation4], 1
    %226 = vsyncpa [#allocation7], 1
    %227 = vsyncpa [#allocation10], 1
    %228 = vsyncpa [#allocation5], 1

// kernel: decoder_forward.24
$region0: #{decoder_forward.24}
  #allocation0 [shape = 'u32[]', space=smem, size = 0x4, offset = 0x4, fixed_abs, tag = 'smem constant byte address 0x4 - core index']
  #allocation1 [shape = 'u32[144,128]{1,0:T(1,128)}', space=vmem, size = 0x12000, scoped, tag = 'internal scratch']
  #allocation2 [shape = 'f32[4,8,1]{2,1,0:T(8,128)}', space=vmem, size = 0x4000, scoped, tag = 'scratch operand']
  #allocation3 [shape = 'f32[4,8,1]{2,1,0:T(8,128)}', space=vmem, size = 0x4000, scoped, tag = 'scratch operand']
  #allocation4 [shape = 'f32[8,32]{1,0:T(8,128)}', space=vmem, size = 0x1000, scoped, tag = 'scratch operand']
  %s0 = inlined_call_operand.hbm [shape: bf16[2,8,32], index: 0, kind: input, shape index: {}]
  %s1 = inlined_call_operand.hbm [shape: bf16[2,8,32], index: 1, kind: input, shape index: {}]
  %s2 = inlined_call_operand.hbm [shape: bf16[2,8,32], index: 2, kind: input, shape index: {}]
  %s3 = inlined_call_operand.hbm [shape: f32[2,1,8], index: 3, kind: input, shape index: {}]
  %s4 = inlined_call_operand.hbm [shape: bf16[2,8,32], index: 4, kind: output, shape index: {}]
  %s5 = sld [smem:[#allocation0]]
  $region73: #{decoder_forward.24} parent=0
    _
  %s7 = ssub.s32 1, %s5
  %s8 = scalar_select 0, %s7, %s5
  $region1: #{decoder_forward.24} parent=0
    #allocation5 [shape = 'u8[4096]{0}', space=vmem, size = 0x1000, scoped, tag = 'input window, operand 0']
    #allocation6 [shape = 's32[2]{0}', space=sflag, size = 0x8, scoped, tag = 'scoped memory for decoder_forward.24']
    #allocation7 [shape = 's32[2]{0}', space=sflag, size = 0x8, scoped, tag = 'scoped memory for decoder_forward.24']
    #allocation8 [shape = 'u8[4096]{0}', space=vmem, size = 0x1000, scoped, tag = 'input window, operand 1']
    #allocation9 [shape = 's32[2]{0}', space=sflag, size = 0x8, scoped, tag = 'scoped memory for decoder_forward.24']
    #allocation10 [shape = 'u8[4096]{0}', space=vmem, size = 0x1000, scoped, tag = 'input window, operand 2']
    #allocation11 [shape = 'u8[1024]{0}', space=vmem, size = 0x400, scoped, tag = 'input window, operand 3']
    #allocation12 [shape = 's32[2]{0}', space=sflag, size = 0x8, scoped, tag = 'scoped memory for decoder_forward.24']
    #allocation13 [shape = 'u8[4096]{0}', space=vmem, size = 0x1000, scoped, tag = 'output window, operand 0']
    %9 = vsyncpa [#allocation6], 0
    %s10 = scalar_lea.sflag [#allocation6], 1
    %11 = vsyncpa %s10, 0
    %12 = vsyncpa [#allocation9], 0
    %s13 = scalar_lea.sflag [#allocation9], 1
    %14 = vsyncpa %s13, 0
    %15 = vsyncpa [#allocation12], 0
    %s16 = scalar_lea.sflag [#allocation12], 1
    %17 = vsyncpa %s16, 0
    %18 = vsyncpa [#allocation7], 0
    %s19 = scalar_lea.sflag [#allocation7], 1
    %20 = vsyncpa %s19, 0
    loop: start=0, step=1, limit=4
    $region2: #{decoder_forward.24} parent=1 // loop_pre_header
      _
    $region3: #{decoder_forward.24} parent=1 // loop_header
      %s22 = sphi 0, %s26
      %p23 = scmp.ge.s32.totalorder %s22, 4
      %s29 = sphi 0, %s48
      %s30 = sphi 0, %s44
      %s31 = sphi 0, %s40
      %s32 = sphi 0, %s29
      %s33 = sphi 0, %s30
      %s34 = sphi 0, %s31
      %s35 = sphi 0, %s32
      %s36 = sphi 0, %s33
      %s37 = sphi 0, %s34
      %s53 = sphi 0, %s55
      %s56 = sphi 0, %s53
      %s57 = sphi 0, %s56
      %s73 = sphi 0, %s57
      %s81 = sphi 0, %s83
      %s84 = sphi 0, %s81
      %s85 = sphi 0, %s84
      %s101 = sphi 0, %s85
      %s109 = sphi 0, %s111
      %s112 = sphi 0, %s109
      %s113 = sphi 0, %s112
      %s129 = sphi 0, %s113
      %s137 = sphi 0, %s139
      %s140 = sphi 0, %s137
      %s141 = sphi 0, %s140
      %s157 = sphi 0, %s141
      %s165 = sphi 0, %s167
      %s168 = sphi 0, %s165
      %s169 = sphi 0, %s168
      %s185 = sphi 0, %s169
    $region4: #{decoder_forward.24} parent=1 // loop_header_branch
      %25 = sbr.rel (%p23) target = $region8
    $region5: #{decoder_forward.24} parent=1 // loop_body
      %s27 = ssub.s32 %s22, 1
      %s28 = ssub.s32 %s22, 2
      %s38 = sadd.s32 1, %s31
      %p39 = scmp.ge.s32.totalorder %s38, 1
      %s40 = scalar_select %p39, 0, %s38
      %s41 = sadd.s32 1, %s30
      %s42 = scalar_select %p39, %s41, %s30
      %p43 = scmp.ge.s32.totalorder %s42, 1
      %s44 = scalar_select %p43, 0, %s42
      %s45 = sadd.s32 1, %s29
      %s46 = scalar_select %p43, %s45, %s29
      %p47 = scmp.ge.s32.totalorder %s46, 2
      %s48 = scalar_select %p47, 0, %s46
      %s49 = ssub.s32 %s29, %s48
      %s50 = ssub.s32 %s30, %s44
      %s51 = sor.u32 %s49, %s50
      %p52 = scmp.eq.s32.totalorder %s51, 0
      %s54 = sadd.s32 %s53, 1
      %s55 = scalar_select %p52, %s53, %s54
      %p58 = pneg %p52
      %p59 = scmp.eq.s32.totalorder %s22, 1
      %p60 = por %p58, %p59
      %p61 = scmp.ne.s32.totalorder %s53, %s56
      %p62 = scmp.eq.s32.totalorder %s22, 0
      %p63 = por %p61, %p62
      %p64 = scmp.ne.s32.totalorder %s53, %s56
      %p65 = scmp.eq.s32.totalorder %s27, 1
      %p66 = por %p64, %p65
      %p67 = scmp.ne.s32.totalorder %s56, %s57
      %p68 = scmp.eq.s32.totalorder %s27, 0
      %p69 = por %p67, %p68
      %p70 = scmp.ne.s32.totalorder %s56, %s57
      %p71 = scmp.eq.s32.totalorder %s28, 1
      %p72 = por %p70, %p71
      %p74 = scmp.ne.s32.totalorder %s57, %s73
      %p75 = scmp.eq.s32.totalorder %s28, 0
      %p76 = por %p74, %p75
      %s77 = ssub.s32 %s29, %s48
      %s78 = ssub.s32 %s31, %s40
      %s79 = sor.u32 %s77, %s78
      %p80 = scmp.eq.s32.totalorder %s79, 0
      %s82 = sadd.s32 %s81, 1
      %s83 = scalar_select %p80, %s81, %s82
      %p86 = pneg %p80
      %p87 = scmp.eq.s32.totalorder %s22, 1
      %p88 = por %p86, %p87
      %p89 = scmp.ne.s32.totalorder %s81, %s84
      %p90 = scmp.eq.s32.totalorder %s22, 0
      %p91 = por %p89, %p90
      %p92 = scmp.ne.s32.totalorder %s81, %s84
      %p93 = scmp.eq.s32.totalorder %s27, 1
      %p94 = por %p92, %p93
      %p95 = scmp.ne.s32.totalorder %s84, %s85
      %p96 = scmp.eq.s32.totalorder %s27, 0
      %p97 = por %p95, %p96
      %p98 = scmp.ne.s32.totalorder %s84, %s85
      %p99 = scmp.eq.s32.totalorder %s28, 1
      %p100 = por %p98, %p99
      %p102 = scmp.ne.s32.totalorder %s85, %s101
      %p103 = scmp.eq.s32.totalorder %s28, 0
      %p104 = por %p102, %p103
      %s105 = ssub.s32 %s29, %s48
      %s106 = ssub.s32 %s31, %s40
      %s107 = sor.u32 %s105, %s106
      %p108 = scmp.eq.s32.totalorder %s107, 0
      %s110 = sadd.s32 %s109, 1
      %s111 = scalar_select %p108, %s109, %s110
      %p114 = pneg %p108
      %p115 = scmp.eq.s32.totalorder %s22, 1
      %p116 = por %p114, %p115
      %p117 = scmp.ne.s32.totalorder %s109, %s112
      %p118 = scmp.eq.s32.totalorder %s22, 0
      %p119 = por %p117, %p118
      %p120 = scmp.ne.s32.totalorder %s109, %s112
      %p121 = scmp.eq.s32.totalorder %s27, 1
      %p122 = por %p120, %p121
      %p123 = scmp.ne.s32.totalorder %s112, %s113
      %p124 = scmp.eq.s32.totalorder %s27, 0
      %p125 = por %p123, %p124
      %p126 = scmp.ne.s32.totalorder %s112, %s113
      %p127 = scmp.eq.s32.totalorder %s28, 1
      %p128 = por %p126, %p127
      %p130 = scmp.ne.s32.totalorder %s113, %s129
      %p131 = scmp.eq.s32.totalorder %s28, 0
      %p132 = por %p130, %p131
      %s133 = ssub.s32 %s29, %s48
      %s134 = ssub.s32 %s31, %s40
      %s135 = sor.u32 %s133, %s134
      %p136 = scmp.eq.s32.totalorder %s135, 0
      %s138 = sadd.s32 %s137, 1
      %s139 = scalar_select %p136, %s137, %s138
      %p142 = pneg %p136
      %p143 = scmp.eq.s32.totalorder %s22, 1
      %p144 = por %p142, %p143
      %p145 = scmp.ne.s32.totalorder %s137, %s140
      %p146 = scmp.eq.s32.totalorder %s22, 0
      %p147 = por %p145, %p146
      %p148 = scmp.ne.s32.totalorder %s137, %s140
      %p149 = scmp.eq.s32.totalorder %s27, 1
      %p150 = por %p148, %p149
      %p151 = scmp.ne.s32.totalorder %s140, %s141
      %p152 = scmp.eq.s32.totalorder %s27, 0
      %p153 = por %p151, %p152
      %p154 = scmp.ne.s32.totalorder %s140, %s141
      %p155 = scmp.eq.s32.totalorder %s28, 1
      %p156 = por %p154, %p155
      %p158 = scmp.ne.s32.totalorder %s141, %s157
      %p159 = scmp.eq.s32.totalorder %s28, 0
      %p160 = por %p158, %p159
      %s161 = ssub.s32 %s29, %s48
      %s162 = ssub.s32 %s30, %s44
      %s163 = sor.u32 %s161, %s162
      %p164 = scmp.eq.s32.totalorder %s163, 0
      %s166 = sadd.s32 %s165, 1
      %s167 = scalar_select %p164, %s165, %s166
      %p170 = pneg %p164
      %p171 = scmp.eq.s32.totalorder %s22, 1
      %p172 = por %p170, %p171
      %p173 = scmp.ne.s32.totalorder %s165, %s168
      %p174 = scmp.eq.s32.totalorder %s22, 0
      %p175 = por %p173, %p174
      %p176 = scmp.ne.s32.totalorder %s165, %s168
      %p177 = scmp.eq.s32.totalorder %s27, 1
      %p178 = por %p176, %p177
      %p179 = scmp.ne.s32.totalorder %s168, %s169
      %p180 = scmp.eq.s32.totalorder %s27, 0
      %p181 = por %p179, %p180
      %p182 = scmp.ne.s32.totalorder %s168, %s169
      %p183 = scmp.eq.s32.totalorder %s28, 1
      %p184 = por %p182, %p183
      %p186 = scmp.ne.s32.totalorder %s169, %s185
      %p187 = scmp.eq.s32.totalorder %s28, 0
      %p188 = por %p186, %p187
      %p189 = scmp.le.s32.totalorder 1, %s22
      %p190 = scmp.lt.s32.totalorder %s22, 3
      %p191 = pnand %p189, %p190
      %p192 = pneg %p191
      // Predicated region
      $region9: #{decoder_forward.24} parent=5 // pred_check
        _
      $region10: #{decoder_forward.24} parent=5 // pred_check_branch
        %194 = sbr.rel (%p191) target = $region12
      $region11: #{decoder_forward.24} parent=5 // pred_region
        %s195 = ssub.s32 %s22, 1
      $region12: #{decoder_forward.24} parent=5 // pred_fallthru
        _
      %p196 = scmp.lt.s32.totalorder %s22, 2
      // Predicated region
      $region13: #{decoder_forward.24} parent=5 // pred_check
        %p197 = pneg %p196
      $region14: #{decoder_forward.24} parent=5 // pred_check_branch
        %199 = sbr.rel (%p197) target = $region16
      $region15: #{decoder_forward.24} parent=5 // pred_region
        // Predicated region
        $region17: #{decoder_forward.24} parent=15 // pred_check
          %p200 = pneg %p63
        $region18: #{decoder_forward.24} parent=15 // pred_check_branch
          %202 = sbr.rel (%p200) target = $region20
        $region19: #{decoder_forward.24} parent=15 // pred_region
          %s203 = sand.u32 %s53, 1
          %s204 = scalar_lea.sflag [#allocation6], %s203
          %s205 = sand.u32 %s53, 1
          %s206 = smul.addr %s205, 4
          %s207 = scalar_lea.vmem [#allocation5], %s206
          %s209 = ssub.s32 64, 64
          %210 = vsyncadd %s204, %s209
          %s211 = sadd.s32 %s30, %s29
          %s212 = smul.addr %s211, 64
          %s213 = scalar_lea.hbm %s0, %s212
          %s215 = sshll.u32 %s207, 4
          %s216 = int_to_ptr.vmem [resolvable:$true] %s215
          %218 = dma.hbm_to_vmem [thread:$0]  %s213, 64, %s216, %s204
        $region20: #{decoder_forward.24} parent=15 // pred_fallthru
          _
        // Predicated region
        $region21: #{decoder_forward.24} parent=15 // pred_check
          %p219 = pneg %p91
        $region22: #{decoder_forward.24} parent=15 // pred_check_branch
          %221 = sbr.rel (%p219) target = $region24
        $region23: #{decoder_forward.24} parent=15 // pred_region
          %s222 = sand.u32 %s22, 1
          %s223 = scalar_lea.sflag [#allocation9], %s222
          %s224 = sand.u32 %s81, 1
          %s225 = smul.addr %s224, 4
          %s226 = scalar_lea.vmem [#allocation8], %s225
          %s228 = ssub.s32 64, 64
          %229 = vsyncadd %s223, %s228
          %s230 = sadd.s32 %s31, %s29
          %s231 = smul.addr %s230, 64
          %s232 = scalar_lea.hbm %s1, %s231
          %s234 = sshll.u32 %s226, 4
          %s235 = int_to_ptr.vmem [resolvable:$true] %s234
          %237 = dma.hbm_to_vmem [thread:$0]  %s232, 64, %s235, %s223
        $region24: #{decoder_forward.24} parent=15 // pred_fallthru
          _
        // Predicated region
        $region25: #{decoder_forward.24} parent=15 // pred_check
          %p238 = pneg %p119
        $region26: #{decoder_forward.24} parent=15 // pred_check_branch
          %240 = sbr.rel (%p238) target = $region28
        $region27: #{decoder_forward.24} parent=15 // pred_region
          %s241 = sand.u32 %s22, 1
          %s242 = scalar_lea.sflag [#allocation9], %s241
          %s243 = sand.u32 %s109, 1
          %s244 = smul.addr %s243, 4
          %s245 = scalar_lea.vmem [#allocation10], %s244
          %s247 = ssub.s32 64, 64
          %248 = vsyncadd %s242, %s247
          %s249 = sadd.s32 %s31, %s29
          %s250 = smul.addr %s249, 64
          %s251 = scalar_lea.hbm %s2, %s250
          %s253 = sshll.u32 %s245, 4
          %s254 = int_to_ptr.vmem [resolvable:$true] %s253
          %256 = dma.hbm_to_vmem [thread:$0]  %s251, 64, %s254, %s242
        $region28: #{decoder_forward.24} parent=15 // pred_fallthru
          _
        // Predicated region
        $region29: #{decoder_forward.24} parent=15 // pred_check
          %p257 = pneg %p147
        $region30: #{decoder_forward.24} parent=15 // pred_check_branch
          %259 = sbr.rel (%p257) target = $region32
        $region31: #{decoder_forward.24} parent=15 // pred_region
          %s260 = sand.u32 %s137, 1
          %s261 = scalar_lea.sflag [#allocation12], %s260
          %s262 = sand.u32 %s137, 1
          %s263 = scalar_lea.vmem [#allocation11], %s262
          %s265 = ssub.s32 16, 16
          %266 = vsyncadd %s261, %s265
          %s267 = sadd.s32 %s31, %s29
          %s268 = smul.addr %s267, 16
          %s269 = scalar_lea.hbm %s3, %s268
          %s271 = sshll.u32 %s263, 4
          %s272 = int_to_ptr.vmem [resolvable:$true] %s271
          %274 = dma.hbm_to_vmem [thread:$0]  %s269, 16, %s272, %s261
        $region32: #{decoder_forward.24} parent=15 // pred_fallthru
          _
      $region16: #{decoder_forward.24} parent=5 // pred_fallthru
        _
      %p275 = scmp.le.s32.totalorder 1, %s22
      %p276 = scmp.lt.s32.totalorder %s22, 3
      %p277 = pnand %p275, %p276
      %p278 = pneg %p277
      // Predicated region
      $region33: #{decoder_forward.24} parent=5 // pred_check
        _
      $region34: #{decoder_forward.24} parent=5 // pred_check_branch
        %280 = sbr.rel (%p277) target = $region36
      $region35: #{decoder_forward.24} parent=5 // pred_region
        %s281 = ssub.s32 %s22, 1
        %s282 = sand.u32 %s56, 1
        %s283 = scalar_lea.sflag [#allocation6], %s282
        %s284 = sand.u32 %s56, 1
        %s285 = smul.addr %s284, 4
        %s286 = scalar_lea.vmem [#allocation5], %s285
        // Predicated region
        $region37: #{decoder_forward.24} parent=35 // pred_check
          %p287 = pneg %p69
        $region38: #{decoder_forward.24} parent=35 // pred_check_branch
          %289 = sbr.rel (%p287) target = $region40
        $region39: #{decoder_forward.24} parent=35 // pred_region
          %290 = dma.done %s283, 64
        $region40: #{decoder_forward.24} parent=35 // pred_fallthru
          _
        %s291 = sand.u32 %s27, 1
        %s292 = scalar_lea.sflag [#allocation9], %s291
        %s293 = sand.u32 %s84, 1
        %s294 = smul.addr %s293, 4
        %s295 = scalar_lea.vmem [#allocation8], %s294
        // Predicated region
        $region41: #{decoder_forward.24} parent=35 // pred_check
          %p296 = pneg %p97
        $region42: #{decoder_forward.24} parent=35 // pred_check_branch
          %298 = sbr.rel (%p296) target = $region44
        $region43: #{decoder_forward.24} parent=35 // pred_region
          %299 = dma.done %s292, 64
        $region44: #{decoder_forward.24} parent=35 // pred_fallthru
          _
        %s300 = sand.u32 %s27, 1
        %s301 = scalar_lea.sflag [#allocation9], %s300
        %s302 = sand.u32 %s112, 1
        %s303 = smul.addr %s302, 4
        %s304 = scalar_lea.vmem [#allocation10], %s303
        // Predicated region
        $region45: #{decoder_forward.24} parent=35 // pred_check
          %p305 = pneg %p125
        $region46: #{decoder_forward.24} parent=35 // pred_check_branch
          %307 = sbr.rel (%p305) target = $region48
        $region47: #{decoder_forward.24} parent=35 // pred_region
          %308 = dma.done %s301, 64
        $region48: #{decoder_forward.24} parent=35 // pred_fallthru
          _
        %s309 = sand.u32 %s140, 1
        %s310 = scalar_lea.sflag [#allocation12], %s309
        %s311 = sand.u32 %s140, 1
        %s312 = scalar_lea.vmem [#allocation11], %s311
        // Predicated region
        $region49: #{decoder_forward.24} parent=35 // pred_check
          %p313 = pneg %p153
        $region50: #{decoder_forward.24} parent=35 // pred_check_branch
          %315 = sbr.rel (%p313) target = $region52
        $region51: #{decoder_forward.24} parent=35 // pred_region
          %316 = dma.done %s310, 16
        $region52: #{decoder_forward.24} parent=35 // pred_fallthru
          _
        %s317 = sand.u32 %s56, 1
        %s318 = scalar_lea.sflag [#allocation6], %s317
        %s319 = sand.u32 %s56, 1
        %s320 = smul.addr %s319, 4
        %s321 = scalar_lea.vmem [#allocation5], %s320
        %p322 = pneg %p69
        %p323 = pneg %p66
        %s324 = sand.u32 %s27, 1
        %s325 = scalar_lea.sflag [#allocation9], %s324
        %s326 = sand.u32 %s84, 1
        %s327 = smul.addr %s326, 4
        %s328 = scalar_lea.vmem [#allocation8], %s327
        %p329 = pneg %p97
        %p330 = pneg %p94
        %s331 = sand.u32 %s27, 1
        %s332 = scalar_lea.sflag [#allocation9], %s331
        %s333 = sand.u32 %s112, 1
        %s334 = smul.addr %s333, 4
        %s335 = scalar_lea.vmem [#allocation10], %s334
        %p336 = pneg %p125
        %p337 = pneg %p122
        %s338 = sand.u32 %s140, 1
        %s339 = scalar_lea.sflag [#allocation12], %s338
        %s340 = sand.u32 %s140, 1
        %s341 = scalar_lea.vmem [#allocation11], %s340
        %p342 = pneg %p153
        %p343 = pneg %p150
        %p344 = pneg %p181
        %p345 = pneg %p178
        %s346 = sand.u32 %s168, 1
        %s347 = scalar_lea.sflag [#allocation7], %s346
        %s348 = sand.u32 %s168, 1
        %s349 = smul.addr %s348, 4
        %s350 = scalar_lea.vmem [#allocation13], %s349
        %p352 = scmp.eq.s32.totalorder %s34, 0
        // Predicated region
        $region53: #{decoder_forward.24} parent=35 // pred_check
          %p353 = pneg %p352
        $region54: #{decoder_forward.24} parent=35 // pred_check_branch
          %355 = sbr.rel (%p353) target = $region56
        $region55: #{decoder_forward.24} parent=35 // pred_region
          %vm356 = vcmask 7168
          %357 = vst.msk [vmem:[#allocation2] sm:$0xff] %vm356, -1e+30
          %358 = vst.msk [vmem:[#allocation2 + $0x8] sm:$0xff] %vm356, -1e+30
          %359 = vst.msk [vmem:[#allocation2 + $0x10] sm:$0xff] %vm356, -1e+30
          %360 = vst.msk [vmem:[#allocation2 + $0x18] sm:$0xff] %vm356, -1e+30
          %361 = vst.msk [vmem:[#allocation3] sm:$0xff] %vm356, 0.0
          %362 = vst.msk [vmem:[#allocation3 + $0x8] sm:$0xff] %vm356, 0.0
          %363 = vst.msk [vmem:[#allocation3 + $0x10] sm:$0xff] %vm356, 0.0
          %364 = vst.msk [vmem:[#allocation3 + $0x18] sm:$0xff] %vm356, 0.0
          %vm365 = vcmask 261120
          %366 = vst.msk [vmem:[#allocation4] sm:$0xff] %vm365, 0.0
        $region56: #{decoder_forward.24} parent=35 // pred_fallthru
          _
        %v367 = vld [vmem:[%s286] sm:$0xf]
        %v368 = vld [vmem:[%s295] sm:$0xf]
        %v369 = vld [vmem:[%s304] sm:$0xf]
        %v370 = vld [vmem:[%s312] sm:$0x1]
        %vm371 = vcmask 64512
        %v373 = vsel %vm371, %v367, 0
        %v376 = vsel %vm371, %v368, 0
        %378 = vmatprep.subr.bf16.mxu0 0
        %379 = vmatpush1.bf16.xpose.msra.mxu0 %v376
        %380 = vmatprep.subr.bf16.mxu0 0
        %381 = vmatpush1.bf16.xpose.msra.mxu0 0
        %382 = vmatprep.subr.bf16.mxu0 0
        %383 = vmatpush1.bf16.xpose.msra.mxu0 0
        %384 = vmatprep.subr.bf16.mxu0 0
        %385 = vmatpush1.bf16.xpose.msra.mxu0 0
        %386 = vmatprep.subr.bf16.mxu0 0
        %387 = vmatpush1.bf16.xpose.msra.mxu0 0
        %388 = vmatprep.subr.bf16.mxu0 0
        %389 = vmatpush1.bf16.xpose.msra.mxu0 0
        %390 = vmatprep.subr.bf16.mxu0 0
        %391 = vmatpush1.bf16.xpose.msra.mxu0 0
        %392 = vmatprep.subr.bf16.mxu0 0
        %393 = vmatpush1.bf16.xpose.msra.mxu0 0
        %394 = vmatprep.subr.bf16.mxu0 0
        %395 = vmatpush1.bf16.xpose.msra.mxu0 0
        %396 = vmatprep.subr.bf16.mxu0 0
        %397 = vmatpush1.bf16.xpose.msra.mxu0 0
        %398 = vmatprep.subr.bf16.mxu0 0
        %399 = vmatpush1.bf16.xpose.msra.mxu0 0
        %400 = vmatprep.subr.bf16.mxu0 0
        %401 = vmatpush1.bf16.xpose.msra.mxu0 0
        %402 = vmatprep.subr.bf16.mxu0 0
        %403 = vmatpush1.bf16.xpose.msra.mxu0 0
        %404 = vmatprep.subr.bf16.mxu0 0
        %405 = vmatpush1.bf16.xpose.msra.mxu0 0
        %406 = vmatprep.subr.bf16.mxu0 0
        %407 = vmatpush1.bf16.xpose.msra.mxu0 0
        %408 = vmatprep.subr.bf16.mxu0 0
        %409 = vmatpush1.bf16.xpose.msra.mxu0 0
        %410 = vmatprep.mubr.bf16.mxu0 0
        %411 = vmatmul.mubr.bf16.gmra.mrb[0].mxu0 %v373
        %v412 = vpop.f32.mrb[0].mxu0
        %v413 = vadd.f32 0.0, %v412
        %v414 = vpop.f32.mrb[0].mxu0
        %v415 = vpop.f32.mrb[0].mxu0
        %v416 = vpop.f32.mrb[0].mxu0
        %417 = vdwg.mxu0
        %v418 = vmul.f32 %v413, 0.35355338
        %vm419 = vcmp.gt.f32.partialorder %v370, 0.0
        %v420 = vsel %vm419, 1, 0
        %v421 = vlaneseq
        %v422 = vshrl.u32 %v421, 7
        %v423 = vsub.s32 0, %v422
        %v424 = vrot.slane %v420, %v423
        %vm425 = vcmp.eq.s32.totalorder %v424, 1
        %v426 = vsel %vm425, %v418, -1e+09
        %v427 = vld [vmem:[#allocation2] sm:$0xff]
        %v428 = vsel %vm371, %v426, -inf
        %429 = vmax.xlane.f32.xlu0 %v428
        %v430 = vpop.xlane.xlu0 %429
        %v431 = vmax.f32 %v427, %v430
        %v432 = vsub.f32 %v427, %v431
        %v433 = vmul.f32 %v432, 1.442695
        %v434 = vpow.pop %v433
        %436 = vset.pattern.permute.xlu0 0
        %437 = vperm.xlu0 %436, %v431
        %v438 = vpop.permute.xlu0 %437
        %v440 = vsub.f32 %v426, %v438
        %v441 = vmul.f32 %v440, 1.442695
        %v442 = vpow.pop %v441
        %v443 = vld [vmem:[#allocation3] sm:$0xff]
        %v444 = vmul.f32 %v434, %v443
        %v445 = vsel %vm371, %v442, 0.0
        %446 = vadd.xlane.f32.xlu0 %v445
        %v447 = vpop.xlane.xlu0 %446
        %v448 = vadd.f32 %v444, %v447
        %vm449 = vcmask 7168
        %450 = vst.msk [vmem:[#allocation3] sm:$0xff] %vm449, %v448
        %v451 = vpack.c.bf16 %v442, %v442
        %v453 = vsel %vm371, %v451, 0
        %vm455 = vcmask 1043456
        %v457 = vsel %vm455, %v369, 0
        %459 = vmatprep.subr.bf16.mxu0 0
        %460 = vmatpush1.bf16.msra.mxu0 %v457
        %461 = vmatprep.subr.bf16.mxu0 0
        %462 = vmatpush1.bf16.msra.mxu0 0
        %463 = vmatprep.subr.bf16.mxu0 0
        %464 = vmatpush1.bf16.msra.mxu0 0
        %465 = vmatprep.subr.bf16.mxu0 0
        %466 = vmatpush1.bf16.msra.mxu0 0
        %467 = vmatprep.subr.bf16.mxu0 0
        %468 = vmatpush1.bf16.msra.mxu0 0
        %469 = vmatprep.subr.bf16.mxu0 0
        %470 = vmatpush1.bf16.msra.mxu0 0
        %471 = vmatprep.subr.bf16.mxu0 0
        %472 = vmatpush1.bf16.msra.mxu0 0
        %473 = vmatprep.subr.bf16.mxu0 0
        %474 = vmatpush1.bf16.msra.mxu0 0
        %475 = vmatprep.subr.bf16.mxu0 0
        %476 = vmatpush1.bf16.msra.mxu0 0
        %477 = vmatprep.subr.bf16.mxu0 0
        %478 = vmatpush1.bf16.msra.mxu0 0
        %479 = vmatprep.subr.bf16.mxu0 0
        %480 = vmatpush1.bf16.msra.mxu0 0
        %481 = vmatprep.subr.bf16.mxu0 0
        %482 = vmatpush1.bf16.msra.mxu0 0
        %483 = vmatprep.subr.bf16.mxu0 0
        %484 = vmatpush1.bf16.msra.mxu0 0
        %485 = vmatprep.subr.bf16.mxu0 0
        %486 = vmatpush1.bf16.msra.mxu0 0
        %487 = vmatprep.subr.bf16.mxu0 0
        %488 = vmatpush1.bf16.msra.mxu0 0
        %489 = vmatprep.subr.bf16.mxu0 0
        %490 = vmatpush1.bf16.msra.mxu0 0
        %491 = vmatprep.mubr.bf16.mxu0 0
        %492 = vmatmul.mubr.bf16.gmra.mrb[0].mxu0 %v453
        %v493 = vpop.f32.mrb[0].mxu0
        %v494 = vadd.f32 0.0, %v493
        %v495 = vpop.f32.mrb[0].mxu0
        %v496 = vpop.f32.mrb[0].mxu0
        %v497 = vpop.f32.mrb[0].mxu0
        %498 = vdwg.mxu0
        %v499 = vld [vmem:[#allocation4] sm:$0xff]
        %501 = vset.pattern.permute.xlu0 0
        %502 = vperm.xlu0 %501, %v434
        %v503 = vpop.permute.xlu0 %502
        %v505 = vmul.f32 %v503, %v499
        %v506 = vadd.f32 %v505, %v494
        %507 = vst.msk [vmem:[#allocation4] sm:$0xff] %vm371, %v506
        %508 = vst.msk [vmem:[#allocation2] sm:$0xff] %vm449, %v431
        %v510 = vunpack.c.l.b16 %v367
        %v511 = vpack.c.b16 %v510, %v510
        %512 = vrot.lane.b32.xlu0 %v511, 120
        %v513 = vpop.permute.xlu0 %512
        %v515 = vunpack.c.l.b16 %v368
        %v516 = vpack.c.b16 %v515, %v515
        %517 = vrot.lane.b32.xlu0 %v516, 120
        %v518 = vpop.permute.xlu0 %517
        %v520 = vsel %vm371, %v513, 0
        %v523 = vsel %vm371, %v518, 0
        %525 = vmatprep.subr.bf16.mxu0 0
        %526 = vmatpush1.bf16.xpose.msra.mxu0 %v523
        %527 = vmatprep.subr.bf16.mxu0 0
        %528 = vmatpush1.bf16.xpose.msra.mxu0 0
        %529 = vmatprep.subr.bf16.mxu0 0
        %530 = vmatpush1.bf16.xpose.msra.mxu0 0
        %531 = vmatprep.subr.bf16.mxu0 0
        %532 = vmatpush1.bf16.xpose.msra.mxu0 0
        %533 = vmatprep.subr.bf16.mxu0 0
        %534 = vmatpush1.bf16.xpose.msra.mxu0 0
        %535 = vmatprep.subr.bf16.mxu0 0
        %536 = vmatpush1.bf16.xpose.msra.mxu0 0
        %537 = vmatprep.subr.bf16.mxu0 0
        %538 = vmatpush1.bf16.xpose.msra.mxu0 0
        %539 = vmatprep.subr.bf16.mxu0 0
        %540 = vmatpush1.bf16.xpose.msra.mxu0 0
        %541 = vmatprep.subr.bf16.mxu0 0
        %542 = vmatpush1.bf16.xpose.msra.mxu0 0
        %543 = vmatprep.subr.bf16.mxu0 0
        %544 = vmatpush1.bf16.xpose.msra.mxu0 0
        %545 = vmatprep.subr.bf16.mxu0 0
        %546 = vmatpush1.bf16.xpose.msra.mxu0 0
        %547 = vmatprep.subr.bf16.mxu0 0
        %548 = vmatpush1.bf16.xpose.msra.mxu0 0
        %549 = vmatprep.subr.bf16.mxu0 0
        %550 = vmatpush1.bf16.xpose.msra.mxu0 0
        %551 = vmatprep.subr.bf16.mxu0 0
        %552 = vmatpush1.bf16.xpose.msra.mxu0 0
        %553 = vmatprep.subr.bf16.mxu0 0
        %554 = vmatpush1.bf16.xpose.msra.mxu0 0
        %555 = vmatprep.subr.bf16.mxu0 0
        %556 = vmatpush1.bf16.xpose.msra.mxu0 0
        %557 = vmatprep.mubr.bf16.mxu0 0
        %558 = vmatmul.mubr.bf16.gmra.mrb[0].mxu0 %v520
        %v559 = vpop.f32.mrb[0].mxu0
        %v560 = vadd.f32 0.0, %v559
        %v561 = vpop.f32.mrb[0].mxu0
        %v562 = vpop.f32.mrb[0].mxu0
        %v563 = vpop.f32.mrb[0].mxu0
        %564 = vdwg.mxu0
        %v565 = vmul.f32 %v560, 0.35355338
        %v566 = vsel %vm425, %v565, -1e+09
        %s567 = scalar_lea.vmem [#allocation2], 8
        %v568 = vld [vmem:[%s567] sm:$0xff]
        %v569 = vsel %vm371, %v566, -inf
        %570 = vmax.xlane.f32.xlu0 %v569
        %v571 = vpop.xlane.xlu0 %570
        %v572 = vmax.f32 %v568, %v571
        %v573 = vsub.f32 %v568, %v572
        %v574 = vmul.f32 %v573, 1.442695
        %v575 = vpow.pop %v574
        %577 = vset.pattern.permute.xlu0 0
        %578 = vperm.xlu0 %577, %v572
        %v579 = vpop.permute.xlu0 %578
        %v581 = vsub.f32 %v566, %v579
        %v582 = vmul.f32 %v581, 1.442695
        %v583 = vpow.pop %v582
        %s584 = scalar_lea.vmem [#allocation3], 8
        %v585 = vld [vmem:[%s584] sm:$0xff]
        %v586 = vmul.f32 %v575, %v585
        %v587 = vsel %vm371, %v583, 0.0
        %588 = vadd.xlane.f32.xlu0 %v587
        %v589 = vpop.xlane.xlu0 %588
        %v590 = vadd.f32 %v586, %v589
        %591 = vst.msk [vmem:[%s584] sm:$0xff] %vm449, %v590
        %v592 = vpack.c.bf16 %v583, %v583
        %v594 = vunpack.c.l.b16 %v369
        %v595 = vpack.c.b16 %v594, %v594
        %596 = vrot.lane.b32.xlu0 %v595, 120
        %v597 = vpop.permute.xlu0 %596
        %v599 = vsel %vm371, %v592, 0
        %v602 = vsel %vm455, %v597, 0
        %604 = vmatprep.subr.bf16.mxu0 0
        %605 = vmatpush1.bf16.msra.mxu0 %v602
        %606 = vmatprep.subr.bf16.mxu0 0
        %607 = vmatpush1.bf16.msra.mxu0 0
        %608 = vmatprep.subr.bf16.mxu0 0
        %609 = vmatpush1.bf16.msra.mxu0 0
        %610 = vmatprep.subr.bf16.mxu0 0
        %611 = vmatpush1.bf16.msra.mxu0 0
        %612 = vmatprep.subr.bf16.mxu0 0
        %613 = vmatpush1.bf16.msra.mxu0 0
        %614 = vmatprep.subr.bf16.mxu0 0
        %615 = vmatpush1.bf16.msra.mxu0 0
        %616 = vmatprep.subr.bf16.mxu0 0
        %617 = vmatpush1.bf16.msra.mxu0 0
        %618 = vmatprep.subr.bf16.mxu0 0
        %619 = vmatpush1.bf16.msra.mxu0 0
        %620 = vmatprep.subr.bf16.mxu0 0
        %621 = vmatpush1.bf16.msra.mxu0 0
        %622 = vmatprep.subr.bf16.mxu0 0
        %623 = vmatpush1.bf16.msra.mxu0 0
        %624 = vmatprep.subr.bf16.mxu0 0
        %625 = vmatpush1.bf16.msra.mxu0 0
        %626 = vmatprep.subr.bf16.mxu0 0
        %627 = vmatpush1.bf16.msra.mxu0 0
        %628 = vmatprep.subr.bf16.mxu0 0
        %629 = vmatpush1.bf16.msra.mxu0 0
        %630 = vmatprep.subr.bf16.mxu0 0
        %631 = vmatpush1.bf16.msra.mxu0 0
        %632 = vmatprep.subr.bf16.mxu0 0
        %633 = vmatpush1.bf16.msra.mxu0 0
        %634 = vmatprep.subr.bf16.mxu0 0
        %635 = vmatpush1.bf16.msra.mxu0 0
        %636 = vmatprep.mubr.bf16.mxu0 0
        %637 = vmatmul.mubr.bf16.gmra.mrb[0].mxu0 %v599
        %v638 = vpop.f32.mrb[0].mxu0
        %v639 = vadd.f32 0.0, %v638
        %v640 = vpop.f32.mrb[0].mxu0
        %v641 = vpop.f32.mrb[0].mxu0
        %v642 = vpop.f32.mrb[0].mxu0
        %643 = vdwg.mxu0
        %v644 = vld [vmem:[#allocation4] sm:$0xff]
        %646 = vset.pattern.permute.xlu0 0
        %647 = vperm.xlu0 %646, %v575
        %v648 = vpop.permute.xlu0 %647
        %v650 = vmul.f32 %v648, %v644
        %652 = vrot.lane.b32.xlu0 %v639, 8
        %v653 = vpop.permute.xlu0 %652
        %v655 = vadd.f32 %v650, %v653
        %vm656 = vcmask 130112
        %657 = vst.msk [vmem:[#allocation4] sm:$0xff] %vm656, %v655
        %658 = vst.msk [vmem:[%s567] sm:$0xff] %vm449, %v572
        %659 = vrot.lane.b32.xlu0 %v511, 112
        %v660 = vpop.permute.xlu0 %659
        %661 = vrot.lane.b32.xlu0 %v516, 112
        %v662 = vpop.permute.xlu0 %661
        %v664 = vsel %vm371, %v660, 0
        %v667 = vsel %vm371, %v662, 0
        %669 = vmatprep.subr.bf16.mxu0 0
        %670 = vmatpush1.bf16.xpose.msra.mxu0 %v667
        %671 = vmatprep.subr.bf16.mxu0 0
        %672 = vmatpush1.bf16.xpose.msra.mxu0 0
        %673 = vmatprep.subr.bf16.mxu0 0
        %674 = vmatpush1.bf16.xpose.msra.mxu0 0
        %675 = vmatprep.subr.bf16.mxu0 0
        %676 = vmatpush1.bf16.xpose.msra.mxu0 0
        %677 = vmatprep.subr.bf16.mxu0 0
        %678 = vmatpush1.bf16.xpose.msra.mxu0 0
        %679 = vmatprep.subr.bf16.mxu0 0
        %680 = vmatpush1.bf16.xpose.msra.mxu0 0
        %681 = vmatprep.subr.bf16.mxu0 0
        %682 = vmatpush1.bf16.xpose.msra.mxu0 0
        %683 = vmatprep.subr.bf16.mxu0 0
        %684 = vmatpush1.bf16.xpose.msra.mxu0 0
        %685 = vmatprep.subr.bf16.mxu0 0
        %686 = vmatpush1.bf16.xpose.msra.mxu0 0
        %687 = vmatprep.subr.bf16.mxu0 0
        %688 = vmatpush1.bf16.xpose.msra.mxu0 0
        %689 = vmatprep.subr.bf16.mxu0 0
        %690 = vmatpush1.bf16.xpose.msra.mxu0 0
        %691 = vmatprep.subr.bf16.mxu0 0
        %692 = vmatpush1.bf16.xpose.msra.mxu0 0
        %693 = vmatprep.subr.bf16.mxu0 0
        %694 = vmatpush1.bf16.xpose.msra.mxu0 0
        %695 = vmatprep.subr.bf16.mxu0 0
        %696 = vmatpush1.bf16.xpose.msra.mxu0 0
        %697 = vmatprep.subr.bf16.mxu0 0
        %698 = vmatpush1.bf16.xpose.msra.mxu0 0
        %699 = vmatprep.subr.bf16.mxu0 0
        %700 = vmatpush1.bf16.xpose.msra.mxu0 0
        %701 = vmatprep.mubr.bf16.mxu0 0
        %702 = vmatmul.mubr.bf16.gmra.mrb[0].mxu0 %v664
        %v703 = vpop.f32.mrb[0].mxu0
        %v704 = vadd.f32 0.0, %v703
        %v705 = vpop.f32.mrb[0].mxu0
        %v706 = vpop.f32.mrb[0].mxu0
        %v707 = vpop.f32.mrb[0].mxu0
        %708 = vdwg.mxu0
        %v709 = vmul.f32 %v704, 0.35355338
        %v710 = vsel %vm425, %v709, -1e+09
        %s711 = scalar_lea.vmem [#allocation2], 16
        %v712 = vld [vmem:[%s711] sm:$0xff]
        %v713 = vsel %vm371, %v710, -inf
        %714 = vmax.xlane.f32.xlu0 %v713
        %v715 = vpop.xlane.xlu0 %714
        %v716 = vmax.f32 %v712, %v715
        %v717 = vsub.f32 %v712, %v716
        %v718 = vmul.f32 %v717, 1.442695
        %v719 = vpow.pop %v718
        %721 = vset.pattern.permute.xlu0 0
        %722 = vperm.xlu0 %721, %v716
        %v723 = vpop.permute.xlu0 %722
        %v725 = vsub.f32 %v710, %v723
        %v726 = vmul.f32 %v725, 1.442695
        %v727 = vpow.pop %v726
        %s728 = scalar_lea.vmem [#allocation3], 16
        %v729 = vld [vmem:[%s728] sm:$0xff]
        %v730 = vmul.f32 %v719, %v729
        %v731 = vsel %vm371, %v727, 0.0
        %732 = vadd.xlane.f32.xlu0 %v731
        %v733 = vpop.xlane.xlu0 %732
        %v734 = vadd.f32 %v730, %v733
        %735 = vst.msk [vmem:[%s728] sm:$0xff] %vm449, %v734
        %v736 = vpack.c.bf16 %v727, %v727
        %737 = vrot.lane.b32.xlu0 %v595, 112
        %v738 = vpop.permute.xlu0 %737
        %v740 = vsel %vm371, %v736, 0
        %v743 = vsel %vm455, %v738, 0
        %745 = vmatprep.subr.bf16.mxu0 0
        %746 = vmatpush1.bf16.msra.mxu0 %v743
        %747 = vmatprep.subr.bf16.mxu0 0
        %748 = vmatpush1.bf16.msra.mxu0 0
        %749 = vmatprep.subr.bf16.mxu0 0
        %750 = vmatpush1.bf16.msra.mxu0 0
        %751 = vmatprep.subr.bf16.mxu0 0
        %752 = vmatpush1.bf16.msra.mxu0 0
        %753 = vmatprep.subr.bf16.mxu0 0
        %754 = vmatpush1.bf16.msra.mxu0 0
        %755 = vmatprep.subr.bf16.mxu0 0
        %756 = vmatpush1.bf16.msra.mxu0 0
        %757 = vmatprep.subr.bf16.mxu0 0
        %758 = vmatpush1.bf16.msra.mxu0 0
        %759 = vmatprep.subr.bf16.mxu0 0
        %760 = vmatpush1.bf16.msra.mxu0 0
        %761 = vmatprep.subr.bf16.mxu0 0
        %762 = vmatpush1.bf16.msra.mxu0 0
        %763 = vmatprep.subr.bf16.mxu0 0
        %764 = vmatpush1.bf16.msra.mxu0 0
        %765 = vmatprep.subr.bf16.mxu0 0
        %766 = vmatpush1.bf16.msra.mxu0 0
        %767 = vmatprep.subr.bf16.mxu0 0
        %768 = vmatpush1.bf16.msra.mxu0 0
        %769 = vmatprep.subr.bf16.mxu0 0
        %770 = vmatpush1.bf16.msra.mxu0 0
        %771 = vmatprep.subr.bf16.mxu0 0
        %772 = vmatpush1.bf16.msra.mxu0 0
        %773 = vmatprep.subr.bf16.mxu0 0
        %774 = vmatpush1.bf16.msra.mxu0 0
        %775 = vmatprep.subr.bf16.mxu0 0
        %776 = vmatpush1.bf16.msra.mxu0 0
        %777 = vmatprep.mubr.bf16.mxu0 0
        %778 = vmatmul.mubr.bf16.gmra.mrb[0].mxu0 %v740
        %v779 = vpop.f32.mrb[0].mxu0
        %v780 = vadd.f32 0.0, %v779
        %v781 = vpop.f32.mrb[0].mxu0
        %v782 = vpop.f32.mrb[0].mxu0
        %v783 = vpop.f32.mrb[0].mxu0
        %784 = vdwg.mxu0
        %v785 = vld [vmem:[#allocation4] sm:$0xff]
        %787 = vset.pattern.permute.xlu0 0
        %788 = vperm.xlu0 %787, %v719
        %v789 = vpop.permute.xlu0 %788
        %v791 = vmul.f32 %v789, %v785
        %793 = vrot.lane.b32.xlu0 %v780, 16
        %v794 = vpop.permute.xlu0 %793
        %v796 = vadd.f32 %v791, %v794
        %vm797 = vcmask 195712
        %798 = vst.msk [vmem:[#allocation4] sm:$0xff] %vm797, %v796
        %799 = vst.msk [vmem:[%s711] sm:$0xff] %vm449, %v716
        %800 = vrot.lane.b32.xlu0 %v511, 104
        %v801 = vpop.permute.xlu0 %800
        %802 = vrot.lane.b32.xlu0 %v516, 104
        %v803 = vpop.permute.xlu0 %802
        %v805 = vsel %vm371, %v801, 0
        %v808 = vsel %vm371, %v803, 0
        %810 = vmatprep.subr.bf16.mxu0 0
        %811 = vmatpush1.bf16.xpose.msra.mxu0 %v808
        %812 = vmatprep.subr.bf16.mxu0 0
        %813 = vmatpush1.bf16.xpose.msra.mxu0 0
        %814 = vmatprep.subr.bf16.mxu0 0
        %815 = vmatpush1.bf16.xpose.msra.mxu0 0
        %816 = vmatprep.subr.bf16.mxu0 0
        %817 = vmatpush1.bf16.xpose.msra.mxu0 0
        %818 = vmatprep.subr.bf16.mxu0 0
        %819 = vmatpush1.bf16.xpose.msra.mxu0 0
        %820 = vmatprep.subr.bf16.mxu0 0
        %821 = vmatpush1.bf16.xpose.msra.mxu0 0
        %822 = vmatprep.subr.bf16.mxu0 0
        %823 = vmatpush1.bf16.xpose.msra.mxu0 0
        %824 = vmatprep.subr.bf16.mxu0 0
        %825 = vmatpush1.bf16.xpose.msra.mxu0 0
        %826 = vmatprep.subr.bf16.mxu0 0
        %827 = vmatpush1.bf16.xpose.msra.mxu0 0
        %828 = vmatprep.subr.bf16.mxu0 0
        %829 = vmatpush1.bf16.xpose.msra.mxu0 0
        %830 = vmatprep.subr.bf16.mxu0 0
        %831 = vmatpush1.bf16.xpose.msra.mxu0 0
        %832 = vmatprep.subr.bf16.mxu0 0
        %833 = vmatpush1.bf16.xpose.msra.mxu0 0
        %834 = vmatprep.subr.bf16.mxu0 0
        %835 = vmatpush1.bf16.xpose.msra.mxu0 0
        %836 = vmatprep.subr.bf16.mxu0 0
        %837 = vmatpush1.bf16.xpose.msra.mxu0 0
        %838 = vmatprep.subr.bf16.mxu0 0
        %839 = vmatpush1.bf16.xpose.msra.mxu0 0
        %840 = vmatprep.subr.bf16.mxu0 0
        %841 = vmatpush1.bf16.xpose.msra.mxu0 0
        %842 = vmatprep.mubr.bf16.mxu0 0
        %843 = vmatmul.mubr.bf16.gmra.mrb[0].mxu0 %v805
        %v844 = vpop.f32.mrb[0].mxu0
        %v845 = vadd.f32 0.0, %v844
        %v846 = vpop.f32.mrb[0].mxu0
        %v847 = vpop.f32.mrb[0].mxu0
        %v848 = vpop.f32.mrb[0].mxu0
        %849 = vdwg.mxu0
        %v850 = vmul.f32 %v845, 0.35355338
        %v851 = vsel %vm425, %v850, -1e+09
        %s852 = scalar_lea.vmem [#allocation2], 24
        %v853 = vld [vmem:[%s852] sm:$0xff]
        %v854 = vsel %vm371, %v851, -inf
        %855 = vmax.xlane.f32.xlu0 %v854
        %v856 = vpop.xlane.xlu0 %855
        %v857 = vmax.f32 %v853, %v856
        %v858 = vsub.f32 %v853, %v857
        %v859 = vmul.f32 %v858, 1.442695
        %v860 = vpow.pop %v859
        %862 = vset.pattern.permute.xlu0 0
        %863 = vperm.xlu0 %862, %v857
        %v864 = vpop.permute.xlu0 %863
        %v866 = vsub.f32 %v851, %v864
        %v867 = vmul.f32 %v866, 1.442695
        %v868 = vpow.pop %v867
        %s869 = scalar_lea.vmem [#allocation3], 24
        %v870 = vld [vmem:[%s869] sm:$0xff]
        %v871 = vmul.f32 %v860, %v870
        %v872 = vsel %vm371, %v868, 0.0
        %873 = vadd.xlane.f32.xlu0 %v872
        %v874 = vpop.xlane.xlu0 %873
        %v875 = vadd.f32 %v871, %v874
        %876 = vst.msk [vmem:[%s869] sm:$0xff] %vm449, %v875
        %v877 = vpack.c.bf16 %v868, %v868
        %878 = vrot.lane.b32.xlu0 %v595, 104
        %v879 = vpop.permute.xlu0 %878
        %v881 = vsel %vm371, %v877, 0
        %v884 = vsel %vm455, %v879, 0
        %886 = vmatprep.subr.bf16.mxu0 0
        %887 = vmatpush1.bf16.msra.mxu0 %v884
        %888 = vmatprep.subr.bf16.mxu0 0
        %889 = vmatpush1.bf16.msra.mxu0 0
        %890 = vmatprep.subr.bf16.mxu0 0
        %891 = vmatpush1.bf16.msra.mxu0 0
        %892 = vmatprep.subr.bf16.mxu0 0
        %893 = vmatpush1.bf16.msra.mxu0 0
        %894 = vmatprep.subr.bf16.mxu0 0
        %895 = vmatpush1.bf16.msra.mxu0 0
        %896 = vmatprep.subr.bf16.mxu0 0
        %897 = vmatpush1.bf16.msra.mxu0 0
        %898 = vmatprep.subr.bf16.mxu0 0
        %899 = vmatpush1.bf16.msra.mxu0 0
        %900 = vmatprep.subr.bf16.mxu0 0
        %901 = vmatpush1.bf16.msra.mxu0 0
        %902 = vmatprep.subr.bf16.mxu0 0
        %903 = vmatpush1.bf16.msra.mxu0 0
        %904 = vmatprep.subr.bf16.mxu0 0
        %905 = vmatpush1.bf16.msra.mxu0 0
        %906 = vmatprep.subr.bf16.mxu0 0
        %907 = vmatpush1.bf16.msra.mxu0 0
        %908 = vmatprep.subr.bf16.mxu0 0
        %909 = vmatpush1.bf16.msra.mxu0 0
        %910 = vmatprep.subr.bf16.mxu0 0
        %911 = vmatpush1.bf16.msra.mxu0 0
        %912 = vmatprep.subr.bf16.mxu0 0
        %913 = vmatpush1.bf16.msra.mxu0 0
        %914 = vmatprep.subr.bf16.mxu0 0
        %915 = vmatpush1.bf16.msra.mxu0 0
        %916 = vmatprep.subr.bf16.mxu0 0
        %917 = vmatpush1.bf16.msra.mxu0 0
        %918 = vmatprep.mubr.bf16.mxu0 0
        %919 = vmatmul.mubr.bf16.gmra.mrb[0].mxu0 %v881
        %v920 = vpop.f32.mrb[0].mxu0
        %v921 = vadd.f32 0.0, %v920
        %v922 = vpop.f32.mrb[0].mxu0
        %v923 = vpop.f32.mrb[0].mxu0
        %v924 = vpop.f32.mrb[0].mxu0
        %925 = vdwg.mxu0
        %v926 = vld [vmem:[#allocation4] sm:$0xff]
        %928 = vset.pattern.permute.xlu0 0
        %929 = vperm.xlu0 %928, %v860
        %v930 = vpop.permute.xlu0 %929
        %v932 = vmul.f32 %v930, %v926
        %934 = vrot.lane.b32.xlu0 %v921, 24
        %v935 = vpop.permute.xlu0 %934
        %v937 = vadd.f32 %v932, %v935
        %vm938 = vcmask 261312
        %939 = vst.msk [vmem:[#allocation4] sm:$0xff] %vm938, %v937
        %940 = vst.msk [vmem:[%s852] sm:$0xff] %vm449, %v857
        // Predicated region
        $region57: #{decoder_forward.24} parent=35 // pred_check
          %p941 = pneg %p352
        $region58: #{decoder_forward.24} parent=35 // pred_check_branch
          %943 = sbr.rel (%p941) target = $region60
        $region59: #{decoder_forward.24} parent=35 // pred_region
          %v944 = vld [vmem:[#allocation3] sm:$0xff]
          %v945 = vrcp.pop %v944
          %v946 = vld [vmem:[#allocation4] sm:$0xff]
          %948 = vset.pattern.permute.xlu0 0
          %949 = vperm.xlu0 %948, %v945
          %v950 = vpop.permute.xlu0 %949
          %v952 = vmul.f32 %v946, %v950
          %953 = vst.msk [vmem:[#allocation4] sm:$0xff] %vm371, %v952
          %v954 = vld [vmem:[%s584] sm:$0xff]
          %v955 = vrcp.pop %v954
          %v956 = vld [vmem:[#allocation4] sm:$0xff]
          %958 = vset.pattern.permute.xlu0 0
          %959 = vperm.xlu0 %958, %v955
          %v960 = vpop.permute.xlu0 %959
          %v962 = vmul.f32 %v956, %v960
          %963 = vst.msk [vmem:[#allocation4] sm:$0xff] %vm656, %v962
          %v964 = vld [vmem:[%s728] sm:$0xff]
          %v965 = vrcp.pop %v964
          %v966 = vld [vmem:[#allocation4] sm:$0xff]
          %968 = vset.pattern.permute.xlu0 0
          %969 = vperm.xlu0 %968, %v965
          %v970 = vpop.permute.xlu0 %969
          %v972 = vmul.f32 %v966, %v970
          %973 = vst.msk [vmem:[#allocation4] sm:$0xff] %vm797, %v972
          %v974 = vld [vmem:[%s869] sm:$0xff]
          %v975 = vrcp.pop %v974
          %v976 = vld [vmem:[#allocation4] sm:$0xff]
          %978 = vset.pattern.permute.xlu0 0
          %979 = vperm.xlu0 %978, %v975
          %v980 = vpop.permute.xlu0 %979
          %v982 = vmul.f32 %v976, %v980
          %983 = vst.msk [vmem:[#allocation4] sm:$0xff] %vm938, %v982
          %v984 = vld [vmem:[#allocation4] sm:$0xff]
          %v985 = vpack.c.bf16 %v984, %v984
          %vm986 = vcmask 257024
          %987 = vst.msk [vmem:[%s350] sm:$0xf] %vm986, %v985
        $region60: #{decoder_forward.24} parent=35 // pred_fallthru
          _
        %s988 = sand.u32 %s168, 1
        %s989 = scalar_lea.sflag [#allocation7], %s988
        %s990 = sand.u32 %s168, 1
        %s991 = smul.addr %s990, 4
        %s992 = scalar_lea.vmem [#allocation13], %s991
        // Predicated region
        $region61: #{decoder_forward.24} parent=35 // pred_check
          %p993 = pneg %p178
        $region62: #{decoder_forward.24} parent=35 // pred_check_branch
          %995 = sbr.rel (%p993) target = $region64
        $region63: #{decoder_forward.24} parent=35 // pred_region
          %s997 = ssub.s32 64, 64
          %998 = vsyncadd %s989, %s997
          %s999 = sadd.s32 %s33, %s32
          %s1000 = smul.addr %s999, 64
          %s1001 = scalar_lea.hbm %s4, %s1000
          %s1003 = sshll.u32 %s992, 4
          %s1004 = int_to_ptr.vmem [resolvable:$true] %s1003
          %1006 = dma.vmem_to_hbm [thread:$0]  %s1004, 64, %s1001, %s989
        $region64: #{decoder_forward.24} parent=35 // pred_fallthru
          _
      $region36: #{decoder_forward.24} parent=5 // pred_fallthru
        _
      %p1007 = scmp.le.s32.totalorder 2, %s22
      // Predicated region
      $region65: #{decoder_forward.24} parent=5 // pred_check
        %p1008 = pneg %p1007
      $region66: #{decoder_forward.24} parent=5 // pred_check_branch
        %1010 = sbr.rel (%p1008) target = $region68
      $region67: #{decoder_forward.24} parent=5 // pred_region
        %s1011 = ssub.s32 %s22, 2
        // Predicated region
        $region69: #{decoder_forward.24} parent=67 // pred_check
          %p1012 = pneg %p184
        $region70: #{decoder_forward.24} parent=67 // pred_check_branch
          %1014 = sbr.rel (%p1012) target = $region72
        $region71: #{decoder_forward.24} parent=67 // pred_region
          %s1015 = sand.u32 %s169, 1
          %s1016 = scalar_lea.sflag [#allocation7], %s1015
          %s1017 = sand.u32 %s169, 1
          %s1018 = smul.addr %s1017, 4
          %s1019 = scalar_lea.vmem [#allocation13], %s1018
          %1020 = dma.done %s1016, 64
        $region72: #{decoder_forward.24} parent=67 // pred_fallthru
          _
      $region68: #{decoder_forward.24} parent=5 // pred_fallthru
        _
    $region6: #{decoder_forward.24} parent=1 // loop_footer
      %s26 = sadd.s32 1, %s22
    $region7: #{decoder_forward.24} parent=1 // loop_footer_branch
      %21 = sbr.rel target = $region3
    $region8: #{decoder_forward.24} parent=1 // loop_exit
      _
    %1021 = vsyncpa [#allocation6], 1
    %s1022 = scalar_lea.sflag [#allocation6], 1
    %1023 = vsyncpa %s1022, 1
    %1024 = vsyncpa [#allocation9], 1
    %s1025 = scalar_lea.sflag [#allocation9], 1
    %1026 = vsyncpa %s1025, 1
    %1027 = vsyncpa [#allocation12], 1
    %s1028 = scalar_lea.sflag [#allocation12], 1
    %1029 = vsyncpa %s1028, 1
    %1030 = vsyncpa [#allocation7], 1
    %s1031 = scalar_lea.sflag [#allocation7], 1
    %1032 = vsyncpa %s1031, 1

</llo_original>
